<compile_context>
chip_gen: v7x
topology: tpu7x:2x2x1
jax: 0.10.0
libtpu: 0.0.40
codegen_flags: <defaults>
</compile_context>

<pallas_src>
import functools

import jax
import jax.numpy as jnp
from jax.experimental import pallas as pl
from jax.experimental.pallas import tpu as pltpu


def _round_up(x, m):
    return (x + m - 1) // m * m


def _pick_tm(mp):
    """Largest tile (<=512) dividing mp, preferring >=2 grid steps (megacore)."""
    cands = (512, 256, 128, 64, 32, 16, 8)
    for tm in cands:
        if mp % tm == 0 and mp // tm >= 2:
            return tm
    for tm in cands:
        if mp % tm == 0:
            return tm
    return mp


# --------------------------------------------------------------------------
# Fused conv-as-matmul kernel:  out = relu( (A @ W_scaled) + bias [+ res] )
#   A, W in bf16; MXU accumulates f32; epilogue in f32.
#   Full-extent K and N blocks -> grid over M only, no scratch accumulator.
# --------------------------------------------------------------------------
def _mm_bias_kernel(a_ref, w_ref, c_ref, o_ref, *, relu):
    y = jnp.dot(a_ref[...], w_ref[...], preferred_element_type=jnp.float32)
    y = y + c_ref[...]
    if relu:
        y = jnp.maximum(y, 0.0)
    o_ref[...] = y.astype(o_ref.dtype)


def _mm_bias_res_kernel(a_ref, w_ref, c_ref, r_ref, o_ref, *, relu):
    y = jnp.dot(a_ref[...], w_ref[...], preferred_element_type=jnp.float32)
    y = y + c_ref[...] + r_ref[...]
    if relu:
        y = jnp.maximum(y, 0.0)
    o_ref[...] = y.astype(o_ref.dtype)


def fused_matmul_bias(a, w, bias, residual=None, relu=True):
    """a: (M, K) f32, w: (K, N) f32 (BN scale already folded), bias: (N,)."""
    M, K = a.shape
    K2, N = w.shape
    assert K == K2
    Mp = _round_up(M, 8)
    if Mp != M:                       # only pad M (never K or N), and only if needed
        a = jnp.pad(a, ((0, Mp - M), (0, 0)))
        if residual is not None:
            residual = jnp.pad(residual, ((0, Mp - M), (0, 0)))
    tm = _pick_tm(Mp)

    a_bf = a.astype(jnp.bfloat16)     # halve DMA bytes of the dominant stream
    w_bf = w.astype(jnp.bfloat16)     # MXU bf16 inputs, f32 accumulation
    bias2 = bias.reshape(1, N).astype(jnp.float32)

    in_specs = [
        pl.BlockSpec((tm, K), lambda i: (i, 0)),   # full-extent K block
        pl.BlockSpec((K, N), lambda i: (0, 0)),    # full weight, resident
        pl.BlockSpec((1, N), lambda i: (0, 0)),    # bias row
    ]
    args = [a_bf, w_bf, bias2]
    if residual is not None:
        in_specs.append(pl.BlockSpec((tm, N), lambda i: (i, 0)))
        args.append(residual.astype(jnp.float32))
        kernel = functools.partial(_mm_bias_res_kernel, relu=relu)
    else:
        kernel = functools.partial(_mm_bias_kernel, relu=relu)

    res_bytes = Mp * N * 4 if residual is not None else 0
    cost = pl.CostEstimate(
        flops=2 * Mp * K * N + 2 * Mp * N,
        transcendentals=0,
        bytes_accessed=Mp * K * 2 + K * N * 2 + N * 4 + res_bytes + Mp * N * 4,
    )

    out = pl.pallas_call(
        kernel,
        out_shape=jax.ShapeDtypeStruct((Mp, N), jnp.float32),
        grid_spec=pltpu.PrefetchScalarGridSpec(
            num_scalar_prefetch=0,
            grid=(Mp // tm,),
            in_specs=in_specs,
            out_specs=pl.BlockSpec((tm, N), lambda i: (i, 0)),
        ),
        compiler_params=pltpu.CompilerParams(
            dimension_semantics=("parallel",)),
        cost_estimate=cost,
    )(*args)
    return out[:M] if Mp != M else out


# --------------------------------------------------------------------------
# Temporal Shift Module, fused into the next conv's im2col gather.
# (Pure permutation along T with zero boundary padding; XLA fuses this with
#  the pad/slice/concat of im2col, so no extra HBM round trip / pallas_call.)
# --------------------------------------------------------------------------
def temporal_shift(x, B, T, fold, unidirection=False):
    # x: (B*T, H, W, C) -> shifted (B*T, H, W, C)
    BT, H, W, C = x.shape
    xv = x.reshape(B, T, H, W, C)
    zero = jnp.zeros_like(xv[:, :1])
    x_past = jnp.concatenate([zero, xv[:, :-1]], axis=1)        # value from t-1
    ch = jnp.arange(C)[None, None, None, None, :]
    if unidirection:
        out = jnp.where(ch < 2 * fold, x_past, xv)
    else:
        x_future = jnp.concatenate([xv[:, 1:], zero], axis=1)   # value from t+1
        out = jnp.where(ch < fold, x_future,
                        jnp.where(ch < 2 * fold, x_past, xv))
    return out.reshape(BT, H, W, C)


# --------------------------------------------------------------------------
# Length-masked global average pooling kernel (block of frames per step).
# --------------------------------------------------------------------------
def _pool_kernel(x_ref, m_ref, o_ref):
    # x: (bf, HW, C), m: (bf, 1) -> o: (bf, C)
    o_ref[...] = jnp.mean(x_ref[...], axis=1) * m_ref[...]


def masked_global_pool(x, frame_mask):
    # x: (B*T, HW, C); frame_mask: (B*T, 1) f32 -> (B*T, C)
    BT, HW, C = x.shape
    bf = 8 if BT % 8 == 0 else BT
    return pl.pallas_call(
        _pool_kernel,
        out_shape=jax.ShapeDtypeStruct((BT, C), jnp.float32),
        grid_spec=pltpu.PrefetchScalarGridSpec(
            num_scalar_prefetch=0,
            grid=(BT // bf,),
            in_specs=[pl.BlockSpec((bf, HW, C), lambda i: (i, 0, 0)),
                      pl.BlockSpec((bf, 1), lambda i: (i, 0))],
            out_specs=pl.BlockSpec((bf, C), lambda i: (i, 0)),
        ),
        compiler_params=pltpu.CompilerParams(
            dimension_semantics=("parallel",)),
    )(x, frame_mask)


# --------------------------------------------------------------------------
# Glue: im2col, conv wrapper, parameter init, forward pass.
# --------------------------------------------------------------------------
def im2col(x, kh, kw, stride, pad):
    # x: (N, H, W, C) -> (N*Ho*Wo, kh*kw*C)
    x = jnp.pad(x, ((0, 0), (pad, pad), (pad, pad), (0, 0)))
    N, Hp, Wp, C = x.shape
    Ho = (Hp - kh) // stride + 1
    Wo = (Wp - kw) // stride + 1
    cols = []
    for i in range(kh):
        for j in range(kw):
            cols.append(x[:, i:i + stride * (Ho - 1) + 1:stride,
                           j:j + stride * (Wo - 1) + 1:stride, :])
    patches = jnp.concatenate(cols, axis=-1)        # (N, Ho, Wo, kh*kw*C)
    return patches.reshape(N * Ho * Wo, kh * kw * C), Ho, Wo


def conv_bn(x, w, scale, bias, stride=1, pad=1, relu=True, residual=None):
    # x: (N, H, W, Cin); w: (kh, kw, Cin, Cout); BN folded into w (scale) + bias.
    kh, kw, Cin, Cout = w.shape
    patches, Ho, Wo = im2col(x, kh, kw, stride, pad)
    w2 = w.reshape(kh * kw * Cin, Cout) * scale[None, :]   # fold BN scale
    res2 = residual.reshape(-1, Cout) if residual is not None else None
    y = fused_matmul_bias(patches, w2, bias, residual=res2, relu=relu)
    return y.reshape(x.shape[0], Ho, Wo, Cout)


def init_params(key, c_in=3, c1=32, c2=64):
    keys = jax.random.split(key, 12)

    def conv_w(k, kh, kw, cin, cout):
        fan_in = kh * kw * cin
        return (jax.random.normal(k, (kh, kw, cin, cout), jnp.float32)
                * (2.0 / fan_in) ** 0.5)

    def bn(k, c):
        k1, k2, k3, k4 = jax.random.split(k, 4)
        gamma = 1.0 + 0.1 * jax.random.normal(k1, (c,), jnp.float32)
        beta = 0.1 * jax.random.normal(k2, (c,), jnp.float32)
        mean = 0.1 * jax.random.normal(k3, (c,), jnp.float32)
        var = 1.0 + 0.1 * jax.random.uniform(k4, (c,), jnp.float32)
        scale = gamma / jnp.sqrt(var + 1e-5)
        bias = beta - mean * scale
        return scale, bias

    return {
        "stem_w": conv_w(keys[0], 3, 3, c_in, c1), "stem_bn": bn(keys[1], c1),
        "b1c1_w": conv_w(keys[2], 3, 3, c1, c1), "b1c1_bn": bn(keys[3], c1),
        "b1c2_w": conv_w(keys[4], 3, 3, c1, c1), "b1c2_bn": bn(keys[5], c1),
        "b2c1_w": conv_w(keys[6], 3, 3, c1, c2), "b2c1_bn": bn(keys[7], c2),
        "b2c2_w": conv_w(keys[8], 3, 3, c2, c2), "b2c2_bn": bn(keys[9], c2),
        "b2d_w": conv_w(keys[10], 1, 1, c1, c2), "b2d_bn": bn(keys[11], c2),
    }


def tsm_resnet_encoder(params, x, input_lengths, unidirection=False):
    """x: (B, T, H, W, 3) float32; input_lengths: (B,) int32 -> (B, T, C2)."""
    B, T, H, W, Cin = x.shape
    xf = x.reshape(B * T, H, W, Cin)

    # stem: 3x3 conv stride 2 + BN + ReLU
    s, b = params["stem_bn"]
    h = conv_bn(xf, params["stem_w"], s, b, stride=2, pad=1, relu=True)
    BT, H1, W1, C1 = h.shape

    # TSM basic block 1 (C1 -> C1, stride 1)
    hs = temporal_shift(h, B, T, fold=C1 // 8, unidirection=unidirection)
    s1, b1 = params["b1c1_bn"]
    y = conv_bn(hs, params["b1c1_w"], s1, b1, stride=1, pad=1, relu=True)
    s2, b2 = params["b1c2_bn"]
    h = conv_bn(y, params["b1c2_w"], s2, b2, stride=1, pad=1, relu=True,
                residual=h)

    # TSM basic block 2 (C1 -> C2, stride 2, projection shortcut)
    hs = temporal_shift(h, B, T, fold=C1 // 8, unidirection=unidirection)
    s1, b1 = params["b2c1_bn"]
    y = conv_bn(hs, params["b2c1_w"], s1, b1, stride=2, pad=1, relu=True)
    sd, bd = params["b2d_bn"]
    res = conv_bn(h, params["b2d_w"], sd, bd, stride=2, pad=0, relu=False)
    s2, b2 = params["b2c2_bn"]
    y = conv_bn(y, params["b2c2_w"], s2, b2, stride=1, pad=1, relu=True,
                residual=res)
    _, H2, W2, C2 = y.shape

    # length-masked global average pool -> per-frame feature vectors
    mask = (jnp.arange(T)[None, :] < input_lengths.astype(jnp.int32)[:, None])
    mask = mask.astype(jnp.float32).reshape(B * T, 1)
    feats = masked_global_pool(y.reshape(BT, H2 * W2, C2), mask)
    return feats.reshape(B, T, C2)


if __name__ == "__main__":
    key = jax.random.PRNGKey(0)
    kp, kx = jax.random.split(key)

    B, T, H, W = 2, 4, 16, 16
    x = jax.random.normal(kx, (B, T, H, W, 3), jnp.float32)
    input_lengths = jnp.array([4, 3], jnp.int32)

    params = init_params(kp)
    fwd = jax.jit(functools.partial(tsm_resnet_encoder, unidirection=False))
    out = fwd(params, x, input_lengths)
    jax.block_until_ready(out)

    assert out.shape == (B, T, 64), out.shape
    assert bool(jnp.all(jnp.isfinite(out)))
    # padded frames (t >= length) must be zero
    assert bool(jnp.all(out[1, 3] == 0.0))
    print("KERNEL_OK")
</pallas_src>

<mosaic_0001>
module attributes {stable_mosaic.version = 11 : i64} {
  func.func @_mm_bias_kernel(%arg0: i32, %arg1: memref<256x27xbf16, #tpu.memory_space<vmem>>, %arg2: memref<27x32xbf16, #tpu.memory_space<vmem>>, %arg3: memref<1x32xf32, #tpu.memory_space<vmem>>, %arg4: memref<256x32xf32, #tpu.memory_space<vmem>>) attributes {dimension_semantics = [#tpu.dimension_semantics<parallel>], iteration_bounds = array<i64: 2>, scalar_prefetch = 0 : i64, scratch_operands = 0 : i64, tpu.core_type = #tpu.core_type<tc>, window_params = [{transform_indices = @transform_0, window_bounds = array<i64: 256, 27>}, {pipeline_mode = #tpu.pipeline_mode<synchronous>, transform_indices = @transform_1, window_bounds = array<i64: 27, 32>}, {pipeline_mode = #tpu.pipeline_mode<synchronous>, transform_indices = @transform_2, window_bounds = array<i64: 1, 32>}, {transform_indices = @transform_3, window_bounds = array<i64: 256, 32>}]} {
    %c0 = arith.constant 0 : index
    %c0_0 = arith.constant 0 : index
    %0 = vector.load %arg1[%c0, %c0_0] : memref<256x27xbf16, #tpu.memory_space<vmem>>, vector<256x27xbf16>
    %c0_1 = arith.constant 0 : index
    %c0_2 = arith.constant 0 : index
    %1 = vector.load %arg2[%c0_1, %c0_2] : memref<27x32xbf16, #tpu.memory_space<vmem>>, vector<27x32xbf16>
    %cst = arith.constant dense<0.000000e+00> : vector<256x32xf32>
    %2 = tpu.matmul %0, %1, %cst {dimension_numbers = #tpu.dot_dimension_numbers<[1], [0], [0], [1], [0, 0, 1, 1], [], []>} : vector<256x27xbf16>, vector<27x32xbf16>, vector<256x32xf32> -> vector<256x32xf32>
    %c0_3 = arith.constant 0 : index
    %c0_4 = arith.constant 0 : index
    %3 = vector.load %arg3[%c0_3, %c0_4] : memref<1x32xf32, #tpu.memory_space<vmem>>, vector<1x32xf32>
    %4 = vector.broadcast %3 : vector<1x32xf32> to vector<256x32xf32>
    %5 = arith.addf %2, %4 : vector<256x32xf32>
    %cst_5 = arith.constant 0.000000e+00 : f32
    %6 = vector.broadcast %cst_5 : f32 to vector<256x32xf32>
    %7 = arith.maximumf %5, %6 : vector<256x32xf32>
    %c0_6 = arith.constant 0 : index
    %c0_7 = arith.constant 0 : index
    %8 = vector.load %arg4[%c0_6, %c0_7] : memref<256x32xf32, #tpu.memory_space<vmem>>, vector<256x32xf32>
    tpu.vector_store %arg4[%c0_6, %c0_7], %7 {strides = array<i32>} : memref<256x32xf32, #tpu.memory_space<vmem>>, vector<256x32xf32>,
    return
  }
  func.func @transform_0(%arg0: i32) -> (i32, i32) {
    %c0_i32 = arith.constant 0 : i32
    %c0_i32_0 = arith.constant 0 : i32
    return %arg0, %c0_i32 : i32, i32
  }
  func.func @transform_1(%arg0: i32) -> (i32, i32) {
    %c0_i32 = arith.constant 0 : i32
    %c0_i32_0 = arith.constant 0 : i32
    %c0_i32_1 = arith.constant 0 : i32
    return %c0_i32, %c0_i32_0 : i32, i32
  }
  func.func @transform_2(%arg0: i32) -> (i32, i32) {
    %c0_i32 = arith.constant 0 : i32
    %c0_i32_0 = arith.constant 0 : i32
    %c0_i32_1 = arith.constant 0 : i32
    return %c0_i32, %c0_i32_0 : i32, i32
  }
  func.func @transform_3(%arg0: i32) -> (i32, i32) {
    %c0_i32 = arith.constant 0 : i32
    %c0_i32_0 = arith.constant 0 : i32
    return %arg0, %c0_i32 : i32, i32
  }
}

module attributes {stable_mosaic.version = 11 : i64} {
  func.func @_mm_bias_kernel(%arg0: i32, %arg1: memref<256x288xbf16, #tpu.memory_space<vmem>>, %arg2: memref<288x32xbf16, #tpu.memory_space<vmem>>, %arg3: memref<1x32xf32, #tpu.memory_space<vmem>>, %arg4: memref<256x32xf32, #tpu.memory_space<vmem>>) attributes {dimension_semantics = [#tpu.dimension_semantics<parallel>], iteration_bounds = array<i64: 2>, scalar_prefetch = 0 : i64, scratch_operands = 0 : i64, tpu.core_type = #tpu.core_type<tc>, window_params = [{transform_indices = @transform_0, window_bounds = array<i64: 256, 288>}, {pipeline_mode = #tpu.pipeline_mode<synchronous>, transform_indices = @transform_1, window_bounds = array<i64: 288, 32>}, {pipeline_mode = #tpu.pipeline_mode<synchronous>, transform_indices = @transform_2, window_bounds = array<i64: 1, 32>}, {transform_indices = @transform_3, window_bounds = array<i64: 256, 32>}]} {
    %c0 = arith.constant 0 : index
    %c0_0 = arith.constant 0 : index
    %0 = vector.load %arg1[%c0, %c0_0] : memref<256x288xbf16, #tpu.memory_space<vmem>>, vector<256x288xbf16>
    %c0_1 = arith.constant 0 : index
    %c0_2 = arith.constant 0 : index
    %1 = vector.load %arg2[%c0_1, %c0_2] : memref<288x32xbf16, #tpu.memory_space<vmem>>, vector<288x32xbf16>
    %cst = arith.constant dense<0.000000e+00> : vector<256x32xf32>
    %2 = tpu.matmul %0, %1, %cst {dimension_numbers = #tpu.dot_dimension_numbers<[1], [0], [0], [1], [0, 0, 1, 1], [], []>} : vector<256x288xbf16>, vector<288x32xbf16>, vector<256x32xf32> -> vector<256x32xf32>
    %c0_3 = arith.constant 0 : index
    %c0_4 = arith.constant 0 : index
    %3 = vector.load %arg3[%c0_3, %c0_4] : memref<1x32xf32, #tpu.memory_space<vmem>>, vector<1x32xf32>
    %4 = vector.broadcast %3 : vector<1x32xf32> to vector<256x32xf32>
    %5 = arith.addf %2, %4 : vector<256x32xf32>
    %cst_5 = arith.constant 0.000000e+00 : f32
    %6 = vector.broadcast %cst_5 : f32 to vector<256x32xf32>
    %7 = arith.maximumf %5, %6 : vector<256x32xf32>
    %c0_6 = arith.constant 0 : index
    %c0_7 = arith.constant 0 : index
    %8 = vector.load %arg4[%c0_6, %c0_7] : memref<256x32xf32, #tpu.memory_space<vmem>>, vector<256x32xf32>
    tpu.vector_store %arg4[%c0_6, %c0_7], %7 {strides = array<i32>} : memref<256x32xf32, #tpu.memory_space<vmem>>, vector<256x32xf32>,
    return
  }
  func.func @transform_0(%arg0: i32) -> (i32, i32) {
    %c0_i32 = arith.constant 0 : i32
    %c0_i32_0 = arith.constant 0 : i32
    return %arg0, %c0_i32 : i32, i32
  }
  func.func @transform_1(%arg0: i32) -> (i32, i32) {
    %c0_i32 = arith.constant 0 : i32
    %c0_i32_0 = arith.constant 0 : i32
    %c0_i32_1 = arith.constant 0 : i32
    return %c0_i32, %c0_i32_0 : i32, i32
  }
  func.func @transform_2(%arg0: i32) -> (i32, i32) {
    %c0_i32 = arith.constant 0 : i32
    %c0_i32_0 = arith.constant 0 : i32
    %c0_i32_1 = arith.constant 0 : i32
    return %c0_i32, %c0_i32_0 : i32, i32
  }
  func.func @transform_3(%arg0: i32) -> (i32, i32) {
    %c0_i32 = arith.constant 0 : i32
    %c0_i32_0 = arith.constant 0 : i32
    return %arg0, %c0_i32 : i32, i32
  }
}

module attributes {stable_mosaic.version = 11 : i64} {
  func.func @_mm_bias_res_kernel(%arg0: i32, %arg1: memref<256x288xbf16, #tpu.memory_space<vmem>>, %arg2: memref<288x32xbf16, #tpu.memory_space<vmem>>, %arg3: memref<1x32xf32, #tpu.memory_space<vmem>>, %arg4: memref<256x32xf32, #tpu.memory_space<vmem>>, %arg5: memref<256x32xf32, #tpu.memory_space<vmem>>) attributes {dimension_semantics = [#tpu.dimension_semantics<parallel>], iteration_bounds = array<i64: 2>, scalar_prefetch = 0 : i64, scratch_operands = 0 : i64, tpu.core_type = #tpu.core_type<tc>, window_params = [{transform_indices = @transform_0, window_bounds = array<i64: 256, 288>}, {pipeline_mode = #tpu.pipeline_mode<synchronous>, transform_indices = @transform_1, window_bounds = array<i64: 288, 32>}, {pipeline_mode = #tpu.pipeline_mode<synchronous>, transform_indices = @transform_2, window_bounds = array<i64: 1, 32>}, {transform_indices = @transform_3, window_bounds = array<i64: 256, 32>}, {transform_indices = @transform_4, window_bounds = array<i64: 256, 32>}]} {
    %c0 = arith.constant 0 : index
    %c0_0 = arith.constant 0 : index
    %0 = vector.load %arg1[%c0, %c0_0] : memref<256x288xbf16, #tpu.memory_space<vmem>>, vector<256x288xbf16>
    %c0_1 = arith.constant 0 : index
    %c0_2 = arith.constant 0 : index
    %1 = vector.load %arg2[%c0_1, %c0_2] : memref<288x32xbf16, #tpu.memory_space<vmem>>, vector<288x32xbf16>
    %cst = arith.constant dense<0.000000e+00> : vector<256x32xf32>
    %2 = tpu.matmul %0, %1, %cst {dimension_numbers = #tpu.dot_dimension_numbers<[1], [0], [0], [1], [0, 0, 1, 1], [], []>} : vector<256x288xbf16>, vector<288x32xbf16>, vector<256x32xf32> -> vector<256x32xf32>
    %c0_3 = arith.constant 0 : index
    %c0_4 = arith.constant 0 : index
    %3 = vector.load %arg3[%c0_3, %c0_4] : memref<1x32xf32, #tpu.memory_space<vmem>>, vector<1x32xf32>
    %4 = vector.broadcast %3 : vector<1x32xf32> to vector<256x32xf32>
    %5 = arith.addf %2, %4 : vector<256x32xf32>
    %c0_5 = arith.constant 0 : index
    %c0_6 = arith.constant 0 : index
    %6 = vector.load %arg4[%c0_5, %c0_6] : memref<256x32xf32, #tpu.memory_space<vmem>>, vector<256x32xf32>
    %7 = arith.addf %5, %6 : vector<256x32xf32>
    %cst_7 = arith.constant 0.000000e+00 : f32
    %8 = vector.broadcast %cst_7 : f32 to vector<256x32xf32>
    %9 = arith.maximumf %7, %8 : vector<256x32xf32>
    %c0_8 = arith.constant 0 : index
    %c0_9 = arith.constant 0 : index
    %10 = vector.load %arg5[%c0_8, %c0_9] : memref<256x32xf32, #tpu.memory_space<vmem>>, vector<256x32xf32>
    tpu.vector_store %arg5[%c0_8, %c0_9], %9 {strides = array<i32>} : memref<256x32xf32, #tpu.memory_space<vmem>>, vector<256x32xf32>,
    return
  }
  func.func @transform_0(%arg0: i32) -> (i32, i32) {
    %c0_i32 = arith.constant 0 : i32
    %c0_i32_0 = arith.constant 0 : i32
    return %arg0, %c0_i32 : i32, i32
  }
  func.func @transform_1(%arg0: i32) -> (i32, i32) {
    %c0_i32 = arith.constant 0 : i32
    %c0_i32_0 = arith.constant 0 : i32
    %c0_i32_1 = arith.constant 0 : i32
    return %c0_i32, %c0_i32_0 : i32, i32
  }
  func.func @transform_2(%arg0: i32) -> (i32, i32) {
    %c0_i32 = arith.constant 0 : i32
    %c0_i32_0 = arith.constant 0 : i32
    %c0_i32_1 = arith.constant 0 : i32
    return %c0_i32, %c0_i32_0 : i32, i32
  }
  func.func @transform_3(%arg0: i32) -> (i32, i32) {
    %c0_i32 = arith.constant 0 : i32
    %c0_i32_0 = arith.constant 0 : i32
    return %arg0, %c0_i32 : i32, i32
  }
  func.func @transform_4(%arg0: i32) -> (i32, i32) {
    %c0_i32 = arith.constant 0 : i32
    %c0_i32_0 = arith.constant 0 : i32
    return %arg0, %c0_i32 : i32, i32
  }
}

module attributes {stable_mosaic.version = 11 : i64} {
  func.func @_mm_bias_kernel(%arg0: i32, %arg1: memref<64x288xbf16, #tpu.memory_space<vmem>>, %arg2: memref<288x64xbf16, #tpu.memory_space<vmem>>, %arg3: memref<1x64xf32, #tpu.memory_space<vmem>>, %arg4: memref<64x64xf32, #tpu.memory_space<vmem>>) attributes {dimension_semantics = [#tpu.dimension_semantics<parallel>], iteration_bounds = array<i64: 2>, scalar_prefetch = 0 : i64, scratch_operands = 0 : i64, tpu.core_type = #tpu.core_type<tc>, window_params = [{transform_indices = @transform_0, window_bounds = array<i64: 64, 288>}, {pipeline_mode = #tpu.pipeline_mode<synchronous>, transform_indices = @transform_1, window_bounds = array<i64: 288, 64>}, {pipeline_mode = #tpu.pipeline_mode<synchronous>, transform_indices = @transform_2, window_bounds = array<i64: 1, 64>}, {transform_indices = @transform_3, window_bounds = array<i64: 64, 64>}]} {
    %c0 = arith.constant 0 : index
    %c0_0 = arith.constant 0 : index
    %0 = vector.load %arg1[%c0, %c0_0] : memref<64x288xbf16, #tpu.memory_space<vmem>>, vector<64x288xbf16>
    %c0_1 = arith.constant 0 : index
    %c0_2 = arith.constant 0 : index
    %1 = vector.load %arg2[%c0_1, %c0_2] : memref<288x64xbf16, #tpu.memory_space<vmem>>, vector<288x64xbf16>
    %cst = arith.constant dense<0.000000e+00> : vector<64x64xf32>
    %2 = tpu.matmul %0, %1, %cst {dimension_numbers = #tpu.dot_dimension_numbers<[1], [0], [0], [1], [0, 0, 1, 1], [], []>} : vector<64x288xbf16>, vector<288x64xbf16>, vector<64x64xf32> -> vector<64x64xf32>
    %c0_3 = arith.constant 0 : index
    %c0_4 = arith.constant 0 : index
    %3 = vector.load %arg3[%c0_3, %c0_4] : memref<1x64xf32, #tpu.memory_space<vmem>>, vector<1x64xf32>
    %4 = vector.broadcast %3 : vector<1x64xf32> to vector<64x64xf32>
    %5 = arith.addf %2, %4 : vector<64x64xf32>
    %cst_5 = arith.constant 0.000000e+00 : f32
    %6 = vector.broadcast %cst_5 : f32 to vector<64x64xf32>
    %7 = arith.maximumf %5, %6 : vector<64x64xf32>
    %c0_6 = arith.constant 0 : index
    %c0_7 = arith.constant 0 : index
    %8 = vector.load %arg4[%c0_6, %c0_7] : memref<64x64xf32, #tpu.memory_space<vmem>>, vector<64x64xf32>
    tpu.vector_store %arg4[%c0_6, %c0_7], %7 {strides = array<i32>} : memref<64x64xf32, #tpu.memory_space<vmem>>, vector<64x64xf32>,
    return
  }
  func.func @transform_0(%arg0: i32) -> (i32, i32) {
    %c0_i32 = arith.constant 0 : i32
    %c0_i32_0 = arith.constant 0 : i32
    return %arg0, %c0_i32 : i32, i32
  }
  func.func @transform_1(%arg0: i32) -> (i32, i32) {
    %c0_i32 = arith.constant 0 : i32
    %c0_i32_0 = arith.constant 0 : i32
    %c0_i32_1 = arith.constant 0 : i32
    return %c0_i32, %c0_i32_0 : i32, i32
  }
  func.func @transform_2(%arg0: i32) -> (i32, i32) {
    %c0_i32 = arith.constant 0 : i32
    %c0_i32_0 = arith.constant 0 : i32
    %c0_i32_1 = arith.constant 0 : i32
    return %c0_i32, %c0_i32_0 : i32, i32
  }
  func.func @transform_3(%arg0: i32) -> (i32, i32) {
    %c0_i32 = arith.constant 0 : i32
    %c0_i32_0 = arith.constant 0 : i32
    return %arg0, %c0_i32 : i32, i32
  }
}

module attributes {stable_mosaic.version = 11 : i64} {
  func.func @_mm_bias_kernel(%arg0: i32, %arg1: memref<64x32xbf16, #tpu.memory_space<vmem>>, %arg2: memref<32x64xbf16, #tpu.memory_space<vmem>>, %arg3: memref<1x64xf32, #tpu.memory_space<vmem>>, %arg4: memref<64x64xf32, #tpu.memory_space<vmem>>) attributes {dimension_semantics = [#tpu.dimension_semantics<parallel>], iteration_bounds = array<i64: 2>, scalar_prefetch = 0 : i64, scratch_operands = 0 : i64, tpu.core_type = #tpu.core_type<tc>, window_params = [{transform_indices = @transform_0, window_bounds = array<i64: 64, 32>}, {pipeline_mode = #tpu.pipeline_mode<synchronous>, transform_indices = @transform_1, window_bounds = array<i64: 32, 64>}, {pipeline_mode = #tpu.pipeline_mode<synchronous>, transform_indices = @transform_2, window_bounds = array<i64: 1, 64>}, {transform_indices = @transform_3, window_bounds = array<i64: 64, 64>}]} {
    %c0 = arith.constant 0 : index
    %c0_0 = arith.constant 0 : index
    %0 = vector.load %arg1[%c0, %c0_0] : memref<64x32xbf16, #tpu.memory_space<vmem>>, vector<64x32xbf16>
    %c0_1 = arith.constant 0 : index
    %c0_2 = arith.constant 0 : index
    %1 = vector.load %arg2[%c0_1, %c0_2] : memref<32x64xbf16, #tpu.memory_space<vmem>>, vector<32x64xbf16>
    %cst = arith.constant dense<0.000000e+00> : vector<64x64xf32>
    %2 = tpu.matmul %0, %1, %cst {dimension_numbers = #tpu.dot_dimension_numbers<[1], [0], [0], [1], [0, 0, 1, 1], [], []>} : vector<64x32xbf16>, vector<32x64xbf16>, vector<64x64xf32> -> vector<64x64xf32>
    %c0_3 = arith.constant 0 : index
    %c0_4 = arith.constant 0 : index
    %3 = vector.load %arg3[%c0_3, %c0_4] : memref<1x64xf32, #tpu.memory_space<vmem>>, vector<1x64xf32>
    %4 = vector.broadcast %3 : vector<1x64xf32> to vector<64x64xf32>
    %5 = arith.addf %2, %4 : vector<64x64xf32>
    %c0_5 = arith.constant 0 : index
    %c0_6 = arith.constant 0 : index
    %6 = vector.load %arg4[%c0_5, %c0_6] : memref<64x64xf32, #tpu.memory_space<vmem>>, vector<64x64xf32>
    tpu.vector_store %arg4[%c0_5, %c0_6], %5 {strides = array<i32>} : memref<64x64xf32, #tpu.memory_space<vmem>>, vector<64x64xf32>,
    return
  }
  func.func @transform_0(%arg0: i32) -> (i32, i32) {
    %c0_i32 = arith.constant 0 : i32
    %c0_i32_0 = arith.constant 0 : i32
    return %arg0, %c0_i32 : i32, i32
  }
  func.func @transform_1(%arg0: i32) -> (i32, i32) {
    %c0_i32 = arith.constant 0 : i32
    %c0_i32_0 = arith.constant 0 : i32
    %c0_i32_1 = arith.constant 0 : i32
    return %c0_i32, %c0_i32_0 : i32, i32
  }
  func.func @transform_2(%arg0: i32) -> (i32, i32) {
    %c0_i32 = arith.constant 0 : i32
    %c0_i32_0 = arith.constant 0 : i32
    %c0_i32_1 = arith.constant 0 : i32
    return %c0_i32, %c0_i32_0 : i32, i32
  }
  func.func @transform_3(%arg0: i32) -> (i32, i32) {
    %c0_i32 = arith.constant 0 : i32
    %c0_i32_0 = arith.constant 0 : i32
    return %arg0, %c0_i32 : i32, i32
  }
}

module attributes {stable_mosaic.version = 11 : i64} {
  func.func @_mm_bias_res_kernel(%arg0: i32, %arg1: memref<64x576xbf16, #tpu.memory_space<vmem>>, %arg2: memref<576x64xbf16, #tpu.memory_space<vmem>>, %arg3: memref<1x64xf32, #tpu.memory_space<vmem>>, %arg4: memref<64x64xf32, #tpu.memory_space<vmem>>, %arg5: memref<64x64xf32, #tpu.memory_space<vmem>>) attributes {dimension_semantics = [#tpu.dimension_semantics<parallel>], iteration_bounds = array<i64: 2>, scalar_prefetch = 0 : i64, scratch_operands = 0 : i64, tpu.core_type = #tpu.core_type<tc>, window_params = [{transform_indices = @transform_0, window_bounds = array<i64: 64, 576>}, {pipeline_mode = #tpu.pipeline_mode<synchronous>, transform_indices = @transform_1, window_bounds = array<i64: 576, 64>}, {pipeline_mode = #tpu.pipeline_mode<synchronous>, transform_indices = @transform_2, window_bounds = array<i64: 1, 64>}, {transform_indices = @transform_3, window_bounds = array<i64: 64, 64>}, {transform_indices = @transform_4, window_bounds = array<i64: 64, 64>}]} {
    %c0 = arith.constant 0 : index
    %c0_0 = arith.constant 0 : index
    %0 = vector.load %arg1[%c0, %c0_0] : memref<64x576xbf16, #tpu.memory_space<vmem>>, vector<64x576xbf16>
    %c0_1 = arith.constant 0 : index
    %c0_2 = arith.constant 0 : index
    %1 = vector.load %arg2[%c0_1, %c0_2] : memref<576x64xbf16, #tpu.memory_space<vmem>>, vector<576x64xbf16>
    %cst = arith.constant dense<0.000000e+00> : vector<64x64xf32>
    %2 = tpu.matmul %0, %1, %cst {dimension_numbers = #tpu.dot_dimension_numbers<[1], [0], [0], [1], [0, 0, 1, 1], [], []>} : vector<64x576xbf16>, vector<576x64xbf16>, vector<64x64xf32> -> vector<64x64xf32>
    %c0_3 = arith.constant 0 : index
    %c0_4 = arith.constant 0 : index
    %3 = vector.load %arg3[%c0_3, %c0_4] : memref<1x64xf32, #tpu.memory_space<vmem>>, vector<1x64xf32>
    %4 = vector.broadcast %3 : vector<1x64xf32> to vector<64x64xf32>
    %5 = arith.addf %2, %4 : vector<64x64xf32>
    %c0_5 = arith.constant 0 : index
    %c0_6 = arith.constant 0 : index
    %6 = vector.load %arg4[%c0_5, %c0_6] : memref<64x64xf32, #tpu.memory_space<vmem>>, vector<64x64xf32>
    %7 = arith.addf %5, %6 : vector<64x64xf32>
    %cst_7 = arith.constant 0.000000e+00 : f32
    %8 = vector.broadcast %cst_7 : f32 to vector<64x64xf32>
    %9 = arith.maximumf %7, %8 : vector<64x64xf32>
    %c0_8 = arith.constant 0 : index
    %c0_9 = arith.constant 0 : index
    %10 = vector.load %arg5[%c0_8, %c0_9] : memref<64x64xf32, #tpu.memory_space<vmem>>, vector<64x64xf32>
    tpu.vector_store %arg5[%c0_8, %c0_9], %9 {strides = array<i32>} : memref<64x64xf32, #tpu.memory_space<vmem>>, vector<64x64xf32>,
    return
  }
  func.func @transform_0(%arg0: i32) -> (i32, i32) {
    %c0_i32 = arith.constant 0 : i32
    %c0_i32_0 = arith.constant 0 : i32
    return %arg0, %c0_i32 : i32, i32
  }
  func.func @transform_1(%arg0: i32) -> (i32, i32) {
    %c0_i32 = arith.constant 0 : i32
    %c0_i32_0 = arith.constant 0 : i32
    %c0_i32_1 = arith.constant 0 : i32
    return %c0_i32, %c0_i32_0 : i32, i32
  }
  func.func @transform_2(%arg0: i32) -> (i32, i32) {
    %c0_i32 = arith.constant 0 : i32
    %c0_i32_0 = arith.constant 0 : i32
    %c0_i32_1 = arith.constant 0 : i32
    return %c0_i32, %c0_i32_0 : i32, i32
  }
  func.func @transform_3(%arg0: i32) -> (i32, i32) {
    %c0_i32 = arith.constant 0 : i32
    %c0_i32_0 = arith.constant 0 : i32
    return %arg0, %c0_i32 : i32, i32
  }
  func.func @transform_4(%arg0: i32) -> (i32, i32) {
    %c0_i32 = arith.constant 0 : i32
    %c0_i32_0 = arith.constant 0 : i32
    return %arg0, %c0_i32 : i32, i32
  }
}

module attributes {stable_mosaic.version = 11 : i64} {
  func.func @_pool_kernel(%arg0: i32, %arg1: memref<8x16x64xf32, #tpu.memory_space<vmem>>, %arg2: memref<8x1xf32, #tpu.memory_space<vmem>>, %arg3: memref<8x64xf32, #tpu.memory_space<vmem>>) attributes {dimension_semantics = [#tpu.dimension_semantics<parallel>], iteration_bounds = array<i64: 1>, scalar_prefetch = 0 : i64, scratch_operands = 0 : i64, tpu.core_type = #tpu.core_type<tc>, window_params = [{transform_indices = @transform_0, window_bounds = array<i64: 8, 16, 64>}, {transform_indices = @transform_1, window_bounds = array<i64: 8, 1>}, {transform_indices = @transform_2, window_bounds = array<i64: 8, 64>}]} {
    %c0 = arith.constant 0 : index
    %c0_0 = arith.constant 0 : index
    %c0_1 = arith.constant 0 : index
    %0 = vector.load %arg1[%c0, %c0_0, %c0_1] : memref<8x16x64xf32, #tpu.memory_space<vmem>>, vector<8x16x64xf32>
    %cst = arith.constant dense<0.000000e+00> : vector<8x64xf32>
    %1 = vector.multi_reduction <add>, %0, %cst [1] : vector<8x16x64xf32> to vector<8x64xf32>
    %cst_2 = arith.constant 1.600000e+01 : f32
    %2 = vector.broadcast %cst_2 : f32 to vector<8x64xf32>
    %3 = arith.divf %1, %2 : vector<8x64xf32>
    %c0_3 = arith.constant 0 : index
    %c0_4 = arith.constant 0 : index
    %4 = vector.load %arg2[%c0_3, %c0_4] : memref<8x1xf32, #tpu.memory_space<vmem>>, vector<8x1xf32>
    %5 = vector.broadcast %4 : vector<8x1xf32> to vector<8x64xf32>
    %6 = arith.mulf %3, %5 : vector<8x64xf32>
    %c0_5 = arith.constant 0 : index
    %c0_6 = arith.constant 0 : index
    %7 = vector.load %arg3[%c0_5, %c0_6] : memref<8x64xf32, #tpu.memory_space<vmem>>, vector<8x64xf32>
    tpu.vector_store %arg3[%c0_5, %c0_6], %6 {strides = array<i32>} : memref<8x64xf32, #tpu.memory_space<vmem>>, vector<8x64xf32>,
    return
  }
  func.func @transform_0(%arg0: i32) -> (i32, i32, i32) {
    %c0_i32 = arith.constant 0 : i32
    %c0_i32_0 = arith.constant 0 : i32
    %c0_i32_1 = arith.constant 0 : i32
    return %arg0, %c0_i32, %c0_i32_0 : i32, i32, i32
  }
  func.func @transform_1(%arg0: i32) -> (i32, i32) {
    %c0_i32 = arith.constant 0 : i32
    %c0_i32_0 = arith.constant 0 : i32
    return %arg0, %c0_i32 : i32, i32
  }
  func.func @transform_2(%arg0: i32) -> (i32, i32) {
    %c0_i32 = arith.constant 0 : i32
    %c0_i32_0 = arith.constant 0 : i32
    return %arg0, %c0_i32 : i32, i32
  }
}

</mosaic_0001>

<llo_original>
// kernel: tsm_resnet_encoder.7
$region0: #{tsm_resnet_encoder.7}
  #allocation0 [shape = 'u32[]', space=smem, size = 0x4, offset = 0x4, fixed_abs, tag = 'smem constant byte address 0x4 - core index']
  #allocation1 [shape = 'u32[144,128]{1,0:T(1,128)}', space=vmem, size = 0x12000, scoped, tag = 'internal scratch']
  %s0 = inlined_call_operand.vmem [shape: bf16[512,27], index: 0, kind: input, shape index: {}]
  %s1 = inlined_call_operand.vmem [shape: bf16[27,32], index: 1, kind: input, shape index: {}]
  %s2 = inlined_call_operand.vmem [shape: f32[1,32], index: 2, kind: input, shape index: {}]
  %s3 = inlined_call_operand.vmem [shape: f32[512,32], index: 3, kind: output, shape index: {}]
  %s4 = sld [smem:[#allocation0]]
  $region45: #{tsm_resnet_encoder.7} parent=0
    _
  %s6 = ssub.s32 1, %s4
  %s7 = scalar_select 0, %s6, %s4
  loop: start=0, step=1, limit=4
  $region2: #{tsm_resnet_encoder.7} parent=0 // loop_pre_header
    _
  $region3: #{tsm_resnet_encoder.7} parent=0 // loop_header
    %s9 = sphi 0, %s13
    %p10 = scmp.ge.s32.totalorder %s9, 4
    %s19 = sphi 0, %s21
    %s22 = sphi 0, %s19
    %s23 = sphi 0, %s22
    %s39 = sphi 0, %s23
    %s43 = sphi 0, %s43
    %s45 = sphi 0, %s43
    %s46 = sphi 0, %s45
    %s60 = sphi 0, %s46
    %s64 = sphi 0, %s64
    %s66 = sphi 0, %s64
    %s67 = sphi 0, %s66
    %s81 = sphi 0, %s67
    %s87 = sphi 0, %s89
    %s90 = sphi 0, %s87
    %s91 = sphi 0, %s90
    %s107 = sphi 0, %s91
  $region4: #{tsm_resnet_encoder.7} parent=0 // loop_header_branch
    %12 = sbr.rel (%p10) target = $region8
  $region5: #{tsm_resnet_encoder.7} parent=0 // loop_body
    %s14 = ssub.s32 %s9, 1
    %s15 = ssub.s32 %s9, 2
    %s16 = sadd.s32 %s9, 1
    %s17 = ssub.s32 %s9, %s16
    %p18 = scmp.eq.s32.totalorder %s17, 0
    %s20 = sadd.s32 %s19, 1
    %s21 = scalar_select %p18, %s19, %s20
    %p24 = pneg %p18
    %p25 = scmp.eq.s32.totalorder %s9, 1
    %p26 = por %p24, %p25
    %p27 = scmp.ne.s32.totalorder %s19, %s22
    %p28 = scmp.eq.s32.totalorder %s9, 0
    %p29 = por %p27, %p28
    %p30 = scmp.ne.s32.totalorder %s19, %s22
    %p31 = scmp.eq.s32.totalorder %s14, 1
    %p32 = por %p30, %p31
    %p33 = scmp.ne.s32.totalorder %s22, %s23
    %p34 = scmp.eq.s32.totalorder %s14, 0
    %p35 = por %p33, %p34
    %p36 = scmp.ne.s32.totalorder %s22, %s23
    %p37 = scmp.eq.s32.totalorder %s15, 1
    %p38 = por %p36, %p37
    %p40 = scmp.ne.s32.totalorder %s23, %s39
    %p41 = scmp.eq.s32.totalorder %s15, 0
    %p42 = por %p40, %p41
    %s44 = sadd.s32 %s43, 1
    %p47 = scmp.eq.s32.totalorder %s9, 1
    %p48 = scmp.ne.s32.totalorder %s43, %s45
    %p49 = scmp.eq.s32.totalorder %s9, 0
    %p50 = por %p48, %p49
    %p51 = scmp.ne.s32.totalorder %s43, %s45
    %p52 = scmp.eq.s32.totalorder %s14, 1
    %p53 = por %p51, %p52
    %p54 = scmp.ne.s32.totalorder %s45, %s46
    %p55 = scmp.eq.s32.totalorder %s14, 0
    %p56 = por %p54, %p55
    %p57 = scmp.ne.s32.totalorder %s45, %s46
    %p58 = scmp.eq.s32.totalorder %s15, 1
    %p59 = por %p57, %p58
    %p61 = scmp.ne.s32.totalorder %s46, %s60
    %p62 = scmp.eq.s32.totalorder %s15, 0
    %p63 = por %p61, %p62
    %s65 = sadd.s32 %s64, 1
    %p68 = scmp.eq.s32.totalorder %s9, 1
    %p69 = scmp.ne.s32.totalorder %s64, %s66
    %p70 = scmp.eq.s32.totalorder %s9, 0
    %p71 = por %p69, %p70
    %p72 = scmp.ne.s32.totalorder %s64, %s66
    %p73 = scmp.eq.s32.totalorder %s14, 1
    %p74 = por %p72, %p73
    %p75 = scmp.ne.s32.totalorder %s66, %s67
    %p76 = scmp.eq.s32.totalorder %s14, 0
    %p77 = por %p75, %p76
    %p78 = scmp.ne.s32.totalorder %s66, %s67
    %p79 = scmp.eq.s32.totalorder %s15, 1
    %p80 = por %p78, %p79
    %p82 = scmp.ne.s32.totalorder %s67, %s81
    %p83 = scmp.eq.s32.totalorder %s15, 0
    %p84 = por %p82, %p83
    %s85 = ssub.s32 %s9, %s16
    %p86 = scmp.eq.s32.totalorder %s85, 0
    %s88 = sadd.s32 %s87, 1
    %s89 = scalar_select %p86, %s87, %s88
    %p92 = pneg %p86
    %p93 = scmp.eq.s32.totalorder %s9, 1
    %p94 = por %p92, %p93
    %p95 = scmp.ne.s32.totalorder %s87, %s90
    %p96 = scmp.eq.s32.totalorder %s9, 0
    %p97 = por %p95, %p96
    %p98 = scmp.ne.s32.totalorder %s87, %s90
    %p99 = scmp.eq.s32.totalorder %s14, 1
    %p100 = por %p98, %p99
    %p101 = scmp.ne.s32.totalorder %s90, %s91
    %p102 = scmp.eq.s32.totalorder %s14, 0
    %p103 = por %p101, %p102
    %p104 = scmp.ne.s32.totalorder %s90, %s91
    %p105 = scmp.eq.s32.totalorder %s15, 1
    %p106 = por %p104, %p105
    %p108 = scmp.ne.s32.totalorder %s91, %s107
    %p109 = scmp.eq.s32.totalorder %s15, 0
    %p110 = por %p108, %p109
    %p111 = scmp.le.s32.totalorder 1, %s9
    %p112 = scmp.lt.s32.totalorder %s9, 3
    %p113 = pnand %p111, %p112
    %p114 = pneg %p113
    // Predicated region
    $region9: #{tsm_resnet_encoder.7} parent=5 // pred_check
      _
    $region10: #{tsm_resnet_encoder.7} parent=5 // pred_check_branch
      %116 = sbr.rel (%p113) target = $region12
    $region11: #{tsm_resnet_encoder.7} parent=5 // pred_region
      %s117 = ssub.s32 %s9, 1
      // Predicated region
      $region13: #{tsm_resnet_encoder.7} parent=11 // pred_check
        %p118 = pneg %p56
      $region14: #{tsm_resnet_encoder.7} parent=11 // pred_check_branch
        %120 = sbr.rel (%p118) target = $region16
      $region15: #{tsm_resnet_encoder.7} parent=11 // pred_region
        _
      $region16: #{tsm_resnet_encoder.7} parent=11 // pred_fallthru
        _
      // Predicated region
      $region17: #{tsm_resnet_encoder.7} parent=11 // pred_check
        %p121 = pneg %p77
      $region18: #{tsm_resnet_encoder.7} parent=11 // pred_check_branch
        %123 = sbr.rel (%p121) target = $region20
      $region19: #{tsm_resnet_encoder.7} parent=11 // pred_region
        _
      $region20: #{tsm_resnet_encoder.7} parent=11 // pred_fallthru
        _
    $region12: #{tsm_resnet_encoder.7} parent=5 // pred_fallthru
      _
    %p124 = scmp.lt.s32.totalorder %s9, 2
    // Predicated region
    $region21: #{tsm_resnet_encoder.7} parent=5 // pred_check
      %p125 = pneg %p124
    $region22: #{tsm_resnet_encoder.7} parent=5 // pred_check_branch
      %127 = sbr.rel (%p125) target = $region24
    $region23: #{tsm_resnet_encoder.7} parent=5 // pred_region
      // Predicated region
      $region25: #{tsm_resnet_encoder.7} parent=23 // pred_check
        %p128 = pneg %p29
      $region26: #{tsm_resnet_encoder.7} parent=23 // pred_check_branch
        %130 = sbr.rel (%p128) target = $region28
      $region27: #{tsm_resnet_encoder.7} parent=23 // pred_region
        %s131 = smul.u32 32, %s9
        %p132 = scmp.lt.s32.totalorder %s131, 63
        %s133 = scalar_select %p132, %s131, 63
        %s134 = smul.addr %s133, 4
        %s135 = scalar_lea.vmem %s0, %s134
        %s136 = smul.u32 32, %s9
      $region28: #{tsm_resnet_encoder.7} parent=23 // pred_fallthru
        _
    $region24: #{tsm_resnet_encoder.7} parent=5 // pred_fallthru
      _
    %p137 = scmp.le.s32.totalorder 1, %s9
    %p138 = scmp.lt.s32.totalorder %s9, 3
    %p139 = pnand %p137, %p138
    %p140 = pneg %p139
    // Predicated region
    $region29: #{tsm_resnet_encoder.7} parent=5 // pred_check
      _
    $region30: #{tsm_resnet_encoder.7} parent=5 // pred_check_branch
      %142 = sbr.rel (%p139) target = $region32
    $region31: #{tsm_resnet_encoder.7} parent=5 // pred_region
      %s143 = ssub.s32 %s9, 1
      %s144 = smul.u32 32, %s14
      %p145 = scmp.lt.s32.totalorder %s144, 63
      %s146 = scalar_select %p145, %s144, 63
      %s147 = smul.addr %s146, 4
      %s148 = scalar_lea.vmem %s0, %s147
      %p149 = pneg %p35
      %p150 = pneg %p32
      %p151 = pneg %p56
      %p152 = pneg %p53
      %p153 = pneg %p77
      %p154 = pneg %p74
      %p155 = pneg %p103
      %p156 = pneg %p100
      %s157 = smul.u32 32, %s14
      %p158 = scmp.lt.s32.totalorder %s157, 63
      %s159 = scalar_select %p158, %s157, 63
      %s160 = smul.addr %s159, 8
      %s161 = scalar_lea.vmem %s3, %s160
      %s162 = smul.u32 32, %s14
      %p163 = scmp.lt.s32.totalorder %s162, 63
      %s164 = scalar_select %p163, %s162, 63
      %s165 = smul.addr %s164, 4
      %s166 = scalar_lea.vmem %s0, %s165
      %s167 = smul.u32 32, %s14
      %s168 = smul.u32 32, %s14
      %p169 = scmp.lt.s32.totalorder %s168, 63
      %s170 = scalar_select %p169, %s168, 63
      %s171 = smul.addr %s170, 8
      %s172 = scalar_lea.vmem %s3, %s171
      %s173 = smul.u32 32, %s14
      %v175 = vld [vmem:[%s166] sm:$0xf]
      %v176 = vld [vmem:[%s166 + $0x4] sm:$0xf]
      %v177 = vld [vmem:[%s166 + $0x8] sm:$0xf]
      %v178 = vld [vmem:[%s166 + $0xc] sm:$0xf]
      %v179 = vld [vmem:[%s166 + $0x10] sm:$0xf]
      %v180 = vld [vmem:[%s166 + $0x14] sm:$0xf]
      %v181 = vld [vmem:[%s166 + $0x18] sm:$0xf]
      %v182 = vld [vmem:[%s166 + $0x1c] sm:$0xf]
      %v183 = vld [vmem:[%s166 + $0x20] sm:$0xf]
      %v184 = vld [vmem:[%s166 + $0x24] sm:$0xf]
      %v185 = vld [vmem:[%s166 + $0x28] sm:$0xf]
      %v186 = vld [vmem:[%s166 + $0x2c] sm:$0xf]
      %v187 = vld [vmem:[%s166 + $0x30] sm:$0xf]
      %v188 = vld [vmem:[%s166 + $0x34] sm:$0xf]
      %v189 = vld [vmem:[%s166 + $0x38] sm:$0xf]
      %v190 = vld [vmem:[%s166 + $0x3c] sm:$0xf]
      %v191 = vld [vmem:[%s166 + $0x40] sm:$0xf]
      %v192 = vld [vmem:[%s166 + $0x44] sm:$0xf]
      %v193 = vld [vmem:[%s166 + $0x48] sm:$0xf]
      %v194 = vld [vmem:[%s166 + $0x4c] sm:$0xf]
      %v195 = vld [vmem:[%s166 + $0x50] sm:$0xf]
      %v196 = vld [vmem:[%s166 + $0x54] sm:$0xf]
      %v197 = vld [vmem:[%s166 + $0x58] sm:$0xf]
      %v198 = vld [vmem:[%s166 + $0x5c] sm:$0xf]
      %v199 = vld [vmem:[%s166 + $0x60] sm:$0xf]
      %v200 = vld [vmem:[%s166 + $0x64] sm:$0xf]
      %v201 = vld [vmem:[%s166 + $0x68] sm:$0xf]
      %v202 = vld [vmem:[%s166 + $0x6c] sm:$0xf]
      %v203 = vld [vmem:[%s166 + $0x70] sm:$0xf]
      %v204 = vld [vmem:[%s166 + $0x74] sm:$0xf]
      %v205 = vld [vmem:[%s166 + $0x78] sm:$0xf]
      %v206 = vld [vmem:[%s166 + $0x7c] sm:$0xf]
      %v207 = vld [vmem:[%s1] sm:$0xf]
      %v208 = vld [vmem:[%s1 + $0x4] sm:$0xf]
      %v209 = vld [vmem:[%s1 + $0x8] sm:$0xf]
      %v210 = vld [vmem:[%s1 + $0xc] sm:$0x3]
      %v211 = vld [vmem:[%s2] sm:$0x1]
      %v213 = vlaneseq
      %v214 = vshrl.u32 %v213, 7
      %v215 = vsub.s32 0, %v214
      %v216 = vrot.slane %v211, %v215
      %v250 = vunpack.c.l.b16 %v175
      %v251 = vunpack.c.l.b16 %v176
      %v252 = vunpack.c.l.b16 %v177
      %v253 = vunpack.c.l.b16 %v178
      %v254 = vunpack.c.l.b16 %v179
      %v255 = vunpack.c.l.b16 %v180
      %v256 = vunpack.c.l.b16 %v181
      %v257 = vunpack.c.l.b16 %v182
      %v258 = vunpack.c.l.b16 %v183
      %v259 = vunpack.c.l.b16 %v184
      %v260 = vunpack.c.l.b16 %v185
      %v261 = vunpack.c.l.b16 %v186
      %v262 = vunpack.c.l.b16 %v187
      %v263 = vunpack.c.l.b16 %v188
      %v264 = vunpack.c.l.b16 %v189
      %v265 = vunpack.c.l.b16 %v190
      %v266 = vunpack.c.l.b16 %v191
      %v267 = vunpack.c.l.b16 %v192
      %v268 = vunpack.c.l.b16 %v193
      %v269 = vunpack.c.l.b16 %v194
      %v270 = vunpack.c.l.b16 %v195
      %v271 = vunpack.c.l.b16 %v196
      %v272 = vunpack.c.l.b16 %v197
      %v273 = vunpack.c.l.b16 %v198
      %v274 = vunpack.c.l.b16 %v199
      %v275 = vunpack.c.l.b16 %v200
      %v276 = vunpack.c.l.b16 %v201
      %v277 = vunpack.c.l.b16 %v202
      %v278 = vunpack.c.l.b16 %v203
      %v279 = vunpack.c.l.b16 %v204
      %v280 = vunpack.c.l.b16 %v205
      %v281 = vunpack.c.l.b16 %v206
      %v282 = vpack.c.b16 %v251, %v250
      %v283 = vpack.c.b16 %v253, %v252
      %v284 = vpack.c.b16 %v255, %v254
      %v285 = vpack.c.b16 %v257, %v256
      %v286 = vpack.c.b16 %v259, %v258
      %v287 = vpack.c.b16 %v261, %v260
      %v288 = vpack.c.b16 %v263, %v262
      %v289 = vpack.c.b16 %v265, %v264
      %v290 = vpack.c.b16 %v267, %v266
      %v291 = vpack.c.b16 %v269, %v268
      %v292 = vpack.c.b16 %v271, %v270
      %v293 = vpack.c.b16 %v273, %v272
      %v294 = vpack.c.b16 %v275, %v274
      %v295 = vpack.c.b16 %v277, %v276
      %v296 = vpack.c.b16 %v279, %v278
      %v297 = vpack.c.b16 %v281, %v280
      %v302 = vunpack.c.l.b16 %v207
      %v303 = vunpack.c.l.b16 %v208
      %v304 = vunpack.c.l.b16 %v209
      %v305 = vunpack.c.l.b16 %v210
      %v306 = vpack.c.b16 %v303, %v302
      %v307 = vpack.c.b16 %v305, %v304
      %vm309 = vcmask 220160
      %v311 = vsel %vm309, %v282, 0
      %v314 = vsel %vm309, %v283, 0
      %v317 = vsel %vm309, %v284, 0
      %v320 = vsel %vm309, %v285, 0
      %v323 = vsel %vm309, %v286, 0
      %v326 = vsel %vm309, %v287, 0
      %v329 = vsel %vm309, %v288, 0
      %v332 = vsel %vm309, %v289, 0
      %v335 = vsel %vm309, %v290, 0
      %v338 = vsel %vm309, %v291, 0
      %v341 = vsel %vm309, %v292, 0
      %v344 = vsel %vm309, %v293, 0
      %v347 = vsel %vm309, %v294, 0
      %v350 = vsel %vm309, %v295, 0
      %v353 = vsel %vm309, %v296, 0
      %v356 = vsel %vm309, %v297, 0
      %vm358 = vcmask 1044480
      %vm359 = vcmask 1045504
      %v360 = vsel %vm358, 4294967295, 65535
      %v361 = vsel %vm359, %v360, 0
      %v363 = vand.u32 %v307, %v361
      %365 = vmatprep.subr.bf16.mxu0 0
      %366 = vmatpush1.bf16.msra.mxu0 %v306
      %367 = vmatprep.subr.bf16.mxu0 0
      %368 = vmatpush1.bf16.msra.mxu0 %v363
      %369 = vmatprep.subr.bf16.mxu0 0
      %370 = vmatpush1.bf16.msra.mxu0 0
      %371 = vmatprep.subr.bf16.mxu0 0
      %372 = vmatpush1.bf16.msra.mxu0 0
      %373 = vmatprep.subr.bf16.mxu0 0
      %374 = vmatpush1.bf16.msra.mxu0 0
      %375 = vmatprep.subr.bf16.mxu0 0
      %376 = vmatpush1.bf16.msra.mxu0 0
      %377 = vmatprep.subr.bf16.mxu0 0
      %378 = vmatpush1.bf16.msra.mxu0 0
      %379 = vmatprep.subr.bf16.mxu0 0
      %380 = vmatpush1.bf16.msra.mxu0 0
      %381 = vmatprep.subr.bf16.mxu0 0
      %382 = vmatpush1.bf16.msra.mxu0 0
      %383 = vmatprep.subr.bf16.mxu0 0
      %384 = vmatpush1.bf16.msra.mxu0 0
      %385 = vmatprep.subr.bf16.mxu0 0
      %386 = vmatpush1.bf16.msra.mxu0 0
      %387 = vmatprep.subr.bf16.mxu0 0
      %388 = vmatpush1.bf16.msra.mxu0 0
      %389 = vmatprep.subr.bf16.mxu0 0
      %390 = vmatpush1.bf16.msra.mxu0 0
      %391 = vmatprep.subr.bf16.mxu0 0
      %392 = vmatpush1.bf16.msra.mxu0 0
      %393 = vmatprep.subr.bf16.mxu0 0
      %394 = vmatpush1.bf16.msra.mxu0 0
      %395 = vmatprep.subr.bf16.mxu0 0
      %396 = vmatpush1.bf16.msra.mxu0 0
      %397 = vmatprep.mubr.bf16.mxu0 0
      %398 = vmatmul.mubr.bf16.gmra.mrb[0].mxu0 %v311
      %v399 = vpop.f32.mrb[0].mxu0
      %v400 = vadd.f32 %v216, %v399
      %v401 = vpop.f32.mrb[0].mxu0
      %v402 = vpop.f32.mrb[0].mxu0
      %v403 = vadd.f32 %v216, %v402
      %v404 = vpop.f32.mrb[0].mxu0
      %405 = vmatprep.mubr.bf16.mxu0 0
      %406 = vmatmul.mubr.bf16.gmra.mrb[0].mxu0 %v314
      %v407 = vpop.f32.mrb[0].mxu0
      %v408 = vadd.f32 %v216, %v407
      %v409 = vpop.f32.mrb[0].mxu0
      %v410 = vpop.f32.mrb[0].mxu0
      %v411 = vadd.f32 %v216, %v410
      %v412 = vpop.f32.mrb[0].mxu0
      %413 = vmatprep.mubr.bf16.mxu0 0
      %414 = vmatmul.mubr.bf16.gmra.mrb[0].mxu0 %v317
      %v415 = vpop.f32.mrb[0].mxu0
      %v416 = vadd.f32 %v216, %v415
      %v417 = vpop.f32.mrb[0].mxu0
      %v418 = vpop.f32.mrb[0].mxu0
      %v419 = vadd.f32 %v216, %v418
      %v420 = vpop.f32.mrb[0].mxu0
      %421 = vmatprep.mubr.bf16.mxu0 0
      %422 = vmatmul.mubr.bf16.gmra.mrb[0].mxu0 %v320
      %v423 = vpop.f32.mrb[0].mxu0
      %v424 = vadd.f32 %v216, %v423
      %v425 = vpop.f32.mrb[0].mxu0
      %v426 = vpop.f32.mrb[0].mxu0
      %v427 = vadd.f32 %v216, %v426
      %v428 = vpop.f32.mrb[0].mxu0
      %429 = vmatprep.mubr.bf16.mxu0 0
      %430 = vmatmul.mubr.bf16.gmra.mrb[0].mxu0 %v323
      %v431 = vpop.f32.mrb[0].mxu0
      %v432 = vadd.f32 %v216, %v431
      %v433 = vpop.f32.mrb[0].mxu0
      %v434 = vpop.f32.mrb[0].mxu0
      %v435 = vadd.f32 %v216, %v434
      %v436 = vpop.f32.mrb[0].mxu0
      %437 = vmatprep.mubr.bf16.mxu0 0
      %438 = vmatmul.mubr.bf16.gmra.mrb[0].mxu0 %v326
      %v439 = vpop.f32.mrb[0].mxu0
      %v440 = vadd.f32 %v216, %v439
      %v441 = vpop.f32.mrb[0].mxu0
      %v442 = vpop.f32.mrb[0].mxu0
      %v443 = vadd.f32 %v216, %v442
      %v444 = vpop.f32.mrb[0].mxu0
      %445 = vmatprep.mubr.bf16.mxu0 0
      %446 = vmatmul.mubr.bf16.gmra.mrb[0].mxu0 %v329
      %v447 = vpop.f32.mrb[0].mxu0
      %v448 = vadd.f32 %v216, %v447
      %v449 = vpop.f32.mrb[0].mxu0
      %v450 = vpop.f32.mrb[0].mxu0
      %v451 = vadd.f32 %v216, %v450
      %v452 = vpop.f32.mrb[0].mxu0
      %453 = vmatprep.mubr.bf16.mxu0 0
      %454 = vmatmul.mubr.bf16.gmra.mrb[0].mxu0 %v332
      %v455 = vpop.f32.mrb[0].mxu0
      %v456 = vadd.f32 %v216, %v455
      %v457 = vpop.f32.mrb[0].mxu0
      %v458 = vpop.f32.mrb[0].mxu0
      %v459 = vadd.f32 %v216, %v458
      %v460 = vpop.f32.mrb[0].mxu0
      %461 = vmatprep.mubr.bf16.mxu0 0
      %462 = vmatmul.mubr.bf16.gmra.mrb[0].mxu0 %v335
      %v463 = vpop.f32.mrb[0].mxu0
      %v464 = vadd.f32 %v216, %v463
      %v465 = vpop.f32.mrb[0].mxu0
      %v466 = vpop.f32.mrb[0].mxu0
      %v467 = vadd.f32 %v216, %v466
      %v468 = vpop.f32.mrb[0].mxu0
      %469 = vmatprep.mubr.bf16.mxu0 0
      %470 = vmatmul.mubr.bf16.gmra.mrb[0].mxu0 %v338
      %v471 = vpop.f32.mrb[0].mxu0
      %v472 = vadd.f32 %v216, %v471
      %v473 = vpop.f32.mrb[0].mxu0
      %v474 = vpop.f32.mrb[0].mxu0
      %v475 = vadd.f32 %v216, %v474
      %v476 = vpop.f32.mrb[0].mxu0
      %477 = vmatprep.mubr.bf16.mxu0 0
      %478 = vmatmul.mubr.bf16.gmra.mrb[0].mxu0 %v341
      %v479 = vpop.f32.mrb[0].mxu0
      %v480 = vadd.f32 %v216, %v479
      %v481 = vpop.f32.mrb[0].mxu0
      %v482 = vpop.f32.mrb[0].mxu0
      %v483 = vadd.f32 %v216, %v482
      %v484 = vpop.f32.mrb[0].mxu0
      %485 = vmatprep.mubr.bf16.mxu0 0
      %486 = vmatmul.mubr.bf16.gmra.mrb[0].mxu0 %v344
      %v487 = vpop.f32.mrb[0].mxu0
      %v488 = vadd.f32 %v216, %v487
      %v489 = vpop.f32.mrb[0].mxu0
      %v490 = vpop.f32.mrb[0].mxu0
      %v491 = vadd.f32 %v216, %v490
      %v492 = vpop.f32.mrb[0].mxu0
      %493 = vmatprep.mubr.bf16.mxu0 0
      %494 = vmatmul.mubr.bf16.gmra.mrb[0].mxu0 %v347
      %v495 = vpop.f32.mrb[0].mxu0
      %v496 = vadd.f32 %v216, %v495
      %v497 = vpop.f32.mrb[0].mxu0
      %v498 = vpop.f32.mrb[0].mxu0
      %v499 = vadd.f32 %v216, %v498
      %v500 = vpop.f32.mrb[0].mxu0
      %501 = vmatprep.mubr.bf16.mxu0 0
      %502 = vmatmul.mubr.bf16.gmra.mrb[0].mxu0 %v350
      %v503 = vpop.f32.mrb[0].mxu0
      %v504 = vadd.f32 %v216, %v503
      %v505 = vpop.f32.mrb[0].mxu0
      %v506 = vpop.f32.mrb[0].mxu0
      %v507 = vadd.f32 %v216, %v506
      %v508 = vpop.f32.mrb[0].mxu0
      %509 = vmatprep.mubr.bf16.mxu0 0
      %510 = vmatmul.mubr.bf16.gmra.mrb[0].mxu0 %v353
      %v511 = vpop.f32.mrb[0].mxu0
      %v512 = vadd.f32 %v216, %v511
      %v513 = vpop.f32.mrb[0].mxu0
      %v514 = vpop.f32.mrb[0].mxu0
      %v515 = vadd.f32 %v216, %v514
      %v516 = vpop.f32.mrb[0].mxu0
      %517 = vmatprep.mubr.bf16.mxu0 0
      %518 = vmatmul.mubr.bf16.gmra.mrb[0].mxu0 %v356
      %v519 = vpop.f32.mrb[0].mxu0
      %v520 = vadd.f32 %v216, %v519
      %v521 = vpop.f32.mrb[0].mxu0
      %v522 = vpop.f32.mrb[0].mxu0
      %v523 = vadd.f32 %v216, %v522
      %v524 = vpop.f32.mrb[0].mxu0
      %525 = vdwg.mxu0
      %v526 = vmax.f32 %v400, 0.0
      %v527 = vmax.f32 %v403, 0.0
      %v528 = vmax.f32 %v408, 0.0
      %v529 = vmax.f32 %v411, 0.0
      %v530 = vmax.f32 %v416, 0.0
      %v531 = vmax.f32 %v419, 0.0
      %v532 = vmax.f32 %v424, 0.0
      %v533 = vmax.f32 %v427, 0.0
      %v534 = vmax.f32 %v432, 0.0
      %v535 = vmax.f32 %v435, 0.0
      %v536 = vmax.f32 %v440, 0.0
      %v537 = vmax.f32 %v443, 0.0
      %v538 = vmax.f32 %v448, 0.0
      %v539 = vmax.f32 %v451, 0.0
      %v540 = vmax.f32 %v456, 0.0
      %v541 = vmax.f32 %v459, 0.0
      %v542 = vmax.f32 %v464, 0.0
      %v543 = vmax.f32 %v467, 0.0
      %v544 = vmax.f32 %v472, 0.0
      %v545 = vmax.f32 %v475, 0.0
      %v546 = vmax.f32 %v480, 0.0
      %v547 = vmax.f32 %v483, 0.0
      %v548 = vmax.f32 %v488, 0.0
      %v549 = vmax.f32 %v491, 0.0
      %v550 = vmax.f32 %v496, 0.0
      %v551 = vmax.f32 %v499, 0.0
      %v552 = vmax.f32 %v504, 0.0
      %v553 = vmax.f32 %v507, 0.0
      %v554 = vmax.f32 %v512, 0.0
      %v555 = vmax.f32 %v515, 0.0
      %v556 = vmax.f32 %v520, 0.0
      %v557 = vmax.f32 %v523, 0.0
      %vm558 = vcmask 261120
      %559 = vst.msk [vmem:[%s172] sm:$0xff] %vm558, %v526
      %560 = vst.msk [vmem:[%s172 + $0x8] sm:$0xff] %vm558, %v527
      %561 = vst.msk [vmem:[%s172 + $0x10] sm:$0xff] %vm558, %v528
      %562 = vst.msk [vmem:[%s172 + $0x18] sm:$0xff] %vm558, %v529
      %563 = vst.msk [vmem:[%s172 + $0x20] sm:$0xff] %vm558, %v530
      %564 = vst.msk [vmem:[%s172 + $0x28] sm:$0xff] %vm558, %v531
      %565 = vst.msk [vmem:[%s172 + $0x30] sm:$0xff] %vm558, %v532
      %566 = vst.msk [vmem:[%s172 + $0x38] sm:$0xff] %vm558, %v533
      %567 = vst.msk [vmem:[%s172 + $0x40] sm:$0xff] %vm558, %v534
      %568 = vst.msk [vmem:[%s172 + $0x48] sm:$0xff] %vm558, %v535
      %569 = vst.msk [vmem:[%s172 + $0x50] sm:$0xff] %vm558, %v536
      %570 = vst.msk [vmem:[%s172 + $0x58] sm:$0xff] %vm558, %v537
      %571 = vst.msk [vmem:[%s172 + $0x60] sm:$0xff] %vm558, %v538
      %572 = vst.msk [vmem:[%s172 + $0x68] sm:$0xff] %vm558, %v539
      %573 = vst.msk [vmem:[%s172 + $0x70] sm:$0xff] %vm558, %v540
      %574 = vst.msk [vmem:[%s172 + $0x78] sm:$0xff] %vm558, %v541
      %575 = vst.msk [vmem:[%s172 + $0x80] sm:$0xff] %vm558, %v542
      %576 = vst.msk [vmem:[%s172 + $0x88] sm:$0xff] %vm558, %v543
      %577 = vst.msk [vmem:[%s172 + $0x90] sm:$0xff] %vm558, %v544
      %578 = vst.msk [vmem:[%s172 + $0x98] sm:$0xff] %vm558, %v545
      %579 = vst.msk [vmem:[%s172 + $0xa0] sm:$0xff] %vm558, %v546
      %580 = vst.msk [vmem:[%s172 + $0xa8] sm:$0xff] %vm558, %v547
      %581 = vst.msk [vmem:[%s172 + $0xb0] sm:$0xff] %vm558, %v548
      %582 = vst.msk [vmem:[%s172 + $0xb8] sm:$0xff] %vm558, %v549
      %583 = vst.msk [vmem:[%s172 + $0xc0] sm:$0xff] %vm558, %v550
      %584 = vst.msk [vmem:[%s172 + $0xc8] sm:$0xff] %vm558, %v551
      %585 = vst.msk [vmem:[%s172 + $0xd0] sm:$0xff] %vm558, %v552
      %586 = vst.msk [vmem:[%s172 + $0xd8] sm:$0xff] %vm558, %v553
      %587 = vst.msk [vmem:[%s172 + $0xe0] sm:$0xff] %vm558, %v554
      %588 = vst.msk [vmem:[%s172 + $0xe8] sm:$0xff] %vm558, %v555
      %589 = vst.msk [vmem:[%s172 + $0xf0] sm:$0xff] %vm558, %v556
      %590 = vst.msk [vmem:[%s172 + $0xf8] sm:$0xff] %vm558, %v557
      %s591 = smul.u32 32, %s14
      %p592 = scmp.lt.s32.totalorder %s591, 63
      %s593 = scalar_select %p592, %s591, 63
      %s594 = smul.addr %s593, 8
      %s595 = scalar_lea.vmem %s3, %s594
      // Predicated region
      $region33: #{tsm_resnet_encoder.7} parent=31 // pred_check
        %p596 = pneg %p100
      $region34: #{tsm_resnet_encoder.7} parent=31 // pred_check_branch
        %598 = sbr.rel (%p596) target = $region36
      $region35: #{tsm_resnet_encoder.7} parent=31 // pred_region
        %s599 = smul.u32 32, %s14
      $region36: #{tsm_resnet_encoder.7} parent=31 // pred_fallthru
        _
    $region32: #{tsm_resnet_encoder.7} parent=5 // pred_fallthru
      _
    %p600 = scmp.le.s32.totalorder 2, %s9
    // Predicated region
    $region37: #{tsm_resnet_encoder.7} parent=5 // pred_check
      %p601 = pneg %p600
    $region38: #{tsm_resnet_encoder.7} parent=5 // pred_check_branch
      %603 = sbr.rel (%p601) target = $region40
    $region39: #{tsm_resnet_encoder.7} parent=5 // pred_region
      %s604 = ssub.s32 %s9, 2
      // Predicated region
      $region41: #{tsm_resnet_encoder.7} parent=39 // pred_check
        %p605 = pneg %p106
      $region42: #{tsm_resnet_encoder.7} parent=39 // pred_check_branch
        %607 = sbr.rel (%p605) target = $region44
      $region43: #{tsm_resnet_encoder.7} parent=39 // pred_region
        %s608 = smul.u32 32, %s15
        %p609 = scmp.lt.s32.totalorder %s608, 63
        %s610 = scalar_select %p609, %s608, 63
        %s611 = smul.addr %s610, 8
        %s612 = scalar_lea.vmem %s3, %s611
      $region44: #{tsm_resnet_encoder.7} parent=39 // pred_fallthru
        _
    $region40: #{tsm_resnet_encoder.7} parent=5 // pred_fallthru
      _
  $region6: #{tsm_resnet_encoder.7} parent=0 // loop_footer
    %s13 = sadd.s32 1, %s9
  $region7: #{tsm_resnet_encoder.7} parent=0 // loop_footer_branch
    %8 = sbr.rel target = $region3
  $region8: #{tsm_resnet_encoder.7} parent=0 // loop_exit
    _

// kernel: tsm_resnet_encoder.8
$region0: #{tsm_resnet_encoder.8}
  #allocation0 [shape = 'u32[]', space=smem, size = 0x4, offset = 0x4, fixed_abs, tag = 'smem constant byte address 0x4 - core index']
  #allocation1 [shape = 'u32[144,128]{1,0:T(1,128)}', space=vmem, size = 0x12000, scoped, tag = 'internal scratch']
  %s0 = inlined_call_operand.vmem [shape: bf16[512,288], index: 0, kind: input, shape index: {}]
  %s1 = inlined_call_operand.vmem [shape: bf16[288,32], index: 1, kind: input, shape index: {}]
  %s2 = inlined_call_operand.vmem [shape: f32[1,32], index: 2, kind: input, shape index: {}]
  %s3 = inlined_call_operand.vmem [shape: f32[512,32], index: 3, kind: output, shape index: {}]
  %s4 = sld [smem:[#allocation0]]
  $region45: #{tsm_resnet_encoder.8} parent=0
    _
  %s6 = ssub.s32 1, %s4
  %s7 = scalar_select 0, %s6, %s4
  loop: start=0, step=1, limit=4
  $region2: #{tsm_resnet_encoder.8} parent=0 // loop_pre_header
    _
  $region3: #{tsm_resnet_encoder.8} parent=0 // loop_header
    %s9 = sphi 0, %s13
    %p10 = scmp.ge.s32.totalorder %s9, 4
    %s19 = sphi 0, %s21
    %s22 = sphi 0, %s19
    %s23 = sphi 0, %s22
    %s39 = sphi 0, %s23
    %s43 = sphi 0, %s43
    %s45 = sphi 0, %s43
    %s46 = sphi 0, %s45
    %s60 = sphi 0, %s46
    %s64 = sphi 0, %s64
    %s66 = sphi 0, %s64
    %s67 = sphi 0, %s66
    %s81 = sphi 0, %s67
    %s87 = sphi 0, %s89
    %s90 = sphi 0, %s87
    %s91 = sphi 0, %s90
    %s107 = sphi 0, %s91
  $region4: #{tsm_resnet_encoder.8} parent=0 // loop_header_branch
    %12 = sbr.rel (%p10) target = $region8
  $region5: #{tsm_resnet_encoder.8} parent=0 // loop_body
    %s14 = ssub.s32 %s9, 1
    %s15 = ssub.s32 %s9, 2
    %s16 = sadd.s32 %s9, 1
    %s17 = ssub.s32 %s9, %s16
    %p18 = scmp.eq.s32.totalorder %s17, 0
    %s20 = sadd.s32 %s19, 1
    %s21 = scalar_select %p18, %s19, %s20
    %p24 = pneg %p18
    %p25 = scmp.eq.s32.totalorder %s9, 1
    %p26 = por %p24, %p25
    %p27 = scmp.ne.s32.totalorder %s19, %s22
    %p28 = scmp.eq.s32.totalorder %s9, 0
    %p29 = por %p27, %p28
    %p30 = scmp.ne.s32.totalorder %s19, %s22
    %p31 = scmp.eq.s32.totalorder %s14, 1
    %p32 = por %p30, %p31
    %p33 = scmp.ne.s32.totalorder %s22, %s23
    %p34 = scmp.eq.s32.totalorder %s14, 0
    %p35 = por %p33, %p34
    %p36 = scmp.ne.s32.totalorder %s22, %s23
    %p37 = scmp.eq.s32.totalorder %s15, 1
    %p38 = por %p36, %p37
    %p40 = scmp.ne.s32.totalorder %s23, %s39
    %p41 = scmp.eq.s32.totalorder %s15, 0
    %p42 = por %p40, %p41
    %s44 = sadd.s32 %s43, 1
    %p47 = scmp.eq.s32.totalorder %s9, 1
    %p48 = scmp.ne.s32.totalorder %s43, %s45
    %p49 = scmp.eq.s32.totalorder %s9, 0
    %p50 = por %p48, %p49
    %p51 = scmp.ne.s32.totalorder %s43, %s45
    %p52 = scmp.eq.s32.totalorder %s14, 1
    %p53 = por %p51, %p52
    %p54 = scmp.ne.s32.totalorder %s45, %s46
    %p55 = scmp.eq.s32.totalorder %s14, 0
    %p56 = por %p54, %p55
    %p57 = scmp.ne.s32.totalorder %s45, %s46
    %p58 = scmp.eq.s32.totalorder %s15, 1
    %p59 = por %p57, %p58
    %p61 = scmp.ne.s32.totalorder %s46, %s60
    %p62 = scmp.eq.s32.totalorder %s15, 0
    %p63 = por %p61, %p62
    %s65 = sadd.s32 %s64, 1
    %p68 = scmp.eq.s32.totalorder %s9, 1
    %p69 = scmp.ne.s32.totalorder %s64, %s66
    %p70 = scmp.eq.s32.totalorder %s9, 0
    %p71 = por %p69, %p70
    %p72 = scmp.ne.s32.totalorder %s64, %s66
    %p73 = scmp.eq.s32.totalorder %s14, 1
    %p74 = por %p72, %p73
    %p75 = scmp.ne.s32.totalorder %s66, %s67
    %p76 = scmp.eq.s32.totalorder %s14, 0
    %p77 = por %p75, %p76
    %p78 = scmp.ne.s32.totalorder %s66, %s67
    %p79 = scmp.eq.s32.totalorder %s15, 1
    %p80 = por %p78, %p79
    %p82 = scmp.ne.s32.totalorder %s67, %s81
    %p83 = scmp.eq.s32.totalorder %s15, 0
    %p84 = por %p82, %p83
    %s85 = ssub.s32 %s9, %s16
    %p86 = scmp.eq.s32.totalorder %s85, 0
    %s88 = sadd.s32 %s87, 1
    %s89 = scalar_select %p86, %s87, %s88
    %p92 = pneg %p86
    %p93 = scmp.eq.s32.totalorder %s9, 1
    %p94 = por %p92, %p93
    %p95 = scmp.ne.s32.totalorder %s87, %s90
    %p96 = scmp.eq.s32.totalorder %s9, 0
    %p97 = por %p95, %p96
    %p98 = scmp.ne.s32.totalorder %s87, %s90
    %p99 = scmp.eq.s32.totalorder %s14, 1
    %p100 = por %p98, %p99
    %p101 = scmp.ne.s32.totalorder %s90, %s91
    %p102 = scmp.eq.s32.totalorder %s14, 0
    %p103 = por %p101, %p102
    %p104 = scmp.ne.s32.totalorder %s90, %s91
    %p105 = scmp.eq.s32.totalorder %s15, 1
    %p106 = por %p104, %p105
    %p108 = scmp.ne.s32.totalorder %s91, %s107
    %p109 = scmp.eq.s32.totalorder %s15, 0
    %p110 = por %p108, %p109
    %p111 = scmp.le.s32.totalorder 1, %s9
    %p112 = scmp.lt.s32.totalorder %s9, 3
    %p113 = pnand %p111, %p112
    %p114 = pneg %p113
    // Predicated region
    $region9: #{tsm_resnet_encoder.8} parent=5 // pred_check
      _
    $region10: #{tsm_resnet_encoder.8} parent=5 // pred_check_branch
      %116 = sbr.rel (%p113) target = $region12
    $region11: #{tsm_resnet_encoder.8} parent=5 // pred_region
      %s117 = ssub.s32 %s9, 1
      // Predicated region
      $region13: #{tsm_resnet_encoder.8} parent=11 // pred_check
        %p118 = pneg %p56
      $region14: #{tsm_resnet_encoder.8} parent=11 // pred_check_branch
        %120 = sbr.rel (%p118) target = $region16
      $region15: #{tsm_resnet_encoder.8} parent=11 // pred_region
        _
      $region16: #{tsm_resnet_encoder.8} parent=11 // pred_fallthru
        _
      // Predicated region
      $region17: #{tsm_resnet_encoder.8} parent=11 // pred_check
        %p121 = pneg %p77
      $region18: #{tsm_resnet_encoder.8} parent=11 // pred_check_branch
        %123 = sbr.rel (%p121) target = $region20
      $region19: #{tsm_resnet_encoder.8} parent=11 // pred_region
        _
      $region20: #{tsm_resnet_encoder.8} parent=11 // pred_fallthru
        _
    $region12: #{tsm_resnet_encoder.8} parent=5 // pred_fallthru
      _
    %p124 = scmp.lt.s32.totalorder %s9, 2
    // Predicated region
    $region21: #{tsm_resnet_encoder.8} parent=5 // pred_check
      %p125 = pneg %p124
    $region22: #{tsm_resnet_encoder.8} parent=5 // pred_check_branch
      %127 = sbr.rel (%p125) target = $region24
    $region23: #{tsm_resnet_encoder.8} parent=5 // pred_region
      // Predicated region
      $region25: #{tsm_resnet_encoder.8} parent=23 // pred_check
        %p128 = pneg %p29
      $region26: #{tsm_resnet_encoder.8} parent=23 // pred_check_branch
        %130 = sbr.rel (%p128) target = $region28
      $region27: #{tsm_resnet_encoder.8} parent=23 // pred_region
        %s131 = smul.u32 32, %s9
        %p132 = scmp.lt.s32.totalorder %s131, 63
        %s133 = scalar_select %p132, %s131, 63
        %s134 = smul.addr %s133, 3
        %s135 = smul.addr %s134, 4
        %s136 = scalar_lea.vmem %s0, %s135
        %s137 = smul.u32 32, %s9
      $region28: #{tsm_resnet_encoder.8} parent=23 // pred_fallthru
        _
    $region24: #{tsm_resnet_encoder.8} parent=5 // pred_fallthru
      _
    %p138 = scmp.le.s32.totalorder 1, %s9
    %p139 = scmp.lt.s32.totalorder %s9, 3
    %p140 = pnand %p138, %p139
    %p141 = pneg %p140
    // Predicated region
    $region29: #{tsm_resnet_encoder.8} parent=5 // pred_check
      _
    $region30: #{tsm_resnet_encoder.8} parent=5 // pred_check_branch
      %143 = sbr.rel (%p140) target = $region32
    $region31: #{tsm_resnet_encoder.8} parent=5 // pred_region
      %s144 = ssub.s32 %s9, 1
      %s145 = smul.u32 32, %s14
      %p146 = scmp.lt.s32.totalorder %s145, 63
      %s147 = scalar_select %p146, %s145, 63
      %s148 = smul.addr %s147, 3
      %s149 = smul.addr %s148, 4
      %s150 = scalar_lea.vmem %s0, %s149
      %p151 = pneg %p35
      %p152 = pneg %p32
      %p153 = pneg %p56
      %p154 = pneg %p53
      %p155 = pneg %p77
      %p156 = pneg %p74
      %p157 = pneg %p103
      %p158 = pneg %p100
      %s159 = smul.u32 32, %s14
      %p160 = scmp.lt.s32.totalorder %s159, 63
      %s161 = scalar_select %p160, %s159, 63
      %s162 = smul.addr %s161, 8
      %s163 = scalar_lea.vmem %s3, %s162
      %s164 = smul.u32 32, %s14
      %p165 = scmp.lt.s32.totalorder %s164, 63
      %s166 = scalar_select %p165, %s164, 63
      %s167 = smul.addr %s166, 3
      %s168 = smul.addr %s167, 4
      %s169 = scalar_lea.vmem %s0, %s168
      %s170 = smul.u32 32, %s14
      %s171 = smul.u32 32, %s14
      %p172 = scmp.lt.s32.totalorder %s171, 63
      %s173 = scalar_select %p172, %s171, 63
      %s174 = smul.addr %s173, 8
      %s175 = scalar_lea.vmem %s3, %s174
      %s176 = smul.u32 32, %s14
      %v178 = vld [vmem:[%s169] sm:$0xff]
      %v179 = vld [vmem:[%s169 + $0x8] sm:$0xf]
      %v180 = vld [vmem:[%s169 + $0xc] sm:$0xff]
      %v181 = vld [vmem:[%s169 + $0x14] sm:$0xf]
      %v182 = vld [vmem:[%s169 + $0x18] sm:$0xff]
      %v183 = vld [vmem:[%s169 + $0x20] sm:$0xf]
      %v184 = vld [vmem:[%s169 + $0x24] sm:$0xff]
      %v185 = vld [vmem:[%s169 + $0x2c] sm:$0xf]
      %v186 = vld [vmem:[%s169 + $0x30] sm:$0xff]
      %v187 = vld [vmem:[%s169 + $0x38] sm:$0xf]
      %v188 = vld [vmem:[%s169 + $0x3c] sm:$0xff]
      %v189 = vld [vmem:[%s169 + $0x44] sm:$0xf]
      %v190 = vld [vmem:[%s169 + $0x48] sm:$0xff]
      %v191 = vld [vmem:[%s169 + $0x50] sm:$0xf]
      %v192 = vld [vmem:[%s169 + $0x54] sm:$0xff]
      %v193 = vld [vmem:[%s169 + $0x5c] sm:$0xf]
      %v194 = vld [vmem:[%s169 + $0x60] sm:$0xff]
      %v195 = vld [vmem:[%s169 + $0x68] sm:$0xf]
      %v196 = vld [vmem:[%s169 + $0x6c] sm:$0xff]
      %v197 = vld [vmem:[%s169 + $0x74] sm:$0xf]
      %v198 = vld [vmem:[%s169 + $0x78] sm:$0xff]
      %v199 = vld [vmem:[%s169 + $0x80] sm:$0xf]
      %v200 = vld [vmem:[%s169 + $0x84] sm:$0xff]
      %v201 = vld [vmem:[%s169 + $0x8c] sm:$0xf]
      %v202 = vld [vmem:[%s169 + $0x90] sm:$0xff]
      %v203 = vld [vmem:[%s169 + $0x98] sm:$0xf]
      %v204 = vld [vmem:[%s169 + $0x9c] sm:$0xff]
      %v205 = vld [vmem:[%s169 + $0xa4] sm:$0xf]
      %v206 = vld [vmem:[%s169 + $0xa8] sm:$0xff]
      %v207 = vld [vmem:[%s169 + $0xb0] sm:$0xf]
      %v208 = vld [vmem:[%s169 + $0xb4] sm:$0xff]
      %v209 = vld [vmem:[%s169 + $0xbc] sm:$0xf]
      %v210 = vld [vmem:[%s169 + $0xc0] sm:$0xff]
      %v211 = vld [vmem:[%s169 + $0xc8] sm:$0xf]
      %v212 = vld [vmem:[%s169 + $0xcc] sm:$0xff]
      %v213 = vld [vmem:[%s169 + $0xd4] sm:$0xf]
      %v214 = vld [vmem:[%s169 + $0xd8] sm:$0xff]
      %v215 = vld [vmem:[%s169 + $0xe0] sm:$0xf]
      %v216 = vld [vmem:[%s169 + $0xe4] sm:$0xff]
      %v217 = vld [vmem:[%s169 + $0xec] sm:$0xf]
      %v218 = vld [vmem:[%s169 + $0xf0] sm:$0xff]
      %v219 = vld [vmem:[%s169 + $0xf8] sm:$0xf]
      %v220 = vld [vmem:[%s169 + $0xfc] sm:$0xff]
      %v221 = vld [vmem:[%s169 + $0x104] sm:$0xf]
      %v222 = vld [vmem:[%s169 + $0x108] sm:$0xff]
      %v223 = vld [vmem:[%s169 + $0x110] sm:$0xf]
      %v224 = vld [vmem:[%s169 + $0x114] sm:$0xff]
      %v225 = vld [vmem:[%s169 + $0x11c] sm:$0xf]
      %v226 = vld [vmem:[%s169 + $0x120] sm:$0xff]
      %v227 = vld [vmem:[%s169 + $0x128] sm:$0xf]
      %v228 = vld [vmem:[%s169 + $0x12c] sm:$0xff]
      %v229 = vld [vmem:[%s169 + $0x134] sm:$0xf]
      %v230 = vld [vmem:[%s169 + $0x138] sm:$0xff]
      %v231 = vld [vmem:[%s169 + $0x140] sm:$0xf]
      %v232 = vld [vmem:[%s169 + $0x144] sm:$0xff]
      %v233 = vld [vmem:[%s169 + $0x14c] sm:$0xf]
      %v234 = vld [vmem:[%s169 + $0x150] sm:$0xff]
      %v235 = vld [vmem:[%s169 + $0x158] sm:$0xf]
      %v236 = vld [vmem:[%s169 + $0x15c] sm:$0xff]
      %v237 = vld [vmem:[%s169 + $0x164] sm:$0xf]
      %v238 = vld [vmem:[%s169 + $0x168] sm:$0xff]
      %v239 = vld [vmem:[%s169 + $0x170] sm:$0xf]
      %v240 = vld [vmem:[%s169 + $0x174] sm:$0xff]
      %v241 = vld [vmem:[%s169 + $0x17c] sm:$0xf]
      %v242 = vld [vmem:[%s1] sm:$0xf]
      %v243 = vld [vmem:[%s1 + $0x4] sm:$0xf]
      %v244 = vld [vmem:[%s1 + $0x8] sm:$0xf]
      %v245 = vld [vmem:[%s1 + $0xc] sm:$0xf]
      %v246 = vld [vmem:[%s1 + $0x10] sm:$0xf]
      %v247 = vld [vmem:[%s1 + $0x14] sm:$0xf]
      %v248 = vld [vmem:[%s1 + $0x18] sm:$0xf]
      %v249 = vld [vmem:[%s1 + $0x1c] sm:$0xf]
      %v250 = vld [vmem:[%s1 + $0x20] sm:$0xf]
      %v251 = vld [vmem:[%s1 + $0x24] sm:$0xf]
      %v252 = vld [vmem:[%s1 + $0x28] sm:$0xf]
      %v253 = vld [vmem:[%s1 + $0x2c] sm:$0xf]
      %v254 = vld [vmem:[%s1 + $0x30] sm:$0xf]
      %v255 = vld [vmem:[%s1 + $0x34] sm:$0xf]
      %v256 = vld [vmem:[%s1 + $0x38] sm:$0xf]
      %v257 = vld [vmem:[%s1 + $0x3c] sm:$0xf]
      %v258 = vld [vmem:[%s1 + $0x40] sm:$0xf]
      %v259 = vld [vmem:[%s1 + $0x44] sm:$0xf]
      %v260 = vld [vmem:[%s1 + $0x48] sm:$0xf]
      %v261 = vld [vmem:[%s1 + $0x4c] sm:$0xf]
      %v262 = vld [vmem:[%s1 + $0x50] sm:$0xf]
      %v263 = vld [vmem:[%s1 + $0x54] sm:$0xf]
      %v264 = vld [vmem:[%s1 + $0x58] sm:$0xf]
      %v265 = vld [vmem:[%s1 + $0x5c] sm:$0xf]
      %v266 = vld [vmem:[%s1 + $0x60] sm:$0xf]
      %v267 = vld [vmem:[%s1 + $0x64] sm:$0xf]
      %v268 = vld [vmem:[%s1 + $0x68] sm:$0xf]
      %v269 = vld [vmem:[%s1 + $0x6c] sm:$0xf]
      %v270 = vld [vmem:[%s1 + $0x70] sm:$0xf]
      %v271 = vld [vmem:[%s1 + $0x74] sm:$0xf]
      %v272 = vld [vmem:[%s1 + $0x78] sm:$0xf]
      %v273 = vld [vmem:[%s1 + $0x7c] sm:$0xf]
      %v274 = vld [vmem:[%s1 + $0x80] sm:$0xf]
      %v275 = vld [vmem:[%s1 + $0x84] sm:$0xf]
      %v276 = vld [vmem:[%s1 + $0x88] sm:$0xf]
      %v277 = vld [vmem:[%s1 + $0x8c] sm:$0xf]
      %v278 = vld [vmem:[%s2] sm:$0x1]
      %v280 = vlaneseq
      %v281 = vshrl.u32 %v280, 7
      %v282 = vsub.s32 0, %v281
      %v283 = vrot.slane %v278, %v282
      %v349 = vunpack.c.l.b16 %v178
      %v350 = vunpack.c.h.b16 %v178
      %v351 = vunpack.c.l.b16 %v179
      %v352 = vunpack.c.l.b16 %v180
      %v353 = vunpack.c.h.b16 %v180
      %v354 = vunpack.c.l.b16 %v181
      %v355 = vunpack.c.l.b16 %v182
      %v356 = vunpack.c.h.b16 %v182
      %v357 = vunpack.c.l.b16 %v183
      %v358 = vunpack.c.l.b16 %v184
      %v359 = vunpack.c.h.b16 %v184
      %v360 = vunpack.c.l.b16 %v185
      %v361 = vunpack.c.l.b16 %v186
      %v362 = vunpack.c.h.b16 %v186
      %v363 = vunpack.c.l.b16 %v187
      %v364 = vunpack.c.l.b16 %v188
      %v365 = vunpack.c.h.b16 %v188
      %v366 = vunpack.c.l.b16 %v189
      %v367 = vunpack.c.l.b16 %v190
      %v368 = vunpack.c.h.b16 %v190
      %v369 = vunpack.c.l.b16 %v191
      %v370 = vunpack.c.l.b16 %v192
      %v371 = vunpack.c.h.b16 %v192
      %v372 = vunpack.c.l.b16 %v193
      %v373 = vunpack.c.l.b16 %v194
      %v374 = vunpack.c.h.b16 %v194
      %v375 = vunpack.c.l.b16 %v195
      %v376 = vunpack.c.l.b16 %v196
      %v377 = vunpack.c.h.b16 %v196
      %v378 = vunpack.c.l.b16 %v197
      %v379 = vunpack.c.l.b16 %v198
      %v380 = vunpack.c.h.b16 %v198
      %v381 = vunpack.c.l.b16 %v199
      %v382 = vunpack.c.l.b16 %v200
      %v383 = vunpack.c.h.b16 %v200
      %v384 = vunpack.c.l.b16 %v201
      %v385 = vunpack.c.l.b16 %v202
      %v386 = vunpack.c.h.b16 %v202
      %v387 = vunpack.c.l.b16 %v203
      %v388 = vunpack.c.l.b16 %v204
      %v389 = vunpack.c.h.b16 %v204
      %v390 = vunpack.c.l.b16 %v205
      %v391 = vunpack.c.l.b16 %v206
      %v392 = vunpack.c.h.b16 %v206
      %v393 = vunpack.c.l.b16 %v207
      %v394 = vunpack.c.l.b16 %v208
      %v395 = vunpack.c.h.b16 %v208
      %v396 = vunpack.c.l.b16 %v209
      %v397 = vunpack.c.l.b16 %v210
      %v398 = vunpack.c.h.b16 %v210
      %v399 = vunpack.c.l.b16 %v211
      %v400 = vunpack.c.l.b16 %v212
      %v401 = vunpack.c.h.b16 %v212
      %v402 = vunpack.c.l.b16 %v213
      %v403 = vunpack.c.l.b16 %v214
      %v404 = vunpack.c.h.b16 %v214
      %v405 = vunpack.c.l.b16 %v215
      %v406 = vunpack.c.l.b16 %v216
      %v407 = vunpack.c.h.b16 %v216
      %v408 = vunpack.c.l.b16 %v217
      %v409 = vunpack.c.l.b16 %v218
      %v410 = vunpack.c.h.b16 %v218
      %v411 = vunpack.c.l.b16 %v219
      %v412 = vunpack.c.l.b16 %v220
      %v413 = vunpack.c.h.b16 %v220
      %v414 = vunpack.c.l.b16 %v221
      %v415 = vunpack.c.l.b16 %v222
      %v416 = vunpack.c.h.b16 %v222
      %v417 = vunpack.c.l.b16 %v223
      %v418 = vunpack.c.l.b16 %v224
      %v419 = vunpack.c.h.b16 %v224
      %v420 = vunpack.c.l.b16 %v225
      %v421 = vunpack.c.l.b16 %v226
      %v422 = vunpack.c.h.b16 %v226
      %v423 = vunpack.c.l.b16 %v227
      %v424 = vunpack.c.l.b16 %v228
      %v425 = vunpack.c.h.b16 %v228
      %v426 = vunpack.c.l.b16 %v229
      %v427 = vunpack.c.l.b16 %v230
      %v428 = vunpack.c.h.b16 %v230
      %v429 = vunpack.c.l.b16 %v231
      %v430 = vunpack.c.l.b16 %v232
      %v431 = vunpack.c.h.b16 %v232
      %v432 = vunpack.c.l.b16 %v233
      %v433 = vunpack.c.l.b16 %v234
      %v434 = vunpack.c.h.b16 %v234
      %v435 = vunpack.c.l.b16 %v235
      %v436 = vunpack.c.l.b16 %v236
      %v437 = vunpack.c.h.b16 %v236
      %v438 = vunpack.c.l.b16 %v237
      %v439 = vunpack.c.l.b16 %v238
      %v440 = vunpack.c.h.b16 %v238
      %v441 = vunpack.c.l.b16 %v239
      %v442 = vunpack.c.l.b16 %v240
      %v443 = vunpack.c.h.b16 %v240
      %v444 = vunpack.c.l.b16 %v241
      %v445 = vpack.c.b16 %v352, %v349
      %v446 = vpack.c.b16 %v353, %v350
      %v447 = vpack.c.b16 %v354, %v351
      %v448 = vpack.c.b16 %v358, %v355
      %v449 = vpack.c.b16 %v359, %v356
      %v450 = vpack.c.b16 %v360, %v357
      %v451 = vpack.c.b16 %v364, %v361
      %v452 = vpack.c.b16 %v365, %v362
      %v453 = vpack.c.b16 %v366, %v363
      %v454 = vpack.c.b16 %v370, %v367
      %v455 = vpack.c.b16 %v371, %v368
      %v456 = vpack.c.b16 %v372, %v369
      %v457 = vpack.c.b16 %v376, %v373
      %v458 = vpack.c.b16 %v377, %v374
      %v459 = vpack.c.b16 %v378, %v375
      %v460 = vpack.c.b16 %v382, %v379
      %v461 = vpack.c.b16 %v383, %v380
      %v462 = vpack.c.b16 %v384, %v381
      %v463 = vpack.c.b16 %v388, %v385
      %v464 = vpack.c.b16 %v389, %v386
      %v465 = vpack.c.b16 %v390, %v387
      %v466 = vpack.c.b16 %v394, %v391
      %v467 = vpack.c.b16 %v395, %v392
      %v468 = vpack.c.b16 %v396, %v393
      %v469 = vpack.c.b16 %v400, %v397
      %v470 = vpack.c.b16 %v401, %v398
      %v471 = vpack.c.b16 %v402, %v399
      %v472 = vpack.c.b16 %v406, %v403
      %v473 = vpack.c.b16 %v407, %v404
      %v474 = vpack.c.b16 %v408, %v405
      %v475 = vpack.c.b16 %v412, %v409
      %v476 = vpack.c.b16 %v413, %v410
      %v477 = vpack.c.b16 %v414, %v411
      %v478 = vpack.c.b16 %v418, %v415
      %v479 = vpack.c.b16 %v419, %v416
      %v480 = vpack.c.b16 %v420, %v417
      %v481 = vpack.c.b16 %v424, %v421
      %v482 = vpack.c.b16 %v425, %v422
      %v483 = vpack.c.b16 %v426, %v423
      %v484 = vpack.c.b16 %v430, %v427
      %v485 = vpack.c.b16 %v431, %v428
      %v486 = vpack.c.b16 %v432, %v429
      %v487 = vpack.c.b16 %v436, %v433
      %v488 = vpack.c.b16 %v437, %v434
      %v489 = vpack.c.b16 %v438, %v435
      %v490 = vpack.c.b16 %v442, %v439
      %v491 = vpack.c.b16 %v443, %v440
      %v492 = vpack.c.b16 %v444, %v441
      %v561 = vunpack.c.l.b16 %v242
      %v562 = vunpack.c.l.b16 %v243
      %v563 = vunpack.c.l.b16 %v244
      %v564 = vunpack.c.l.b16 %v245
      %v565 = vunpack.c.l.b16 %v246
      %v566 = vunpack.c.l.b16 %v247
      %v567 = vunpack.c.l.b16 %v248
      %v568 = vunpack.c.l.b16 %v249
      %v569 = vunpack.c.l.b16 %v250
      %v570 = vunpack.c.l.b16 %v251
      %v571 = vunpack.c.l.b16 %v252
      %v572 = vunpack.c.l.b16 %v253
      %v573 = vunpack.c.l.b16 %v254
      %v574 = vunpack.c.l.b16 %v255
      %v575 = vunpack.c.l.b16 %v256
      %v576 = vunpack.c.l.b16 %v257
      %v577 = vunpack.c.l.b16 %v258
      %v578 = vunpack.c.l.b16 %v259
      %v579 = vunpack.c.l.b16 %v260
      %v580 = vunpack.c.l.b16 %v261
      %v581 = vunpack.c.l.b16 %v262
      %v582 = vunpack.c.l.b16 %v263
      %v583 = vunpack.c.l.b16 %v264
      %v584 = vunpack.c.l.b16 %v265
      %v585 = vunpack.c.l.b16 %v266
      %v586 = vunpack.c.l.b16 %v267
      %v587 = vunpack.c.l.b16 %v268
      %v588 = vunpack.c.l.b16 %v269
      %v589 = vunpack.c.l.b16 %v270
      %v590 = vunpack.c.l.b16 %v271
      %v591 = vunpack.c.l.b16 %v272
      %v592 = vunpack.c.l.b16 %v273
      %v593 = vunpack.c.l.b16 %v274
      %v594 = vunpack.c.l.b16 %v275
      %v595 = vunpack.c.l.b16 %v276
      %v596 = vunpack.c.l.b16 %v277
      %v597 = vpack.c.b16 %v562, %v561
      %v598 = vpack.c.b16 %v564, %v563
      %v599 = vpack.c.b16 %v566, %v565
      %v600 = vpack.c.b16 %v568, %v567
      %v601 = vpack.c.b16 %v570, %v569
      %v602 = vpack.c.b16 %v572, %v571
      %v603 = vpack.c.b16 %v574, %v573
      %v604 = vpack.c.b16 %v576, %v575
      %v605 = vpack.c.b16 %v578, %v577
      %v606 = vpack.c.b16 %v580, %v579
      %v607 = vpack.c.b16 %v582, %v581
      %v608 = vpack.c.b16 %v584, %v583
      %v609 = vpack.c.b16 %v586, %v585
      %v610 = vpack.c.b16 %v588, %v587
      %v611 = vpack.c.b16 %v590, %v589
      %v612 = vpack.c.b16 %v592, %v591
      %v613 = vpack.c.b16 %v594, %v593
      %v614 = vpack.c.b16 %v596, %v595
      %vm633 = vcmask 261120
      %v635 = vsel %vm633, %v447, 0
      %v638 = vsel %vm633, %v450, 0
      %v641 = vsel %vm633, %v453, 0
      %v644 = vsel %vm633, %v456, 0
      %v647 = vsel %vm633, %v459, 0
      %v650 = vsel %vm633, %v462, 0
      %v653 = vsel %vm633, %v465, 0
      %v656 = vsel %vm633, %v468, 0
      %v659 = vsel %vm633, %v471, 0
      %v662 = vsel %vm633, %v474, 0
      %v665 = vsel %vm633, %v477, 0
      %v668 = vsel %vm633, %v480, 0
      %v671 = vsel %vm633, %v483, 0
      %v674 = vsel %vm633, %v486, 0
      %v677 = vsel %vm633, %v489, 0
      %v680 = vsel %vm633, %v492, 0
      %682 = vmatprep.subr.bf16.mxu0 0
      %683 = vmatpush1.bf16.msra.mxu0 %v597
      %684 = vmatprep.subr.bf16.mxu0 0
      %685 = vmatpush1.bf16.msra.mxu0 %v598
      %686 = vmatprep.subr.bf16.mxu0 0
      %687 = vmatpush1.bf16.msra.mxu0 %v599
      %688 = vmatprep.subr.bf16.mxu0 0
      %689 = vmatpush1.bf16.msra.mxu0 %v600
      %690 = vmatprep.subr.bf16.mxu0 0
      %691 = vmatpush1.bf16.msra.mxu0 %v601
      %692 = vmatprep.subr.bf16.mxu0 0
      %693 = vmatpush1.bf16.msra.mxu0 %v602
      %694 = vmatprep.subr.bf16.mxu0 0
      %695 = vmatpush1.bf16.msra.mxu0 %v603
      %696 = vmatprep.subr.bf16.mxu0 0
      %697 = vmatpush1.bf16.msra.mxu0 %v604
      %698 = vmatprep.subr.bf16.mxu0 0
      %699 = vmatpush1.bf16.msra.mxu0 %v605
      %700 = vmatprep.subr.bf16.mxu0 0
      %701 = vmatpush1.bf16.msra.mxu0 %v606
      %702 = vmatprep.subr.bf16.mxu0 0
      %703 = vmatpush1.bf16.msra.mxu0 %v607
      %704 = vmatprep.subr.bf16.mxu0 0
      %705 = vmatpush1.bf16.msra.mxu0 %v608
      %706 = vmatprep.subr.bf16.mxu0 0
      %707 = vmatpush1.bf16.msra.mxu0 %v609
      %708 = vmatprep.subr.bf16.mxu0 0
      %709 = vmatpush1.bf16.msra.mxu0 %v610
      %710 = vmatprep.subr.bf16.mxu0 0
      %711 = vmatpush1.bf16.msra.mxu0 %v611
      %712 = vmatprep.subr.bf16.mxu0 0
      %713 = vmatpush1.bf16.msra.mxu0 %v612
      %714 = vmatprep.mubr.bf16.mxu0 %v446
      %715 = vmatmul.mubr.bf16.gmra.mrb[0].mxu0 %v445
      %v716 = vpop.f32.mrb[0].mxu0
      %v717 = vadd.f32 %v283, %v716
      %v718 = vpop.f32.mrb[0].mxu0
      %v719 = vpop.f32.mrb[0].mxu0
      %v720 = vadd.f32 %v283, %v719
      %v721 = vpop.f32.mrb[0].mxu0
      %722 = vmatprep.mubr.bf16.mxu0 %v449
      %723 = vmatmul.mubr.bf16.gmra.mrb[0].mxu0 %v448
      %v724 = vpop.f32.mrb[0].mxu0
      %v725 = vadd.f32 %v283, %v724
      %v726 = vpop.f32.mrb[0].mxu0
      %v727 = vpop.f32.mrb[0].mxu0
      %v728 = vadd.f32 %v283, %v727
      %v729 = vpop.f32.mrb[0].mxu0
      %730 = vmatprep.mubr.bf16.mxu0 %v452
      %731 = vmatmul.mubr.bf16.gmra.mrb[0].mxu0 %v451
      %v732 = vpop.f32.mrb[0].mxu0
      %v733 = vadd.f32 %v283, %v732
      %v734 = vpop.f32.mrb[0].mxu0
      %v735 = vpop.f32.mrb[0].mxu0
      %v736 = vadd.f32 %v283, %v735
      %v737 = vpop.f32.mrb[0].mxu0
      %738 = vmatprep.mubr.bf16.mxu0 %v455
      %739 = vmatmul.mubr.bf16.gmra.mrb[0].mxu0 %v454
      %v740 = vpop.f32.mrb[0].mxu0
      %v741 = vadd.f32 %v283, %v740
      %v742 = vpop.f32.mrb[0].mxu0
      %v743 = vpop.f32.mrb[0].mxu0
      %v744 = vadd.f32 %v283, %v743
      %v745 = vpop.f32.mrb[0].mxu0
      %746 = vmatprep.mubr.bf16.mxu0 %v458
      %747 = vmatmul.mubr.bf16.gmra.mrb[0].mxu0 %v457
      %v748 = vpop.f32.mrb[0].mxu0
      %v749 = vadd.f32 %v283, %v748
      %v750 = vpop.f32.mrb[0].mxu0
      %v751 = vpop.f32.mrb[0].mxu0
      %v752 = vadd.f32 %v283, %v751
      %v753 = vpop.f32.mrb[0].mxu0
      %754 = vmatprep.mubr.bf16.mxu0 %v461
      %755 = vmatmul.mubr.bf16.gmra.mrb[0].mxu0 %v460
      %v756 = vpop.f32.mrb[0].mxu0
      %v757 = vadd.f32 %v283, %v756
      %v758 = vpop.f32.mrb[0].mxu0
      %v759 = vpop.f32.mrb[0].mxu0
      %v760 = vadd.f32 %v283, %v759
      %v761 = vpop.f32.mrb[0].mxu0
      %762 = vmatprep.mubr.bf16.mxu0 %v464
      %763 = vmatmul.mubr.bf16.gmra.mrb[0].mxu0 %v463
      %v764 = vpop.f32.mrb[0].mxu0
      %v765 = vadd.f32 %v283, %v764
      %v766 = vpop.f32.mrb[0].mxu0
      %v767 = vpop.f32.mrb[0].mxu0
      %v768 = vadd.f32 %v283, %v767
      %v769 = vpop.f32.mrb[0].mxu0
      %770 = vmatprep.mubr.bf16.mxu0 %v467
      %771 = vmatmul.mubr.bf16.gmra.mrb[0].mxu0 %v466
      %v772 = vpop.f32.mrb[0].mxu0
      %v773 = vadd.f32 %v283, %v772
      %v774 = vpop.f32.mrb[0].mxu0
      %v775 = vpop.f32.mrb[0].mxu0
      %v776 = vadd.f32 %v283, %v775
      %v777 = vpop.f32.mrb[0].mxu0
      %778 = vmatprep.mubr.bf16.mxu0 %v470
      %779 = vmatmul.mubr.bf16.gmra.mrb[0].mxu0 %v469
      %v780 = vpop.f32.mrb[0].mxu0
      %v781 = vadd.f32 %v283, %v780
      %v782 = vpop.f32.mrb[0].mxu0
      %v783 = vpop.f32.mrb[0].mxu0
      %v784 = vadd.f32 %v283, %v783
      %v785 = vpop.f32.mrb[0].mxu0
      %786 = vmatprep.mubr.bf16.mxu0 %v473
      %787 = vmatmul.mubr.bf16.gmra.mrb[0].mxu0 %v472
      %v788 = vpop.f32.mrb[0].mxu0
      %v789 = vadd.f32 %v283, %v788
      %v790 = vpop.f32.mrb[0].mxu0
      %v791 = vpop.f32.mrb[0].mxu0
      %v792 = vadd.f32 %v283, %v791
      %v793 = vpop.f32.mrb[0].mxu0
      %794 = vmatprep.mubr.bf16.mxu0 %v476
      %795 = vmatmul.mubr.bf16.gmra.mrb[0].mxu0 %v475
      %v796 = vpop.f32.mrb[0].mxu0
      %v797 = vadd.f32 %v283, %v796
      %v798 = vpop.f32.mrb[0].mxu0
      %v799 = vpop.f32.mrb[0].mxu0
      %v800 = vadd.f32 %v283, %v799
      %v801 = vpop.f32.mrb[0].mxu0
      %802 = vmatprep.mubr.bf16.mxu0 %v479
      %803 = vmatmul.mubr.bf16.gmra.mrb[0].mxu0 %v478
      %v804 = vpop.f32.mrb[0].mxu0
      %v805 = vadd.f32 %v283, %v804
      %v806 = vpop.f32.mrb[0].mxu0
      %v807 = vpop.f32.mrb[0].mxu0
      %v808 = vadd.f32 %v283, %v807
      %v809 = vpop.f32.mrb[0].mxu0
      %810 = vmatprep.mubr.bf16.mxu0 %v482
      %811 = vmatmul.mubr.bf16.gmra.mrb[0].mxu0 %v481
      %v812 = vpop.f32.mrb[0].mxu0
      %v813 = vadd.f32 %v283, %v812
      %v814 = vpop.f32.mrb[0].mxu0
      %v815 = vpop.f32.mrb[0].mxu0
      %v816 = vadd.f32 %v283, %v815
      %v817 = vpop.f32.mrb[0].mxu0
      %818 = vmatprep.mubr.bf16.mxu0 %v485
      %819 = vmatmul.mubr.bf16.gmra.mrb[0].mxu0 %v484
      %v820 = vpop.f32.mrb[0].mxu0
      %v821 = vadd.f32 %v283, %v820
      %v822 = vpop.f32.mrb[0].mxu0
      %v823 = vpop.f32.mrb[0].mxu0
      %v824 = vadd.f32 %v283, %v823
      %v825 = vpop.f32.mrb[0].mxu0
      %826 = vmatprep.mubr.bf16.mxu0 %v488
      %827 = vmatmul.mubr.bf16.gmra.mrb[0].mxu0 %v487
      %v828 = vpop.f32.mrb[0].mxu0
      %v829 = vadd.f32 %v283, %v828
      %v830 = vpop.f32.mrb[0].mxu0
      %v831 = vpop.f32.mrb[0].mxu0
      %v832 = vadd.f32 %v283, %v831
      %v833 = vpop.f32.mrb[0].mxu0
      %834 = vmatprep.mubr.bf16.mxu0 %v491
      %835 = vmatmul.mubr.bf16.gmra.mrb[0].mxu0 %v490
      %v836 = vpop.f32.mrb[0].mxu0
      %v837 = vadd.f32 %v283, %v836
      %v838 = vpop.f32.mrb[0].mxu0
      %v839 = vpop.f32.mrb[0].mxu0
      %v840 = vadd.f32 %v283, %v839
      %v841 = vpop.f32.mrb[0].mxu0
      %842 = vdwg.mxu0
      %843 = vmatprep.subr.bf16.mxu0 0
      %844 = vmatpush1.bf16.msra.mxu0 %v613
      %845 = vmatprep.subr.bf16.mxu0 0
      %846 = vmatpush1.bf16.msra.mxu0 %v614
      %847 = vmatprep.subr.bf16.mxu0 0
      %848 = vmatpush1.bf16.msra.mxu0 0
      %849 = vmatprep.subr.bf16.mxu0 0
      %850 = vmatpush1.bf16.msra.mxu0 0
      %851 = vmatprep.subr.bf16.mxu0 0
      %852 = vmatpush1.bf16.msra.mxu0 0
      %853 = vmatprep.subr.bf16.mxu0 0
      %854 = vmatpush1.bf16.msra.mxu0 0
      %855 = vmatprep.subr.bf16.mxu0 0
      %856 = vmatpush1.bf16.msra.mxu0 0
      %857 = vmatprep.subr.bf16.mxu0 0
      %858 = vmatpush1.bf16.msra.mxu0 0
      %859 = vmatprep.subr.bf16.mxu0 0
      %860 = vmatpush1.bf16.msra.mxu0 0
      %861 = vmatprep.subr.bf16.mxu0 0
      %862 = vmatpush1.bf16.msra.mxu0 0
      %863 = vmatprep.subr.bf16.mxu0 0
      %864 = vmatpush1.bf16.msra.mxu0 0
      %865 = vmatprep.subr.bf16.mxu0 0
      %866 = vmatpush1.bf16.msra.mxu0 0
      %867 = vmatprep.subr.bf16.mxu0 0
      %868 = vmatpush1.bf16.msra.mxu0 0
      %869 = vmatprep.subr.bf16.mxu0 0
      %870 = vmatpush1.bf16.msra.mxu0 0
      %871 = vmatprep.subr.bf16.mxu0 0
      %872 = vmatpush1.bf16.msra.mxu0 0
      %873 = vmatprep.subr.bf16.mxu0 0
      %874 = vmatpush1.bf16.msra.mxu0 0
      %875 = vmatprep.mubr.bf16.mxu0 0
      %876 = vmatmul.mubr.bf16.gmra.mrb[0].mxu0 %v635
      %v877 = vpop.f32.mrb[0].mxu0
      %v878 = vadd.f32 %v717, %v877
      %v879 = vpop.f32.mrb[0].mxu0
      %v880 = vpop.f32.mrb[0].mxu0
      %v881 = vadd.f32 %v720, %v880
      %v882 = vpop.f32.mrb[0].mxu0
      %883 = vmatprep.mubr.bf16.mxu0 0
      %884 = vmatmul.mubr.bf16.gmra.mrb[0].mxu0 %v638
      %v885 = vpop.f32.mrb[0].mxu0
      %v886 = vadd.f32 %v725, %v885
      %v887 = vpop.f32.mrb[0].mxu0
      %v888 = vpop.f32.mrb[0].mxu0
      %v889 = vadd.f32 %v728, %v888
      %v890 = vpop.f32.mrb[0].mxu0
      %891 = vmatprep.mubr.bf16.mxu0 0
      %892 = vmatmul.mubr.bf16.gmra.mrb[0].mxu0 %v641
      %v893 = vpop.f32.mrb[0].mxu0
      %v894 = vadd.f32 %v733, %v893
      %v895 = vpop.f32.mrb[0].mxu0
      %v896 = vpop.f32.mrb[0].mxu0
      %v897 = vadd.f32 %v736, %v896
      %v898 = vpop.f32.mrb[0].mxu0
      %899 = vmatprep.mubr.bf16.mxu0 0
      %900 = vmatmul.mubr.bf16.gmra.mrb[0].mxu0 %v644
      %v901 = vpop.f32.mrb[0].mxu0
      %v902 = vadd.f32 %v741, %v901
      %v903 = vpop.f32.mrb[0].mxu0
      %v904 = vpop.f32.mrb[0].mxu0
      %v905 = vadd.f32 %v744, %v904
      %v906 = vpop.f32.mrb[0].mxu0
      %907 = vmatprep.mubr.bf16.mxu0 0
      %908 = vmatmul.mubr.bf16.gmra.mrb[0].mxu0 %v647
      %v909 = vpop.f32.mrb[0].mxu0
      %v910 = vadd.f32 %v749, %v909
      %v911 = vpop.f32.mrb[0].mxu0
      %v912 = vpop.f32.mrb[0].mxu0
      %v913 = vadd.f32 %v752, %v912
      %v914 = vpop.f32.mrb[0].mxu0
      %915 = vmatprep.mubr.bf16.mxu0 0
      %916 = vmatmul.mubr.bf16.gmra.mrb[0].mxu0 %v650
      %v917 = vpop.f32.mrb[0].mxu0
      %v918 = vadd.f32 %v757, %v917
      %v919 = vpop.f32.mrb[0].mxu0
      %v920 = vpop.f32.mrb[0].mxu0
      %v921 = vadd.f32 %v760, %v920
      %v922 = vpop.f32.mrb[0].mxu0
      %923 = vmatprep.mubr.bf16.mxu0 0
      %924 = vmatmul.mubr.bf16.gmra.mrb[0].mxu0 %v653
      %v925 = vpop.f32.mrb[0].mxu0
      %v926 = vadd.f32 %v765, %v925
      %v927 = vpop.f32.mrb[0].mxu0
      %v928 = vpop.f32.mrb[0].mxu0
      %v929 = vadd.f32 %v768, %v928
      %v930 = vpop.f32.mrb[0].mxu0
      %931 = vmatprep.mubr.bf16.mxu0 0
      %932 = vmatmul.mubr.bf16.gmra.mrb[0].mxu0 %v656
      %v933 = vpop.f32.mrb[0].mxu0
      %v934 = vadd.f32 %v773, %v933
      %v935 = vpop.f32.mrb[0].mxu0
      %v936 = vpop.f32.mrb[0].mxu0
      %v937 = vadd.f32 %v776, %v936
      %v938 = vpop.f32.mrb[0].mxu0
      %939 = vmatprep.mubr.bf16.mxu0 0
      %940 = vmatmul.mubr.bf16.gmra.mrb[0].mxu0 %v659
      %v941 = vpop.f32.mrb[0].mxu0
      %v942 = vadd.f32 %v781, %v941
      %v943 = vpop.f32.mrb[0].mxu0
      %v944 = vpop.f32.mrb[0].mxu0
      %v945 = vadd.f32 %v784, %v944
      %v946 = vpop.f32.mrb[0].mxu0
      %947 = vmatprep.mubr.bf16.mxu0 0
      %948 = vmatmul.mubr.bf16.gmra.mrb[0].mxu0 %v662
      %v949 = vpop.f32.mrb[0].mxu0
      %v950 = vadd.f32 %v789, %v949
      %v951 = vpop.f32.mrb[0].mxu0
      %v952 = vpop.f32.mrb[0].mxu0
      %v953 = vadd.f32 %v792, %v952
      %v954 = vpop.f32.mrb[0].mxu0
      %955 = vmatprep.mubr.bf16.mxu0 0
      %956 = vmatmul.mubr.bf16.gmra.mrb[0].mxu0 %v665
      %v957 = vpop.f32.mrb[0].mxu0
      %v958 = vadd.f32 %v797, %v957
      %v959 = vpop.f32.mrb[0].mxu0
      %v960 = vpop.f32.mrb[0].mxu0
      %v961 = vadd.f32 %v800, %v960
      %v962 = vpop.f32.mrb[0].mxu0
      %963 = vmatprep.mubr.bf16.mxu0 0
      %964 = vmatmul.mubr.bf16.gmra.mrb[0].mxu0 %v668
      %v965 = vpop.f32.mrb[0].mxu0
      %v966 = vadd.f32 %v805, %v965
      %v967 = vpop.f32.mrb[0].mxu0
      %v968 = vpop.f32.mrb[0].mxu0
      %v969 = vadd.f32 %v808, %v968
      %v970 = vpop.f32.mrb[0].mxu0
      %971 = vmatprep.mubr.bf16.mxu0 0
      %972 = vmatmul.mubr.bf16.gmra.mrb[0].mxu0 %v671
      %v973 = vpop.f32.mrb[0].mxu0
      %v974 = vadd.f32 %v813, %v973
      %v975 = vpop.f32.mrb[0].mxu0
      %v976 = vpop.f32.mrb[0].mxu0
      %v977 = vadd.f32 %v816, %v976
      %v978 = vpop.f32.mrb[0].mxu0
      %979 = vmatprep.mubr.bf16.mxu0 0
      %980 = vmatmul.mubr.bf16.gmra.mrb[0].mxu0 %v674
      %v981 = vpop.f32.mrb[0].mxu0
      %v982 = vadd.f32 %v821, %v981
      %v983 = vpop.f32.mrb[0].mxu0
      %v984 = vpop.f32.mrb[0].mxu0
      %v985 = vadd.f32 %v824, %v984
      %v986 = vpop.f32.mrb[0].mxu0
      %987 = vmatprep.mubr.bf16.mxu0 0
      %988 = vmatmul.mubr.bf16.gmra.mrb[0].mxu0 %v677
      %v989 = vpop.f32.mrb[0].mxu0
      %v990 = vadd.f32 %v829, %v989
      %v991 = vpop.f32.mrb[0].mxu0
      %v992 = vpop.f32.mrb[0].mxu0
      %v993 = vadd.f32 %v832, %v992
      %v994 = vpop.f32.mrb[0].mxu0
      %995 = vmatprep.mubr.bf16.mxu0 0
      %996 = vmatmul.mubr.bf16.gmra.mrb[0].mxu0 %v680
      %v997 = vpop.f32.mrb[0].mxu0
      %v998 = vadd.f32 %v837, %v997
      %v999 = vpop.f32.mrb[0].mxu0
      %v1000 = vpop.f32.mrb[0].mxu0
      %v1001 = vadd.f32 %v840, %v1000
      %v1002 = vpop.f32.mrb[0].mxu0
      %1003 = vdwg.mxu0
      %v1004 = vmax.f32 %v878, 0.0
      %v1005 = vmax.f32 %v881, 0.0
      %v1006 = vmax.f32 %v886, 0.0
      %v1007 = vmax.f32 %v889, 0.0
      %v1008 = vmax.f32 %v894, 0.0
      %v1009 = vmax.f32 %v897, 0.0
      %v1010 = vmax.f32 %v902, 0.0
      %v1011 = vmax.f32 %v905, 0.0
      %v1012 = vmax.f32 %v910, 0.0
      %v1013 = vmax.f32 %v913, 0.0
      %v1014 = vmax.f32 %v918, 0.0
      %v1015 = vmax.f32 %v921, 0.0
      %v1016 = vmax.f32 %v926, 0.0
      %v1017 = vmax.f32 %v929, 0.0
      %v1018 = vmax.f32 %v934, 0.0
      %v1019 = vmax.f32 %v937, 0.0
      %v1020 = vmax.f32 %v942, 0.0
      %v1021 = vmax.f32 %v945, 0.0
      %v1022 = vmax.f32 %v950, 0.0
      %v1023 = vmax.f32 %v953, 0.0
      %v1024 = vmax.f32 %v958, 0.0
      %v1025 = vmax.f32 %v961, 0.0
      %v1026 = vmax.f32 %v966, 0.0
      %v1027 = vmax.f32 %v969, 0.0
      %v1028 = vmax.f32 %v974, 0.0
      %v1029 = vmax.f32 %v977, 0.0
      %v1030 = vmax.f32 %v982, 0.0
      %v1031 = vmax.f32 %v985, 0.0
      %v1032 = vmax.f32 %v990, 0.0
      %v1033 = vmax.f32 %v993, 0.0
      %v1034 = vmax.f32 %v998, 0.0
      %v1035 = vmax.f32 %v1001, 0.0
      %1036 = vst.msk [vmem:[%s175] sm:$0xff] %vm633, %v1004
      %1037 = vst.msk [vmem:[%s175 + $0x8] sm:$0xff] %vm633, %v1005
      %1038 = vst.msk [vmem:[%s175 + $0x10] sm:$0xff] %vm633, %v1006
      %1039 = vst.msk [vmem:[%s175 + $0x18] sm:$0xff] %vm633, %v1007
      %1040 = vst.msk [vmem:[%s175 + $0x20] sm:$0xff] %vm633, %v1008
      %1041 = vst.msk [vmem:[%s175 + $0x28] sm:$0xff] %vm633, %v1009
      %1042 = vst.msk [vmem:[%s175 + $0x30] sm:$0xff] %vm633, %v1010
      %1043 = vst.msk [vmem:[%s175 + $0x38] sm:$0xff] %vm633, %v1011
      %1044 = vst.msk [vmem:[%s175 + $0x40] sm:$0xff] %vm633, %v1012
      %1045 = vst.msk [vmem:[%s175 + $0x48] sm:$0xff] %vm633, %v1013
      %1046 = vst.msk [vmem:[%s175 + $0x50] sm:$0xff] %vm633, %v1014
      %1047 = vst.msk [vmem:[%s175 + $0x58] sm:$0xff] %vm633, %v1015
      %1048 = vst.msk [vmem:[%s175 + $0x60] sm:$0xff] %vm633, %v1016
      %1049 = vst.msk [vmem:[%s175 + $0x68] sm:$0xff] %vm633, %v1017
      %1050 = vst.msk [vmem:[%s175 + $0x70] sm:$0xff] %vm633, %v1018
      %1051 = vst.msk [vmem:[%s175 + $0x78] sm:$0xff] %vm633, %v1019
      %1052 = vst.msk [vmem:[%s175 + $0x80] sm:$0xff] %vm633, %v1020
      %1053 = vst.msk [vmem:[%s175 + $0x88] sm:$0xff] %vm633, %v1021
      %1054 = vst.msk [vmem:[%s175 + $0x90] sm:$0xff] %vm633, %v1022
      %1055 = vst.msk [vmem:[%s175 + $0x98] sm:$0xff] %vm633, %v1023
      %1056 = vst.msk [vmem:[%s175 + $0xa0] sm:$0xff] %vm633, %v1024
      %1057 = vst.msk [vmem:[%s175 + $0xa8] sm:$0xff] %vm633, %v1025
      %1058 = vst.msk [vmem:[%s175 + $0xb0] sm:$0xff] %vm633, %v1026
      %1059 = vst.msk [vmem:[%s175 + $0xb8] sm:$0xff] %vm633, %v1027
      %1060 = vst.msk [vmem:[%s175 + $0xc0] sm:$0xff] %vm633, %v1028
      %1061 = vst.msk [vmem:[%s175 + $0xc8] sm:$0xff] %vm633, %v1029
      %1062 = vst.msk [vmem:[%s175 + $0xd0] sm:$0xff] %vm633, %v1030
      %1063 = vst.msk [vmem:[%s175 + $0xd8] sm:$0xff] %vm633, %v1031
      %1064 = vst.msk [vmem:[%s175 + $0xe0] sm:$0xff] %vm633, %v1032
      %1065 = vst.msk [vmem:[%s175 + $0xe8] sm:$0xff] %vm633, %v1033
      %1066 = vst.msk [vmem:[%s175 + $0xf0] sm:$0xff] %vm633, %v1034
      %1067 = vst.msk [vmem:[%s175 + $0xf8] sm:$0xff] %vm633, %v1035
      %s1068 = smul.u32 32, %s14
      %p1069 = scmp.lt.s32.totalorder %s1068, 63
      %s1070 = scalar_select %p1069, %s1068, 63
      %s1071 = smul.addr %s1070, 8
      %s1072 = scalar_lea.vmem %s3, %s1071
      // Predicated region
      $region33: #{tsm_resnet_encoder.8} parent=31 // pred_check
        %p1073 = pneg %p100
      $region34: #{tsm_resnet_encoder.8} parent=31 // pred_check_branch
        %1075 = sbr.rel (%p1073) target = $region36
      $region35: #{tsm_resnet_encoder.8} parent=31 // pred_region
        %s1076 = smul.u32 32, %s14
      $region36: #{tsm_resnet_encoder.8} parent=31 // pred_fallthru
        _
    $region32: #{tsm_resnet_encoder.8} parent=5 // pred_fallthru
      _
    %p1077 = scmp.le.s32.totalorder 2, %s9
    // Predicated region
    $region37: #{tsm_resnet_encoder.8} parent=5 // pred_check
      %p1078 = pneg %p1077
    $region38: #{tsm_resnet_encoder.8} parent=5 // pred_check_branch
      %1080 = sbr.rel (%p1078) target = $region40
    $region39: #{tsm_resnet_encoder.8} parent=5 // pred_region
      %s1081 = ssub.s32 %s9, 2
      // Predicated region
      $region41: #{tsm_resnet_encoder.8} parent=39 // pred_check
        %p1082 = pneg %p106
      $region42: #{tsm_resnet_encoder.8} parent=39 // pred_check_branch
        %1084 = sbr.rel (%p1082) target = $region44
      $region43: #{tsm_resnet_encoder.8} parent=39 // pred_region
        %s1085 = smul.u32 32, %s15
        %p1086 = scmp.lt.s32.totalorder %s1085, 63
        %s1087 = scalar_select %p1086, %s1085, 63
        %s1088 = smul.addr %s1087, 8
        %s1089 = scalar_lea.vmem %s3, %s1088
      $region44: #{tsm_resnet_encoder.8} parent=39 // pred_fallthru
        _
    $region40: #{tsm_resnet_encoder.8} parent=5 // pred_fallthru
      _
  $region6: #{tsm_resnet_encoder.8} parent=0 // loop_footer
    %s13 = sadd.s32 1, %s9
  $region7: #{tsm_resnet_encoder.8} parent=0 // loop_footer_branch
    %8 = sbr.rel target = $region3
  $region8: #{tsm_resnet_encoder.8} parent=0 // loop_exit
    _

// kernel: tsm_resnet_encoder.9
$region0: #{tsm_resnet_encoder.9}
  #allocation0 [shape = 'u32[]', space=smem, size = 0x4, offset = 0x4, fixed_abs, tag = 'smem constant byte address 0x4 - core index']
  #allocation1 [shape = 'u32[144,128]{1,0:T(1,128)}', space=vmem, size = 0x12000, scoped, tag = 'internal scratch']
  %s0 = inlined_call_operand.vmem [shape: bf16[512,288], index: 0, kind: input, shape index: {}]
  %s1 = inlined_call_operand.vmem [shape: bf16[288,32], index: 1, kind: input, shape index: {}]
  %s2 = inlined_call_operand.vmem [shape: f32[1,32], index: 2, kind: input, shape index: {}]
  %s3 = inlined_call_operand.vmem [shape: f32[512,32], index: 3, kind: input, shape index: {}]
  %s4 = inlined_call_operand.vmem [shape: f32[512,32], index: 4, kind: output, shape index: {}]
  %s5 = sld [smem:[#allocation0]]
  $region49: #{tsm_resnet_encoder.9} parent=0
    _
  %s7 = ssub.s32 1, %s5
  %s8 = scalar_select 0, %s7, %s5
  loop: start=0, step=1, limit=4
  $region2: #{tsm_resnet_encoder.9} parent=0 // loop_pre_header
    _
  $region3: #{tsm_resnet_encoder.9} parent=0 // loop_header
    %s10 = sphi 0, %s14
    %p11 = scmp.ge.s32.totalorder %s10, 4
    %s20 = sphi 0, %s22
    %s23 = sphi 0, %s20
    %s24 = sphi 0, %s23
    %s40 = sphi 0, %s24
    %s44 = sphi 0, %s44
    %s46 = sphi 0, %s44
    %s47 = sphi 0, %s46
    %s61 = sphi 0, %s47
    %s65 = sphi 0, %s65
    %s67 = sphi 0, %s65
    %s68 = sphi 0, %s67
    %s82 = sphi 0, %s68
    %s88 = sphi 0, %s90
    %s91 = sphi 0, %s88
    %s92 = sphi 0, %s91
    %s108 = sphi 0, %s92
    %s114 = sphi 0, %s116
    %s117 = sphi 0, %s114
    %s118 = sphi 0, %s117
    %s134 = sphi 0, %s118
  $region4: #{tsm_resnet_encoder.9} parent=0 // loop_header_branch
    %13 = sbr.rel (%p11) target = $region8
  $region5: #{tsm_resnet_encoder.9} parent=0 // loop_body
    %s15 = ssub.s32 %s10, 1
    %s16 = ssub.s32 %s10, 2
    %s17 = sadd.s32 %s10, 1
    %s18 = ssub.s32 %s10, %s17
    %p19 = scmp.eq.s32.totalorder %s18, 0
    %s21 = sadd.s32 %s20, 1
    %s22 = scalar_select %p19, %s20, %s21
    %p25 = pneg %p19
    %p26 = scmp.eq.s32.totalorder %s10, 1
    %p27 = por %p25, %p26
    %p28 = scmp.ne.s32.totalorder %s20, %s23
    %p29 = scmp.eq.s32.totalorder %s10, 0
    %p30 = por %p28, %p29
    %p31 = scmp.ne.s32.totalorder %s20, %s23
    %p32 = scmp.eq.s32.totalorder %s15, 1
    %p33 = por %p31, %p32
    %p34 = scmp.ne.s32.totalorder %s23, %s24
    %p35 = scmp.eq.s32.totalorder %s15, 0
    %p36 = por %p34, %p35
    %p37 = scmp.ne.s32.totalorder %s23, %s24
    %p38 = scmp.eq.s32.totalorder %s16, 1
    %p39 = por %p37, %p38
    %p41 = scmp.ne.s32.totalorder %s24, %s40
    %p42 = scmp.eq.s32.totalorder %s16, 0
    %p43 = por %p41, %p42
    %s45 = sadd.s32 %s44, 1
    %p48 = scmp.eq.s32.totalorder %s10, 1
    %p49 = scmp.ne.s32.totalorder %s44, %s46
    %p50 = scmp.eq.s32.totalorder %s10, 0
    %p51 = por %p49, %p50
    %p52 = scmp.ne.s32.totalorder %s44, %s46
    %p53 = scmp.eq.s32.totalorder %s15, 1
    %p54 = por %p52, %p53
    %p55 = scmp.ne.s32.totalorder %s46, %s47
    %p56 = scmp.eq.s32.totalorder %s15, 0
    %p57 = por %p55, %p56
    %p58 = scmp.ne.s32.totalorder %s46, %s47
    %p59 = scmp.eq.s32.totalorder %s16, 1
    %p60 = por %p58, %p59
    %p62 = scmp.ne.s32.totalorder %s47, %s61
    %p63 = scmp.eq.s32.totalorder %s16, 0
    %p64 = por %p62, %p63
    %s66 = sadd.s32 %s65, 1
    %p69 = scmp.eq.s32.totalorder %s10, 1
    %p70 = scmp.ne.s32.totalorder %s65, %s67
    %p71 = scmp.eq.s32.totalorder %s10, 0
    %p72 = por %p70, %p71
    %p73 = scmp.ne.s32.totalorder %s65, %s67
    %p74 = scmp.eq.s32.totalorder %s15, 1
    %p75 = por %p73, %p74
    %p76 = scmp.ne.s32.totalorder %s67, %s68
    %p77 = scmp.eq.s32.totalorder %s15, 0
    %p78 = por %p76, %p77
    %p79 = scmp.ne.s32.totalorder %s67, %s68
    %p80 = scmp.eq.s32.totalorder %s16, 1
    %p81 = por %p79, %p80
    %p83 = scmp.ne.s32.totalorder %s68, %s82
    %p84 = scmp.eq.s32.totalorder %s16, 0
    %p85 = por %p83, %p84
    %s86 = ssub.s32 %s10, %s17
    %p87 = scmp.eq.s32.totalorder %s86, 0
    %s89 = sadd.s32 %s88, 1
    %s90 = scalar_select %p87, %s88, %s89
    %p93 = pneg %p87
    %p94 = scmp.eq.s32.totalorder %s10, 1
    %p95 = por %p93, %p94
    %p96 = scmp.ne.s32.totalorder %s88, %s91
    %p97 = scmp.eq.s32.totalorder %s10, 0
    %p98 = por %p96, %p97
    %p99 = scmp.ne.s32.totalorder %s88, %s91
    %p100 = scmp.eq.s32.totalorder %s15, 1
    %p101 = por %p99, %p100
    %p102 = scmp.ne.s32.totalorder %s91, %s92
    %p103 = scmp.eq.s32.totalorder %s15, 0
    %p104 = por %p102, %p103
    %p105 = scmp.ne.s32.totalorder %s91, %s92
    %p106 = scmp.eq.s32.totalorder %s16, 1
    %p107 = por %p105, %p106
    %p109 = scmp.ne.s32.totalorder %s92, %s108
    %p110 = scmp.eq.s32.totalorder %s16, 0
    %p111 = por %p109, %p110
    %s112 = ssub.s32 %s10, %s17
    %p113 = scmp.eq.s32.totalorder %s112, 0
    %s115 = sadd.s32 %s114, 1
    %s116 = scalar_select %p113, %s114, %s115
    %p119 = pneg %p113
    %p120 = scmp.eq.s32.totalorder %s10, 1
    %p121 = por %p119, %p120
    %p122 = scmp.ne.s32.totalorder %s114, %s117
    %p123 = scmp.eq.s32.totalorder %s10, 0
    %p124 = por %p122, %p123
    %p125 = scmp.ne.s32.totalorder %s114, %s117
    %p126 = scmp.eq.s32.totalorder %s15, 1
    %p127 = por %p125, %p126
    %p128 = scmp.ne.s32.totalorder %s117, %s118
    %p129 = scmp.eq.s32.totalorder %s15, 0
    %p130 = por %p128, %p129
    %p131 = scmp.ne.s32.totalorder %s117, %s118
    %p132 = scmp.eq.s32.totalorder %s16, 1
    %p133 = por %p131, %p132
    %p135 = scmp.ne.s32.totalorder %s118, %s134
    %p136 = scmp.eq.s32.totalorder %s16, 0
    %p137 = por %p135, %p136
    %p138 = scmp.le.s32.totalorder 1, %s10
    %p139 = scmp.lt.s32.totalorder %s10, 3
    %p140 = pnand %p138, %p139
    %p141 = pneg %p140
    // Predicated region
    $region9: #{tsm_resnet_encoder.9} parent=5 // pred_check
      _
    $region10: #{tsm_resnet_encoder.9} parent=5 // pred_check_branch
      %143 = sbr.rel (%p140) target = $region12
    $region11: #{tsm_resnet_encoder.9} parent=5 // pred_region
      %s144 = ssub.s32 %s10, 1
      // Predicated region
      $region13: #{tsm_resnet_encoder.9} parent=11 // pred_check
        %p145 = pneg %p57
      $region14: #{tsm_resnet_encoder.9} parent=11 // pred_check_branch
        %147 = sbr.rel (%p145) target = $region16
      $region15: #{tsm_resnet_encoder.9} parent=11 // pred_region
        _
      $region16: #{tsm_resnet_encoder.9} parent=11 // pred_fallthru
        _
      // Predicated region
      $region17: #{tsm_resnet_encoder.9} parent=11 // pred_check
        %p148 = pneg %p78
      $region18: #{tsm_resnet_encoder.9} parent=11 // pred_check_branch
        %150 = sbr.rel (%p148) target = $region20
      $region19: #{tsm_resnet_encoder.9} parent=11 // pred_region
        _
      $region20: #{tsm_resnet_encoder.9} parent=11 // pred_fallthru
        _
    $region12: #{tsm_resnet_encoder.9} parent=5 // pred_fallthru
      _
    %p151 = scmp.lt.s32.totalorder %s10, 2
    // Predicated region
    $region21: #{tsm_resnet_encoder.9} parent=5 // pred_check
      %p152 = pneg %p151
    $region22: #{tsm_resnet_encoder.9} parent=5 // pred_check_branch
      %154 = sbr.rel (%p152) target = $region24
    $region23: #{tsm_resnet_encoder.9} parent=5 // pred_region
      // Predicated region
      $region25: #{tsm_resnet_encoder.9} parent=23 // pred_check
        %p155 = pneg %p30
      $region26: #{tsm_resnet_encoder.9} parent=23 // pred_check_branch
        %157 = sbr.rel (%p155) target = $region28
      $region27: #{tsm_resnet_encoder.9} parent=23 // pred_region
        %s158 = smul.u32 32, %s10
        %p159 = scmp.lt.s32.totalorder %s158, 63
        %s160 = scalar_select %p159, %s158, 63
        %s161 = smul.addr %s160, 3
        %s162 = smul.addr %s161, 4
        %s163 = scalar_lea.vmem %s0, %s162
        %s164 = smul.u32 32, %s10
      $region28: #{tsm_resnet_encoder.9} parent=23 // pred_fallthru
        _
      // Predicated region
      $region29: #{tsm_resnet_encoder.9} parent=23 // pred_check
        %p165 = pneg %p98
      $region30: #{tsm_resnet_encoder.9} parent=23 // pred_check_branch
        %167 = sbr.rel (%p165) target = $region32
      $region31: #{tsm_resnet_encoder.9} parent=23 // pred_region
        %s168 = smul.u32 32, %s10
        %p169 = scmp.lt.s32.totalorder %s168, 63
        %s170 = scalar_select %p169, %s168, 63
        %s171 = smul.addr %s170, 8
        %s172 = scalar_lea.vmem %s3, %s171
        %s173 = smul.u32 32, %s10
      $region32: #{tsm_resnet_encoder.9} parent=23 // pred_fallthru
        _
    $region24: #{tsm_resnet_encoder.9} parent=5 // pred_fallthru
      _
    %p174 = scmp.le.s32.totalorder 1, %s10
    %p175 = scmp.lt.s32.totalorder %s10, 3
    %p176 = pnand %p174, %p175
    %p177 = pneg %p176
    // Predicated region
    $region33: #{tsm_resnet_encoder.9} parent=5 // pred_check
      _
    $region34: #{tsm_resnet_encoder.9} parent=5 // pred_check_branch
      %179 = sbr.rel (%p176) target = $region36
    $region35: #{tsm_resnet_encoder.9} parent=5 // pred_region
      %s180 = ssub.s32 %s10, 1
      %s181 = smul.u32 32, %s15
      %p182 = scmp.lt.s32.totalorder %s181, 63
      %s183 = scalar_select %p182, %s181, 63
      %s184 = smul.addr %s183, 3
      %s185 = smul.addr %s184, 4
      %s186 = scalar_lea.vmem %s0, %s185
      %p187 = pneg %p36
      %p188 = pneg %p33
      %p189 = pneg %p57
      %p190 = pneg %p54
      %p191 = pneg %p78
      %p192 = pneg %p75
      %s193 = smul.u32 32, %s15
      %p194 = scmp.lt.s32.totalorder %s193, 63
      %s195 = scalar_select %p194, %s193, 63
      %s196 = smul.addr %s195, 8
      %s197 = scalar_lea.vmem %s3, %s196
      %p198 = pneg %p104
      %p199 = pneg %p101
      %p200 = pneg %p130
      %p201 = pneg %p127
      %s202 = smul.u32 32, %s15
      %p203 = scmp.lt.s32.totalorder %s202, 63
      %s204 = scalar_select %p203, %s202, 63
      %s205 = smul.addr %s204, 8
      %s206 = scalar_lea.vmem %s4, %s205
      %s207 = smul.u32 32, %s15
      %p208 = scmp.lt.s32.totalorder %s207, 63
      %s209 = scalar_select %p208, %s207, 63
      %s210 = smul.addr %s209, 3
      %s211 = smul.addr %s210, 4
      %s212 = scalar_lea.vmem %s0, %s211
      %s213 = smul.u32 32, %s15
      %s214 = smul.u32 32, %s15
      %p215 = scmp.lt.s32.totalorder %s214, 63
      %s216 = scalar_select %p215, %s214, 63
      %s217 = smul.addr %s216, 8
      %s218 = scalar_lea.vmem %s3, %s217
      %s219 = smul.u32 32, %s15
      %s220 = smul.u32 32, %s15
      %p221 = scmp.lt.s32.totalorder %s220, 63
      %s222 = scalar_select %p221, %s220, 63
      %s223 = smul.addr %s222, 8
      %s224 = scalar_lea.vmem %s4, %s223
      %s225 = smul.u32 32, %s15
      %v227 = vld [vmem:[%s212] sm:$0xff]
      %v228 = vld [vmem:[%s212 + $0x8] sm:$0xf]
      %v229 = vld [vmem:[%s212 + $0xc] sm:$0xff]
      %v230 = vld [vmem:[%s212 + $0x14] sm:$0xf]
      %v231 = vld [vmem:[%s212 + $0x18] sm:$0xff]
      %v232 = vld [vmem:[%s212 + $0x20] sm:$0xf]
      %v233 = vld [vmem:[%s212 + $0x24] sm:$0xff]
      %v234 = vld [vmem:[%s212 + $0x2c] sm:$0xf]
      %v235 = vld [vmem:[%s212 + $0x30] sm:$0xff]
      %v236 = vld [vmem:[%s212 + $0x38] sm:$0xf]
      %v237 = vld [vmem:[%s212 + $0x3c] sm:$0xff]
      %v238 = vld [vmem:[%s212 + $0x44] sm:$0xf]
      %v239 = vld [vmem:[%s212 + $0x48] sm:$0xff]
      %v240 = vld [vmem:[%s212 + $0x50] sm:$0xf]
      %v241 = vld [vmem:[%s212 + $0x54] sm:$0xff]
      %v242 = vld [vmem:[%s212 + $0x5c] sm:$0xf]
      %v243 = vld [vmem:[%s212 + $0x60] sm:$0xff]
      %v244 = vld [vmem:[%s212 + $0x68] sm:$0xf]
      %v245 = vld [vmem:[%s212 + $0x6c] sm:$0xff]
      %v246 = vld [vmem:[%s212 + $0x74] sm:$0xf]
      %v247 = vld [vmem:[%s212 + $0x78] sm:$0xff]
      %v248 = vld [vmem:[%s212 + $0x80] sm:$0xf]
      %v249 = vld [vmem:[%s212 + $0x84] sm:$0xff]
      %v250 = vld [vmem:[%s212 + $0x8c] sm:$0xf]
      %v251 = vld [vmem:[%s212 + $0x90] sm:$0xff]
      %v252 = vld [vmem:[%s212 + $0x98] sm:$0xf]
      %v253 = vld [vmem:[%s212 + $0x9c] sm:$0xff]
      %v254 = vld [vmem:[%s212 + $0xa4] sm:$0xf]
      %v255 = vld [vmem:[%s212 + $0xa8] sm:$0xff]
      %v256 = vld [vmem:[%s212 + $0xb0] sm:$0xf]
      %v257 = vld [vmem:[%s212 + $0xb4] sm:$0xff]
      %v258 = vld [vmem:[%s212 + $0xbc] sm:$0xf]
      %v259 = vld [vmem:[%s212 + $0xc0] sm:$0xff]
      %v260 = vld [vmem:[%s212 + $0xc8] sm:$0xf]
      %v261 = vld [vmem:[%s212 + $0xcc] sm:$0xff]
      %v262 = vld [vmem:[%s212 + $0xd4] sm:$0xf]
      %v263 = vld [vmem:[%s212 + $0xd8] sm:$0xff]
      %v264 = vld [vmem:[%s212 + $0xe0] sm:$0xf]
      %v265 = vld [vmem:[%s212 + $0xe4] sm:$0xff]
      %v266 = vld [vmem:[%s212 + $0xec] sm:$0xf]
      %v267 = vld [vmem:[%s212 + $0xf0] sm:$0xff]
      %v268 = vld [vmem:[%s212 + $0xf8] sm:$0xf]
      %v269 = vld [vmem:[%s212 + $0xfc] sm:$0xff]
      %v270 = vld [vmem:[%s212 + $0x104] sm:$0xf]
      %v271 = vld [vmem:[%s212 + $0x108] sm:$0xff]
      %v272 = vld [vmem:[%s212 + $0x110] sm:$0xf]
      %v273 = vld [vmem:[%s212 + $0x114] sm:$0xff]
      %v274 = vld [vmem:[%s212 + $0x11c] sm:$0xf]
      %v275 = vld [vmem:[%s212 + $0x120] sm:$0xff]
      %v276 = vld [vmem:[%s212 + $0x128] sm:$0xf]
      %v277 = vld [vmem:[%s212 + $0x12c] sm:$0xff]
      %v278 = vld [vmem:[%s212 + $0x134] sm:$0xf]
      %v279 = vld [vmem:[%s212 + $0x138] sm:$0xff]
      %v280 = vld [vmem:[%s212 + $0x140] sm:$0xf]
      %v281 = vld [vmem:[%s212 + $0x144] sm:$0xff]
      %v282 = vld [vmem:[%s212 + $0x14c] sm:$0xf]
      %v283 = vld [vmem:[%s212 + $0x150] sm:$0xff]
      %v284 = vld [vmem:[%s212 + $0x158] sm:$0xf]
      %v285 = vld [vmem:[%s212 + $0x15c] sm:$0xff]
      %v286 = vld [vmem:[%s212 + $0x164] sm:$0xf]
      %v287 = vld [vmem:[%s212 + $0x168] sm:$0xff]
      %v288 = vld [vmem:[%s212 + $0x170] sm:$0xf]
      %v289 = vld [vmem:[%s212 + $0x174] sm:$0xff]
      %v290 = vld [vmem:[%s212 + $0x17c] sm:$0xf]
      %v291 = vld [vmem:[%s1] sm:$0xf]
      %v292 = vld [vmem:[%s1 + $0x4] sm:$0xf]
      %v293 = vld [vmem:[%s1 + $0x8] sm:$0xf]
      %v294 = vld [vmem:[%s1 + $0xc] sm:$0xf]
      %v295 = vld [vmem:[%s1 + $0x10] sm:$0xf]
      %v296 = vld [vmem:[%s1 + $0x14] sm:$0xf]
      %v297 = vld [vmem:[%s1 + $0x18] sm:$0xf]
      %v298 = vld [vmem:[%s1 + $0x1c] sm:$0xf]
      %v299 = vld [vmem:[%s1 + $0x20] sm:$0xf]
      %v300 = vld [vmem:[%s1 + $0x24] sm:$0xf]
      %v301 = vld [vmem:[%s1 + $0x28] sm:$0xf]
      %v302 = vld [vmem:[%s1 + $0x2c] sm:$0xf]
      %v303 = vld [vmem:[%s1 + $0x30] sm:$0xf]
      %v304 = vld [vmem:[%s1 + $0x34] sm:$0xf]
      %v305 = vld [vmem:[%s1 + $0x38] sm:$0xf]
      %v306 = vld [vmem:[%s1 + $0x3c] sm:$0xf]
      %v307 = vld [vmem:[%s1 + $0x40] sm:$0xf]
      %v308 = vld [vmem:[%s1 + $0x44] sm:$0xf]
      %v309 = vld [vmem:[%s1 + $0x48] sm:$0xf]
      %v310 = vld [vmem:[%s1 + $0x4c] sm:$0xf]
      %v311 = vld [vmem:[%s1 + $0x50] sm:$0xf]
      %v312 = vld [vmem:[%s1 + $0x54] sm:$0xf]
      %v313 = vld [vmem:[%s1 + $0x58] sm:$0xf]
      %v314 = vld [vmem:[%s1 + $0x5c] sm:$0xf]
      %v315 = vld [vmem:[%s1 + $0x60] sm:$0xf]
      %v316 = vld [vmem:[%s1 + $0x64] sm:$0xf]
      %v317 = vld [vmem:[%s1 + $0x68] sm:$0xf]
      %v318 = vld [vmem:[%s1 + $0x6c] sm:$0xf]
      %v319 = vld [vmem:[%s1 + $0x70] sm:$0xf]
      %v320 = vld [vmem:[%s1 + $0x74] sm:$0xf]
      %v321 = vld [vmem:[%s1 + $0x78] sm:$0xf]
      %v322 = vld [vmem:[%s1 + $0x7c] sm:$0xf]
      %v323 = vld [vmem:[%s1 + $0x80] sm:$0xf]
      %v324 = vld [vmem:[%s1 + $0x84] sm:$0xf]
      %v325 = vld [vmem:[%s1 + $0x88] sm:$0xf]
      %v326 = vld [vmem:[%s1 + $0x8c] sm:$0xf]
      %v327 = vld [vmem:[%s2] sm:$0x1]
      %v329 = vlaneseq
      %v330 = vshrl.u32 %v329, 7
      %v331 = vsub.s32 0, %v330
      %v332 = vrot.slane %v327, %v331
      %v398 = vunpack.c.l.b16 %v227
      %v399 = vunpack.c.h.b16 %v227
      %v400 = vunpack.c.l.b16 %v228
      %v401 = vunpack.c.l.b16 %v229
      %v402 = vunpack.c.h.b16 %v229
      %v403 = vunpack.c.l.b16 %v230
      %v404 = vunpack.c.l.b16 %v231
      %v405 = vunpack.c.h.b16 %v231
      %v406 = vunpack.c.l.b16 %v232
      %v407 = vunpack.c.l.b16 %v233
      %v408 = vunpack.c.h.b16 %v233
      %v409 = vunpack.c.l.b16 %v234
      %v410 = vunpack.c.l.b16 %v235
      %v411 = vunpack.c.h.b16 %v235
      %v412 = vunpack.c.l.b16 %v236
      %v413 = vunpack.c.l.b16 %v237
      %v414 = vunpack.c.h.b16 %v237
      %v415 = vunpack.c.l.b16 %v238
      %v416 = vunpack.c.l.b16 %v239
      %v417 = vunpack.c.h.b16 %v239
      %v418 = vunpack.c.l.b16 %v240
      %v419 = vunpack.c.l.b16 %v241
      %v420 = vunpack.c.h.b16 %v241
      %v421 = vunpack.c.l.b16 %v242
      %v422 = vunpack.c.l.b16 %v243
      %v423 = vunpack.c.h.b16 %v243
      %v424 = vunpack.c.l.b16 %v244
      %v425 = vunpack.c.l.b16 %v245
      %v426 = vunpack.c.h.b16 %v245
      %v427 = vunpack.c.l.b16 %v246
      %v428 = vunpack.c.l.b16 %v247
      %v429 = vunpack.c.h.b16 %v247
      %v430 = vunpack.c.l.b16 %v248
      %v431 = vunpack.c.l.b16 %v249
      %v432 = vunpack.c.h.b16 %v249
      %v433 = vunpack.c.l.b16 %v250
      %v434 = vunpack.c.l.b16 %v251
      %v435 = vunpack.c.h.b16 %v251
      %v436 = vunpack.c.l.b16 %v252
      %v437 = vunpack.c.l.b16 %v253
      %v438 = vunpack.c.h.b16 %v253
      %v439 = vunpack.c.l.b16 %v254
      %v440 = vunpack.c.l.b16 %v255
      %v441 = vunpack.c.h.b16 %v255
      %v442 = vunpack.c.l.b16 %v256
      %v443 = vunpack.c.l.b16 %v257
      %v444 = vunpack.c.h.b16 %v257
      %v445 = vunpack.c.l.b16 %v258
      %v446 = vunpack.c.l.b16 %v259
      %v447 = vunpack.c.h.b16 %v259
      %v448 = vunpack.c.l.b16 %v260
      %v449 = vunpack.c.l.b16 %v261
      %v450 = vunpack.c.h.b16 %v261
      %v451 = vunpack.c.l.b16 %v262
      %v452 = vunpack.c.l.b16 %v263
      %v453 = vunpack.c.h.b16 %v263
      %v454 = vunpack.c.l.b16 %v264
      %v455 = vunpack.c.l.b16 %v265
      %v456 = vunpack.c.h.b16 %v265
      %v457 = vunpack.c.l.b16 %v266
      %v458 = vunpack.c.l.b16 %v267
      %v459 = vunpack.c.h.b16 %v267
      %v460 = vunpack.c.l.b16 %v268
      %v461 = vunpack.c.l.b16 %v269
      %v462 = vunpack.c.h.b16 %v269
      %v463 = vunpack.c.l.b16 %v270
      %v464 = vunpack.c.l.b16 %v271
      %v465 = vunpack.c.h.b16 %v271
      %v466 = vunpack.c.l.b16 %v272
      %v467 = vunpack.c.l.b16 %v273
      %v468 = vunpack.c.h.b16 %v273
      %v469 = vunpack.c.l.b16 %v274
      %v470 = vunpack.c.l.b16 %v275
      %v471 = vunpack.c.h.b16 %v275
      %v472 = vunpack.c.l.b16 %v276
      %v473 = vunpack.c.l.b16 %v277
      %v474 = vunpack.c.h.b16 %v277
      %v475 = vunpack.c.l.b16 %v278
      %v476 = vunpack.c.l.b16 %v279
      %v477 = vunpack.c.h.b16 %v279
      %v478 = vunpack.c.l.b16 %v280
      %v479 = vunpack.c.l.b16 %v281
      %v480 = vunpack.c.h.b16 %v281
      %v481 = vunpack.c.l.b16 %v282
      %v482 = vunpack.c.l.b16 %v283
      %v483 = vunpack.c.h.b16 %v283
      %v484 = vunpack.c.l.b16 %v284
      %v485 = vunpack.c.l.b16 %v285
      %v486 = vunpack.c.h.b16 %v285
      %v487 = vunpack.c.l.b16 %v286
      %v488 = vunpack.c.l.b16 %v287
      %v489 = vunpack.c.h.b16 %v287
      %v490 = vunpack.c.l.b16 %v288
      %v491 = vunpack.c.l.b16 %v289
      %v492 = vunpack.c.h.b16 %v289
      %v493 = vunpack.c.l.b16 %v290
      %v494 = vpack.c.b16 %v401, %v398
      %v495 = vpack.c.b16 %v402, %v399
      %v496 = vpack.c.b16 %v403, %v400
      %v497 = vpack.c.b16 %v407, %v404
      %v498 = vpack.c.b16 %v408, %v405
      %v499 = vpack.c.b16 %v409, %v406
      %v500 = vpack.c.b16 %v413, %v410
      %v501 = vpack.c.b16 %v414, %v411
      %v502 = vpack.c.b16 %v415, %v412
      %v503 = vpack.c.b16 %v419, %v416
      %v504 = vpack.c.b16 %v420, %v417
      %v505 = vpack.c.b16 %v421, %v418
      %v506 = vpack.c.b16 %v425, %v422
      %v507 = vpack.c.b16 %v426, %v423
      %v508 = vpack.c.b16 %v427, %v424
      %v509 = vpack.c.b16 %v431, %v428
      %v510 = vpack.c.b16 %v432, %v429
      %v511 = vpack.c.b16 %v433, %v430
      %v512 = vpack.c.b16 %v437, %v434
      %v513 = vpack.c.b16 %v438, %v435
      %v514 = vpack.c.b16 %v439, %v436
      %v515 = vpack.c.b16 %v443, %v440
      %v516 = vpack.c.b16 %v444, %v441
      %v517 = vpack.c.b16 %v445, %v442
      %v518 = vpack.c.b16 %v449, %v446
      %v519 = vpack.c.b16 %v450, %v447
      %v520 = vpack.c.b16 %v451, %v448
      %v521 = vpack.c.b16 %v455, %v452
      %v522 = vpack.c.b16 %v456, %v453
      %v523 = vpack.c.b16 %v457, %v454
      %v524 = vpack.c.b16 %v461, %v458
      %v525 = vpack.c.b16 %v462, %v459
      %v526 = vpack.c.b16 %v463, %v460
      %v527 = vpack.c.b16 %v467, %v464
      %v528 = vpack.c.b16 %v468, %v465
      %v529 = vpack.c.b16 %v469, %v466
      %v530 = vpack.c.b16 %v473, %v470
      %v531 = vpack.c.b16 %v474, %v471
      %v532 = vpack.c.b16 %v475, %v472
      %v533 = vpack.c.b16 %v479, %v476
      %v534 = vpack.c.b16 %v480, %v477
      %v535 = vpack.c.b16 %v481, %v478
      %v536 = vpack.c.b16 %v485, %v482
      %v537 = vpack.c.b16 %v486, %v483
      %v538 = vpack.c.b16 %v487, %v484
      %v539 = vpack.c.b16 %v491, %v488
      %v540 = vpack.c.b16 %v492, %v489
      %v541 = vpack.c.b16 %v493, %v490
      %v610 = vunpack.c.l.b16 %v291
      %v611 = vunpack.c.l.b16 %v292
      %v612 = vunpack.c.l.b16 %v293
      %v613 = vunpack.c.l.b16 %v294
      %v614 = vunpack.c.l.b16 %v295
      %v615 = vunpack.c.l.b16 %v296
      %v616 = vunpack.c.l.b16 %v297
      %v617 = vunpack.c.l.b16 %v298
      %v618 = vunpack.c.l.b16 %v299
      %v619 = vunpack.c.l.b16 %v300
      %v620 = vunpack.c.l.b16 %v301
      %v621 = vunpack.c.l.b16 %v302
      %v622 = vunpack.c.l.b16 %v303
      %v623 = vunpack.c.l.b16 %v304
      %v624 = vunpack.c.l.b16 %v305
      %v625 = vunpack.c.l.b16 %v306
      %v626 = vunpack.c.l.b16 %v307
      %v627 = vunpack.c.l.b16 %v308
      %v628 = vunpack.c.l.b16 %v309
      %v629 = vunpack.c.l.b16 %v310
      %v630 = vunpack.c.l.b16 %v311
      %v631 = vunpack.c.l.b16 %v312
      %v632 = vunpack.c.l.b16 %v313
      %v633 = vunpack.c.l.b16 %v314
      %v634 = vunpack.c.l.b16 %v315
      %v635 = vunpack.c.l.b16 %v316
      %v636 = vunpack.c.l.b16 %v317
      %v637 = vunpack.c.l.b16 %v318
      %v638 = vunpack.c.l.b16 %v319
      %v639 = vunpack.c.l.b16 %v320
      %v640 = vunpack.c.l.b16 %v321
      %v641 = vunpack.c.l.b16 %v322
      %v642 = vunpack.c.l.b16 %v323
      %v643 = vunpack.c.l.b16 %v324
      %v644 = vunpack.c.l.b16 %v325
      %v645 = vunpack.c.l.b16 %v326
      %v646 = vpack.c.b16 %v611, %v610
      %v647 = vpack.c.b16 %v613, %v612
      %v648 = vpack.c.b16 %v615, %v614
      %v649 = vpack.c.b16 %v617, %v616
      %v650 = vpack.c.b16 %v619, %v618
      %v651 = vpack.c.b16 %v621, %v620
      %v652 = vpack.c.b16 %v623, %v622
      %v653 = vpack.c.b16 %v625, %v624
      %v654 = vpack.c.b16 %v627, %v626
      %v655 = vpack.c.b16 %v629, %v628
      %v656 = vpack.c.b16 %v631, %v630
      %v657 = vpack.c.b16 %v633, %v632
      %v658 = vpack.c.b16 %v635, %v634
      %v659 = vpack.c.b16 %v637, %v636
      %v660 = vpack.c.b16 %v639, %v638
      %v661 = vpack.c.b16 %v641, %v640
      %v662 = vpack.c.b16 %v643, %v642
      %v663 = vpack.c.b16 %v645, %v644
      %vm682 = vcmask 261120
      %v684 = vsel %vm682, %v496, 0
      %v687 = vsel %vm682, %v499, 0
      %v690 = vsel %vm682, %v502, 0
      %v693 = vsel %vm682, %v505, 0
      %v696 = vsel %vm682, %v508, 0
      %v699 = vsel %vm682, %v511, 0
      %v702 = vsel %vm682, %v514, 0
      %v705 = vsel %vm682, %v517, 0
      %v708 = vsel %vm682, %v520, 0
      %v711 = vsel %vm682, %v523, 0
      %v714 = vsel %vm682, %v526, 0
      %v717 = vsel %vm682, %v529, 0
      %v720 = vsel %vm682, %v532, 0
      %v723 = vsel %vm682, %v535, 0
      %v726 = vsel %vm682, %v538, 0
      %v729 = vsel %vm682, %v541, 0
      %731 = vmatprep.subr.bf16.mxu0 0
      %732 = vmatpush1.bf16.msra.mxu0 %v646
      %733 = vmatprep.subr.bf16.mxu0 0
      %734 = vmatpush1.bf16.msra.mxu0 %v647
      %735 = vmatprep.subr.bf16.mxu0 0
      %736 = vmatpush1.bf16.msra.mxu0 %v648
      %737 = vmatprep.subr.bf16.mxu0 0
      %738 = vmatpush1.bf16.msra.mxu0 %v649
      %739 = vmatprep.subr.bf16.mxu0 0
      %740 = vmatpush1.bf16.msra.mxu0 %v650
      %741 = vmatprep.subr.bf16.mxu0 0
      %742 = vmatpush1.bf16.msra.mxu0 %v651
      %743 = vmatprep.subr.bf16.mxu0 0
      %744 = vmatpush1.bf16.msra.mxu0 %v652
      %745 = vmatprep.subr.bf16.mxu0 0
      %746 = vmatpush1.bf16.msra.mxu0 %v653
      %747 = vmatprep.subr.bf16.mxu0 0
      %748 = vmatpush1.bf16.msra.mxu0 %v654
      %749 = vmatprep.subr.bf16.mxu0 0
      %750 = vmatpush1.bf16.msra.mxu0 %v655
      %751 = vmatprep.subr.bf16.mxu0 0
      %752 = vmatpush1.bf16.msra.mxu0 %v656
      %753 = vmatprep.subr.bf16.mxu0 0
      %754 = vmatpush1.bf16.msra.mxu0 %v657
      %755 = vmatprep.subr.bf16.mxu0 0
      %756 = vmatpush1.bf16.msra.mxu0 %v658
      %757 = vmatprep.subr.bf16.mxu0 0
      %758 = vmatpush1.bf16.msra.mxu0 %v659
      %759 = vmatprep.subr.bf16.mxu0 0
      %760 = vmatpush1.bf16.msra.mxu0 %v660
      %761 = vmatprep.subr.bf16.mxu0 0
      %762 = vmatpush1.bf16.msra.mxu0 %v661
      %763 = vmatprep.mubr.bf16.mxu0 %v495
      %764 = vmatmul.mubr.bf16.gmra.mrb[0].mxu0 %v494
      %v765 = vpop.f32.mrb[0].mxu0
      %v766 = vadd.f32 %v332, %v765
      %v767 = vpop.f32.mrb[0].mxu0
      %v768 = vpop.f32.mrb[0].mxu0
      %v769 = vadd.f32 %v332, %v768
      %v770 = vpop.f32.mrb[0].mxu0
      %771 = vmatprep.mubr.bf16.mxu0 %v498
      %772 = vmatmul.mubr.bf16.gmra.mrb[0].mxu0 %v497
      %v773 = vpop.f32.mrb[0].mxu0
      %v774 = vadd.f32 %v332, %v773
      %v775 = vpop.f32.mrb[0].mxu0
      %v776 = vpop.f32.mrb[0].mxu0
      %v777 = vadd.f32 %v332, %v776
      %v778 = vpop.f32.mrb[0].mxu0
      %779 = vmatprep.mubr.bf16.mxu0 %v501
      %780 = vmatmul.mubr.bf16.gmra.mrb[0].mxu0 %v500
      %v781 = vpop.f32.mrb[0].mxu0
      %v782 = vadd.f32 %v332, %v781
      %v783 = vpop.f32.mrb[0].mxu0
      %v784 = vpop.f32.mrb[0].mxu0
      %v785 = vadd.f32 %v332, %v784
      %v786 = vpop.f32.mrb[0].mxu0
      %787 = vmatprep.mubr.bf16.mxu0 %v504
      %788 = vmatmul.mubr.bf16.gmra.mrb[0].mxu0 %v503
      %v789 = vpop.f32.mrb[0].mxu0
      %v790 = vadd.f32 %v332, %v789
      %v791 = vpop.f32.mrb[0].mxu0
      %v792 = vpop.f32.mrb[0].mxu0
      %v793 = vadd.f32 %v332, %v792
      %v794 = vpop.f32.mrb[0].mxu0
      %795 = vmatprep.mubr.bf16.mxu0 %v507
      %796 = vmatmul.mubr.bf16.gmra.mrb[0].mxu0 %v506
      %v797 = vpop.f32.mrb[0].mxu0
      %v798 = vadd.f32 %v332, %v797
      %v799 = vpop.f32.mrb[0].mxu0
      %v800 = vpop.f32.mrb[0].mxu0
      %v801 = vadd.f32 %v332, %v800
      %v802 = vpop.f32.mrb[0].mxu0
      %803 = vmatprep.mubr.bf16.mxu0 %v510
      %804 = vmatmul.mubr.bf16.gmra.mrb[0].mxu0 %v509
      %v805 = vpop.f32.mrb[0].mxu0
      %v806 = vadd.f32 %v332, %v805
      %v807 = vpop.f32.mrb[0].mxu0
      %v808 = vpop.f32.mrb[0].mxu0
      %v809 = vadd.f32 %v332, %v808
      %v810 = vpop.f32.mrb[0].mxu0
      %811 = vmatprep.mubr.bf16.mxu0 %v513
      %812 = vmatmul.mubr.bf16.gmra.mrb[0].mxu0 %v512
      %v813 = vpop.f32.mrb[0].mxu0
      %v814 = vadd.f32 %v332, %v813
      %v815 = vpop.f32.mrb[0].mxu0
      %v816 = vpop.f32.mrb[0].mxu0
      %v817 = vadd.f32 %v332, %v816
      %v818 = vpop.f32.mrb[0].mxu0
      %819 = vmatprep.mubr.bf16.mxu0 %v516
      %820 = vmatmul.mubr.bf16.gmra.mrb[0].mxu0 %v515
      %v821 = vpop.f32.mrb[0].mxu0
      %v822 = vadd.f32 %v332, %v821
      %v823 = vpop.f32.mrb[0].mxu0
      %v824 = vpop.f32.mrb[0].mxu0
      %v825 = vadd.f32 %v332, %v824
      %v826 = vpop.f32.mrb[0].mxu0
      %827 = vmatprep.mubr.bf16.mxu0 %v519
      %828 = vmatmul.mubr.bf16.gmra.mrb[0].mxu0 %v518
      %v829 = vpop.f32.mrb[0].mxu0
      %v830 = vadd.f32 %v332, %v829
      %v831 = vpop.f32.mrb[0].mxu0
      %v832 = vpop.f32.mrb[0].mxu0
      %v833 = vadd.f32 %v332, %v832
      %v834 = vpop.f32.mrb[0].mxu0
      %835 = vmatprep.mubr.bf16.mxu0 %v522
      %836 = vmatmul.mubr.bf16.gmra.mrb[0].mxu0 %v521
      %v837 = vpop.f32.mrb[0].mxu0
      %v838 = vadd.f32 %v332, %v837
      %v839 = vpop.f32.mrb[0].mxu0
      %v840 = vpop.f32.mrb[0].mxu0
      %v841 = vadd.f32 %v332, %v840
      %v842 = vpop.f32.mrb[0].mxu0
      %843 = vmatprep.mubr.bf16.mxu0 %v525
      %844 = vmatmul.mubr.bf16.gmra.mrb[0].mxu0 %v524
      %v845 = vpop.f32.mrb[0].mxu0
      %v846 = vadd.f32 %v332, %v845
      %v847 = vpop.f32.mrb[0].mxu0
      %v848 = vpop.f32.mrb[0].mxu0
      %v849 = vadd.f32 %v332, %v848
      %v850 = vpop.f32.mrb[0].mxu0
      %851 = vmatprep.mubr.bf16.mxu0 %v528
      %852 = vmatmul.mubr.bf16.gmra.mrb[0].mxu0 %v527
      %v853 = vpop.f32.mrb[0].mxu0
      %v854 = vadd.f32 %v332, %v853
      %v855 = vpop.f32.mrb[0].mxu0
      %v856 = vpop.f32.mrb[0].mxu0
      %v857 = vadd.f32 %v332, %v856
      %v858 = vpop.f32.mrb[0].mxu0
      %859 = vmatprep.mubr.bf16.mxu0 %v531
      %860 = vmatmul.mubr.bf16.gmra.mrb[0].mxu0 %v530
      %v861 = vpop.f32.mrb[0].mxu0
      %v862 = vadd.f32 %v332, %v861
      %v863 = vpop.f32.mrb[0].mxu0
      %v864 = vpop.f32.mrb[0].mxu0
      %v865 = vadd.f32 %v332, %v864
      %v866 = vpop.f32.mrb[0].mxu0
      %867 = vmatprep.mubr.bf16.mxu0 %v534
      %868 = vmatmul.mubr.bf16.gmra.mrb[0].mxu0 %v533
      %v869 = vpop.f32.mrb[0].mxu0
      %v870 = vadd.f32 %v332, %v869
      %v871 = vpop.f32.mrb[0].mxu0
      %v872 = vpop.f32.mrb[0].mxu0
      %v873 = vadd.f32 %v332, %v872
      %v874 = vpop.f32.mrb[0].mxu0
      %875 = vmatprep.mubr.bf16.mxu0 %v537
      %876 = vmatmul.mubr.bf16.gmra.mrb[0].mxu0 %v536
      %v877 = vpop.f32.mrb[0].mxu0
      %v878 = vadd.f32 %v332, %v877
      %v879 = vpop.f32.mrb[0].mxu0
      %v880 = vpop.f32.mrb[0].mxu0
      %v881 = vadd.f32 %v332, %v880
      %v882 = vpop.f32.mrb[0].mxu0
      %883 = vmatprep.mubr.bf16.mxu0 %v540
      %884 = vmatmul.mubr.bf16.gmra.mrb[0].mxu0 %v539
      %v885 = vpop.f32.mrb[0].mxu0
      %v886 = vadd.f32 %v332, %v885
      %v887 = vpop.f32.mrb[0].mxu0
      %v888 = vpop.f32.mrb[0].mxu0
      %v889 = vadd.f32 %v332, %v888
      %v890 = vpop.f32.mrb[0].mxu0
      %891 = vdwg.mxu0
      %892 = vmatprep.subr.bf16.mxu0 0
      %893 = vmatpush1.bf16.msra.mxu0 %v662
      %894 = vmatprep.subr.bf16.mxu0 0
      %895 = vmatpush1.bf16.msra.mxu0 %v663
      %896 = vmatprep.subr.bf16.mxu0 0
      %897 = vmatpush1.bf16.msra.mxu0 0
      %898 = vmatprep.subr.bf16.mxu0 0
      %899 = vmatpush1.bf16.msra.mxu0 0
      %900 = vmatprep.subr.bf16.mxu0 0
      %901 = vmatpush1.bf16.msra.mxu0 0
      %902 = vmatprep.subr.bf16.mxu0 0
      %903 = vmatpush1.bf16.msra.mxu0 0
      %904 = vmatprep.subr.bf16.mxu0 0
      %905 = vmatpush1.bf16.msra.mxu0 0
      %906 = vmatprep.subr.bf16.mxu0 0
      %907 = vmatpush1.bf16.msra.mxu0 0
      %908 = vmatprep.subr.bf16.mxu0 0
      %909 = vmatpush1.bf16.msra.mxu0 0
      %910 = vmatprep.subr.bf16.mxu0 0
      %911 = vmatpush1.bf16.msra.mxu0 0
      %912 = vmatprep.subr.bf16.mxu0 0
      %913 = vmatpush1.bf16.msra.mxu0 0
      %914 = vmatprep.subr.bf16.mxu0 0
      %915 = vmatpush1.bf16.msra.mxu0 0
      %916 = vmatprep.subr.bf16.mxu0 0
      %917 = vmatpush1.bf16.msra.mxu0 0
      %918 = vmatprep.subr.bf16.mxu0 0
      %919 = vmatpush1.bf16.msra.mxu0 0
      %920 = vmatprep.subr.bf16.mxu0 0
      %921 = vmatpush1.bf16.msra.mxu0 0
      %922 = vmatprep.subr.bf16.mxu0 0
      %923 = vmatpush1.bf16.msra.mxu0 0
      %924 = vmatprep.mubr.bf16.mxu0 0
      %925 = vmatmul.mubr.bf16.gmra.mrb[0].mxu0 %v684
      %v926 = vpop.f32.mrb[0].mxu0
      %v927 = vadd.f32 %v766, %v926
      %v928 = vpop.f32.mrb[0].mxu0
      %v929 = vpop.f32.mrb[0].mxu0
      %v930 = vadd.f32 %v769, %v929
      %v931 = vpop.f32.mrb[0].mxu0
      %932 = vmatprep.mubr.bf16.mxu0 0
      %933 = vmatmul.mubr.bf16.gmra.mrb[0].mxu0 %v687
      %v934 = vpop.f32.mrb[0].mxu0
      %v935 = vadd.f32 %v774, %v934
      %v936 = vpop.f32.mrb[0].mxu0
      %v937 = vpop.f32.mrb[0].mxu0
      %v938 = vadd.f32 %v777, %v937
      %v939 = vpop.f32.mrb[0].mxu0
      %940 = vmatprep.mubr.bf16.mxu0 0
      %941 = vmatmul.mubr.bf16.gmra.mrb[0].mxu0 %v690
      %v942 = vpop.f32.mrb[0].mxu0
      %v943 = vadd.f32 %v782, %v942
      %v944 = vpop.f32.mrb[0].mxu0
      %v945 = vpop.f32.mrb[0].mxu0
      %v946 = vadd.f32 %v785, %v945
      %v947 = vpop.f32.mrb[0].mxu0
      %948 = vmatprep.mubr.bf16.mxu0 0
      %949 = vmatmul.mubr.bf16.gmra.mrb[0].mxu0 %v693
      %v950 = vpop.f32.mrb[0].mxu0
      %v951 = vadd.f32 %v790, %v950
      %v952 = vpop.f32.mrb[0].mxu0
      %v953 = vpop.f32.mrb[0].mxu0
      %v954 = vadd.f32 %v793, %v953
      %v955 = vpop.f32.mrb[0].mxu0
      %956 = vmatprep.mubr.bf16.mxu0 0
      %957 = vmatmul.mubr.bf16.gmra.mrb[0].mxu0 %v696
      %v958 = vpop.f32.mrb[0].mxu0
      %v959 = vadd.f32 %v798, %v958
      %v960 = vpop.f32.mrb[0].mxu0
      %v961 = vpop.f32.mrb[0].mxu0
      %v962 = vadd.f32 %v801, %v961
      %v963 = vpop.f32.mrb[0].mxu0
      %964 = vmatprep.mubr.bf16.mxu0 0
      %965 = vmatmul.mubr.bf16.gmra.mrb[0].mxu0 %v699
      %v966 = vpop.f32.mrb[0].mxu0
      %v967 = vadd.f32 %v806, %v966
      %v968 = vpop.f32.mrb[0].mxu0
      %v969 = vpop.f32.mrb[0].mxu0
      %v970 = vadd.f32 %v809, %v969
      %v971 = vpop.f32.mrb[0].mxu0
      %972 = vmatprep.mubr.bf16.mxu0 0
      %973 = vmatmul.mubr.bf16.gmra.mrb[0].mxu0 %v702
      %v974 = vpop.f32.mrb[0].mxu0
      %v975 = vadd.f32 %v814, %v974
      %v976 = vpop.f32.mrb[0].mxu0
      %v977 = vpop.f32.mrb[0].mxu0
      %v978 = vadd.f32 %v817, %v977
      %v979 = vpop.f32.mrb[0].mxu0
      %980 = vmatprep.mubr.bf16.mxu0 0
      %981 = vmatmul.mubr.bf16.gmra.mrb[0].mxu0 %v705
      %v982 = vpop.f32.mrb[0].mxu0
      %v983 = vadd.f32 %v822, %v982
      %v984 = vpop.f32.mrb[0].mxu0
      %v985 = vpop.f32.mrb[0].mxu0
      %v986 = vadd.f32 %v825, %v985
      %v987 = vpop.f32.mrb[0].mxu0
      %988 = vmatprep.mubr.bf16.mxu0 0
      %989 = vmatmul.mubr.bf16.gmra.mrb[0].mxu0 %v708
      %v990 = vpop.f32.mrb[0].mxu0
      %v991 = vadd.f32 %v830, %v990
      %v992 = vpop.f32.mrb[0].mxu0
      %v993 = vpop.f32.mrb[0].mxu0
      %v994 = vadd.f32 %v833, %v993
      %v995 = vpop.f32.mrb[0].mxu0
      %996 = vmatprep.mubr.bf16.mxu0 0
      %997 = vmatmul.mubr.bf16.gmra.mrb[0].mxu0 %v711
      %v998 = vpop.f32.mrb[0].mxu0
      %v999 = vadd.f32 %v838, %v998
      %v1000 = vpop.f32.mrb[0].mxu0
      %v1001 = vpop.f32.mrb[0].mxu0
      %v1002 = vadd.f32 %v841, %v1001
      %v1003 = vpop.f32.mrb[0].mxu0
      %1004 = vmatprep.mubr.bf16.mxu0 0
      %1005 = vmatmul.mubr.bf16.gmra.mrb[0].mxu0 %v714
      %v1006 = vpop.f32.mrb[0].mxu0
      %v1007 = vadd.f32 %v846, %v1006
      %v1008 = vpop.f32.mrb[0].mxu0
      %v1009 = vpop.f32.mrb[0].mxu0
      %v1010 = vadd.f32 %v849, %v1009
      %v1011 = vpop.f32.mrb[0].mxu0
      %1012 = vmatprep.mubr.bf16.mxu0 0
      %1013 = vmatmul.mubr.bf16.gmra.mrb[0].mxu0 %v717
      %v1014 = vpop.f32.mrb[0].mxu0
      %v1015 = vadd.f32 %v854, %v1014
      %v1016 = vpop.f32.mrb[0].mxu0
      %v1017 = vpop.f32.mrb[0].mxu0
      %v1018 = vadd.f32 %v857, %v1017
      %v1019 = vpop.f32.mrb[0].mxu0
      %1020 = vmatprep.mubr.bf16.mxu0 0
      %1021 = vmatmul.mubr.bf16.gmra.mrb[0].mxu0 %v720
      %v1022 = vpop.f32.mrb[0].mxu0
      %v1023 = vadd.f32 %v862, %v1022
      %v1024 = vpop.f32.mrb[0].mxu0
      %v1025 = vpop.f32.mrb[0].mxu0
      %v1026 = vadd.f32 %v865, %v1025
      %v1027 = vpop.f32.mrb[0].mxu0
      %1028 = vmatprep.mubr.bf16.mxu0 0
      %1029 = vmatmul.mubr.bf16.gmra.mrb[0].mxu0 %v723
      %v1030 = vpop.f32.mrb[0].mxu0
      %v1031 = vadd.f32 %v870, %v1030
      %v1032 = vpop.f32.mrb[0].mxu0
      %v1033 = vpop.f32.mrb[0].mxu0
      %v1034 = vadd.f32 %v873, %v1033
      %v1035 = vpop.f32.mrb[0].mxu0
      %1036 = vmatprep.mubr.bf16.mxu0 0
      %1037 = vmatmul.mubr.bf16.gmra.mrb[0].mxu0 %v726
      %v1038 = vpop.f32.mrb[0].mxu0
      %v1039 = vadd.f32 %v878, %v1038
      %v1040 = vpop.f32.mrb[0].mxu0
      %v1041 = vpop.f32.mrb[0].mxu0
      %v1042 = vadd.f32 %v881, %v1041
      %v1043 = vpop.f32.mrb[0].mxu0
      %1044 = vmatprep.mubr.bf16.mxu0 0
      %1045 = vmatmul.mubr.bf16.gmra.mrb[0].mxu0 %v729
      %v1046 = vpop.f32.mrb[0].mxu0
      %v1047 = vadd.f32 %v886, %v1046
      %v1048 = vpop.f32.mrb[0].mxu0
      %v1049 = vpop.f32.mrb[0].mxu0
      %v1050 = vadd.f32 %v889, %v1049
      %v1051 = vpop.f32.mrb[0].mxu0
      %1052 = vdwg.mxu0
      %v1053 = vld [vmem:[%s218] sm:$0xff]
      %v1054 = vld [vmem:[%s218 + $0x8] sm:$0xff]
      %v1055 = vld [vmem:[%s218 + $0x10] sm:$0xff]
      %v1056 = vld [vmem:[%s218 + $0x18] sm:$0xff]
      %v1057 = vld [vmem:[%s218 + $0x20] sm:$0xff]
      %v1058 = vld [vmem:[%s218 + $0x28] sm:$0xff]
      %v1059 = vld [vmem:[%s218 + $0x30] sm:$0xff]
      %v1060 = vld [vmem:[%s218 + $0x38] sm:$0xff]
      %v1061 = vld [vmem:[%s218 + $0x40] sm:$0xff]
      %v1062 = vld [vmem:[%s218 + $0x48] sm:$0xff]
      %v1063 = vld [vmem:[%s218 + $0x50] sm:$0xff]
      %v1064 = vld [vmem:[%s218 + $0x58] sm:$0xff]
      %v1065 = vld [vmem:[%s218 + $0x60] sm:$0xff]
      %v1066 = vld [vmem:[%s218 + $0x68] sm:$0xff]
      %v1067 = vld [vmem:[%s218 + $0x70] sm:$0xff]
      %v1068 = vld [vmem:[%s218 + $0x78] sm:$0xff]
      %v1069 = vld [vmem:[%s218 + $0x80] sm:$0xff]
      %v1070 = vld [vmem:[%s218 + $0x88] sm:$0xff]
      %v1071 = vld [vmem:[%s218 + $0x90] sm:$0xff]
      %v1072 = vld [vmem:[%s218 + $0x98] sm:$0xff]
      %v1073 = vld [vmem:[%s218 + $0xa0] sm:$0xff]
      %v1074 = vld [vmem:[%s218 + $0xa8] sm:$0xff]
      %v1075 = vld [vmem:[%s218 + $0xb0] sm:$0xff]
      %v1076 = vld [vmem:[%s218 + $0xb8] sm:$0xff]
      %v1077 = vld [vmem:[%s218 + $0xc0] sm:$0xff]
      %v1078 = vld [vmem:[%s218 + $0xc8] sm:$0xff]
      %v1079 = vld [vmem:[%s218 + $0xd0] sm:$0xff]
      %v1080 = vld [vmem:[%s218 + $0xd8] sm:$0xff]
      %v1081 = vld [vmem:[%s218 + $0xe0] sm:$0xff]
      %v1082 = vld [vmem:[%s218 + $0xe8] sm:$0xff]
      %v1083 = vld [vmem:[%s218 + $0xf0] sm:$0xff]
      %v1084 = vld [vmem:[%s218 + $0xf8] sm:$0xff]
      %v1085 = vadd.f32 %v927, %v1053
      %v1086 = vadd.f32 %v930, %v1054
      %v1087 = vadd.f32 %v935, %v1055
      %v1088 = vadd.f32 %v938, %v1056
      %v1089 = vadd.f32 %v943, %v1057
      %v1090 = vadd.f32 %v946, %v1058
      %v1091 = vadd.f32 %v951, %v1059
      %v1092 = vadd.f32 %v954, %v1060
      %v1093 = vadd.f32 %v959, %v1061
      %v1094 = vadd.f32 %v962, %v1062
      %v1095 = vadd.f32 %v967, %v1063
      %v1096 = vadd.f32 %v970, %v1064
      %v1097 = vadd.f32 %v975, %v1065
      %v1098 = vadd.f32 %v978, %v1066
      %v1099 = vadd.f32 %v983, %v1067
      %v1100 = vadd.f32 %v986, %v1068
      %v1101 = vadd.f32 %v991, %v1069
      %v1102 = vadd.f32 %v994, %v1070
      %v1103 = vadd.f32 %v999, %v1071
      %v1104 = vadd.f32 %v1002, %v1072
      %v1105 = vadd.f32 %v1007, %v1073
      %v1106 = vadd.f32 %v1010, %v1074
      %v1107 = vadd.f32 %v1015, %v1075
      %v1108 = vadd.f32 %v1018, %v1076
      %v1109 = vadd.f32 %v1023, %v1077
      %v1110 = vadd.f32 %v1026, %v1078
      %v1111 = vadd.f32 %v1031, %v1079
      %v1112 = vadd.f32 %v1034, %v1080
      %v1113 = vadd.f32 %v1039, %v1081
      %v1114 = vadd.f32 %v1042, %v1082
      %v1115 = vadd.f32 %v1047, %v1083
      %v1116 = vadd.f32 %v1050, %v1084
      %v1117 = vmax.f32 %v1085, 0.0
      %v1118 = vmax.f32 %v1086, 0.0
      %v1119 = vmax.f32 %v1087, 0.0
      %v1120 = vmax.f32 %v1088, 0.0
      %v1121 = vmax.f32 %v1089, 0.0
      %v1122 = vmax.f32 %v1090, 0.0
      %v1123 = vmax.f32 %v1091, 0.0
      %v1124 = vmax.f32 %v1092, 0.0
      %v1125 = vmax.f32 %v1093, 0.0
      %v1126 = vmax.f32 %v1094, 0.0
      %v1127 = vmax.f32 %v1095, 0.0
      %v1128 = vmax.f32 %v1096, 0.0
      %v1129 = vmax.f32 %v1097, 0.0
      %v1130 = vmax.f32 %v1098, 0.0
      %v1131 = vmax.f32 %v1099, 0.0
      %v1132 = vmax.f32 %v1100, 0.0
      %v1133 = vmax.f32 %v1101, 0.0
      %v1134 = vmax.f32 %v1102, 0.0
      %v1135 = vmax.f32 %v1103, 0.0
      %v1136 = vmax.f32 %v1104, 0.0
      %v1137 = vmax.f32 %v1105, 0.0
      %v1138 = vmax.f32 %v1106, 0.0
      %v1139 = vmax.f32 %v1107, 0.0
      %v1140 = vmax.f32 %v1108, 0.0
      %v1141 = vmax.f32 %v1109, 0.0
      %v1142 = vmax.f32 %v1110, 0.0
      %v1143 = vmax.f32 %v1111, 0.0
      %v1144 = vmax.f32 %v1112, 0.0
      %v1145 = vmax.f32 %v1113, 0.0
      %v1146 = vmax.f32 %v1114, 0.0
      %v1147 = vmax.f32 %v1115, 0.0
      %v1148 = vmax.f32 %v1116, 0.0
      %1149 = vst.msk [vmem:[%s224] sm:$0xff] %vm682, %v1117
      %1150 = vst.msk [vmem:[%s224 + $0x8] sm:$0xff] %vm682, %v1118
      %1151 = vst.msk [vmem:[%s224 + $0x10] sm:$0xff] %vm682, %v1119
      %1152 = vst.msk [vmem:[%s224 + $0x18] sm:$0xff] %vm682, %v1120
      %1153 = vst.msk [vmem:[%s224 + $0x20] sm:$0xff] %vm682, %v1121
      %1154 = vst.msk [vmem:[%s224 + $0x28] sm:$0xff] %vm682, %v1122
      %1155 = vst.msk [vmem:[%s224 + $0x30] sm:$0xff] %vm682, %v1123
      %1156 = vst.msk [vmem:[%s224 + $0x38] sm:$0xff] %vm682, %v1124
      %1157 = vst.msk [vmem:[%s224 + $0x40] sm:$0xff] %vm682, %v1125
      %1158 = vst.msk [vmem:[%s224 + $0x48] sm:$0xff] %vm682, %v1126
      %1159 = vst.msk [vmem:[%s224 + $0x50] sm:$0xff] %vm682, %v1127
      %1160 = vst.msk [vmem:[%s224 + $0x58] sm:$0xff] %vm682, %v1128
      %1161 = vst.msk [vmem:[%s224 + $0x60] sm:$0xff] %vm682, %v1129
      %1162 = vst.msk [vmem:[%s224 + $0x68] sm:$0xff] %vm682, %v1130
      %1163 = vst.msk [vmem:[%s224 + $0x70] sm:$0xff] %vm682, %v1131
      %1164 = vst.msk [vmem:[%s224 + $0x78] sm:$0xff] %vm682, %v1132
      %1165 = vst.msk [vmem:[%s224 + $0x80] sm:$0xff] %vm682, %v1133
      %1166 = vst.msk [vmem:[%s224 + $0x88] sm:$0xff] %vm682, %v1134
      %1167 = vst.msk [vmem:[%s224 + $0x90] sm:$0xff] %vm682, %v1135
      %1168 = vst.msk [vmem:[%s224 + $0x98] sm:$0xff] %vm682, %v1136
      %1169 = vst.msk [vmem:[%s224 + $0xa0] sm:$0xff] %vm682, %v1137
      %1170 = vst.msk [vmem:[%s224 + $0xa8] sm:$0xff] %vm682, %v1138
      %1171 = vst.msk [vmem:[%s224 + $0xb0] sm:$0xff] %vm682, %v1139
      %1172 = vst.msk [vmem:[%s224 + $0xb8] sm:$0xff] %vm682, %v1140
      %1173 = vst.msk [vmem:[%s224 + $0xc0] sm:$0xff] %vm682, %v1141
      %1174 = vst.msk [vmem:[%s224 + $0xc8] sm:$0xff] %vm682, %v1142
      %1175 = vst.msk [vmem:[%s224 + $0xd0] sm:$0xff] %vm682, %v1143
      %1176 = vst.msk [vmem:[%s224 + $0xd8] sm:$0xff] %vm682, %v1144
      %1177 = vst.msk [vmem:[%s224 + $0xe0] sm:$0xff] %vm682, %v1145
      %1178 = vst.msk [vmem:[%s224 + $0xe8] sm:$0xff] %vm682, %v1146
      %1179 = vst.msk [vmem:[%s224 + $0xf0] sm:$0xff] %vm682, %v1147
      %1180 = vst.msk [vmem:[%s224 + $0xf8] sm:$0xff] %vm682, %v1148
      %s1181 = smul.u32 32, %s15
      %p1182 = scmp.lt.s32.totalorder %s1181, 63
      %s1183 = scalar_select %p1182, %s1181, 63
      %s1184 = smul.addr %s1183, 8
      %s1185 = scalar_lea.vmem %s4, %s1184
      // Predicated region
      $region37: #{tsm_resnet_encoder.9} parent=35 // pred_check
        %p1186 = pneg %p127
      $region38: #{tsm_resnet_encoder.9} parent=35 // pred_check_branch
        %1188 = sbr.rel (%p1186) target = $region40
      $region39: #{tsm_resnet_encoder.9} parent=35 // pred_region
        %s1189 = smul.u32 32, %s15
      $region40: #{tsm_resnet_encoder.9} parent=35 // pred_fallthru
        _
    $region36: #{tsm_resnet_encoder.9} parent=5 // pred_fallthru
      _
    %p1190 = scmp.le.s32.totalorder 2, %s10
    // Predicated region
    $region41: #{tsm_resnet_encoder.9} parent=5 // pred_check
      %p1191 = pneg %p1190
    $region42: #{tsm_resnet_encoder.9} parent=5 // pred_check_branch
      %1193 = sbr.rel (%p1191) target = $region44
    $region43: #{tsm_resnet_encoder.9} parent=5 // pred_region
      %s1194 = ssub.s32 %s10, 2
      // Predicated region
      $region45: #{tsm_resnet_encoder.9} parent=43 // pred_check
        %p1195 = pneg %p133
      $region46: #{tsm_resnet_encoder.9} parent=43 // pred_check_branch
        %1197 = sbr.rel (%p1195) target = $region48
      $region47: #{tsm_resnet_encoder.9} parent=43 // pred_region
        %s1198 = smul.u32 32, %s16
        %p1199 = scmp.lt.s32.totalorder %s1198, 63
        %s1200 = scalar_select %p1199, %s1198, 63
        %s1201 = smul.addr %s1200, 8
        %s1202 = scalar_lea.vmem %s4, %s1201
      $region48: #{tsm_resnet_encoder.9} parent=43 // pred_fallthru
        _
    $region44: #{tsm_resnet_encoder.9} parent=5 // pred_fallthru
      _
  $region6: #{tsm_resnet_encoder.9} parent=0 // loop_footer
    %s14 = sadd.s32 1, %s10
  $region7: #{tsm_resnet_encoder.9} parent=0 // loop_footer_branch
    %9 = sbr.rel target = $region3
  $region8: #{tsm_resnet_encoder.9} parent=0 // loop_exit
    _

// kernel: tsm_resnet_encoder.10
$region0: #{tsm_resnet_encoder.10}
  #allocation0 [shape = 'u32[]', space=smem, size = 0x4, offset = 0x4, fixed_abs, tag = 'smem constant byte address 0x4 - core index']
  #allocation1 [shape = 'u32[144,128]{1,0:T(1,128)}', space=vmem, size = 0x12000, scoped, tag = 'internal scratch']
  %s0 = inlined_call_operand.vmem [shape: bf16[128,288], index: 0, kind: input, shape index: {}]
  %s1 = inlined_call_operand.vmem [shape: bf16[288,64], index: 1, kind: input, shape index: {}]
  %s2 = inlined_call_operand.vmem [shape: f32[1,64], index: 2, kind: input, shape index: {}]
  %s3 = inlined_call_operand.vmem [shape: f32[128,64], index: 3, kind: output, shape index: {}]
  %s4 = sld [smem:[#allocation0]]
  $region45: #{tsm_resnet_encoder.10} parent=0
    _
  %s6 = ssub.s32 1, %s4
  %s7 = scalar_select 0, %s6, %s4
  loop: start=0, step=1, limit=4
  $region2: #{tsm_resnet_encoder.10} parent=0 // loop_pre_header
    _
  $region3: #{tsm_resnet_encoder.10} parent=0 // loop_header
    %s9 = sphi 0, %s13
    %p10 = scmp.ge.s32.totalorder %s9, 4
    %s19 = sphi 0, %s21
    %s22 = sphi 0, %s19
    %s23 = sphi 0, %s22
    %s39 = sphi 0, %s23
    %s43 = sphi 0, %s43
    %s45 = sphi 0, %s43
    %s46 = sphi 0, %s45
    %s60 = sphi 0, %s46
    %s64 = sphi 0, %s64
    %s66 = sphi 0, %s64
    %s67 = sphi 0, %s66
    %s81 = sphi 0, %s67
    %s87 = sphi 0, %s89
    %s90 = sphi 0, %s87
    %s91 = sphi 0, %s90
    %s107 = sphi 0, %s91
  $region4: #{tsm_resnet_encoder.10} parent=0 // loop_header_branch
    %12 = sbr.rel (%p10) target = $region8
  $region5: #{tsm_resnet_encoder.10} parent=0 // loop_body
    %s14 = ssub.s32 %s9, 1
    %s15 = ssub.s32 %s9, 2
    %s16 = sadd.s32 %s9, 1
    %s17 = ssub.s32 %s9, %s16
    %p18 = scmp.eq.s32.totalorder %s17, 0
    %s20 = sadd.s32 %s19, 1
    %s21 = scalar_select %p18, %s19, %s20
    %p24 = pneg %p18
    %p25 = scmp.eq.s32.totalorder %s9, 1
    %p26 = por %p24, %p25
    %p27 = scmp.ne.s32.totalorder %s19, %s22
    %p28 = scmp.eq.s32.totalorder %s9, 0
    %p29 = por %p27, %p28
    %p30 = scmp.ne.s32.totalorder %s19, %s22
    %p31 = scmp.eq.s32.totalorder %s14, 1
    %p32 = por %p30, %p31
    %p33 = scmp.ne.s32.totalorder %s22, %s23
    %p34 = scmp.eq.s32.totalorder %s14, 0
    %p35 = por %p33, %p34
    %p36 = scmp.ne.s32.totalorder %s22, %s23
    %p37 = scmp.eq.s32.totalorder %s15, 1
    %p38 = por %p36, %p37
    %p40 = scmp.ne.s32.totalorder %s23, %s39
    %p41 = scmp.eq.s32.totalorder %s15, 0
    %p42 = por %p40, %p41
    %s44 = sadd.s32 %s43, 1
    %p47 = scmp.eq.s32.totalorder %s9, 1
    %p48 = scmp.ne.s32.totalorder %s43, %s45
    %p49 = scmp.eq.s32.totalorder %s9, 0
    %p50 = por %p48, %p49
    %p51 = scmp.ne.s32.totalorder %s43, %s45
    %p52 = scmp.eq.s32.totalorder %s14, 1
    %p53 = por %p51, %p52
    %p54 = scmp.ne.s32.totalorder %s45, %s46
    %p55 = scmp.eq.s32.totalorder %s14, 0
    %p56 = por %p54, %p55
    %p57 = scmp.ne.s32.totalorder %s45, %s46
    %p58 = scmp.eq.s32.totalorder %s15, 1
    %p59 = por %p57, %p58
    %p61 = scmp.ne.s32.totalorder %s46, %s60
    %p62 = scmp.eq.s32.totalorder %s15, 0
    %p63 = por %p61, %p62
    %s65 = sadd.s32 %s64, 1
    %p68 = scmp.eq.s32.totalorder %s9, 1
    %p69 = scmp.ne.s32.totalorder %s64, %s66
    %p70 = scmp.eq.s32.totalorder %s9, 0
    %p71 = por %p69, %p70
    %p72 = scmp.ne.s32.totalorder %s64, %s66
    %p73 = scmp.eq.s32.totalorder %s14, 1
    %p74 = por %p72, %p73
    %p75 = scmp.ne.s32.totalorder %s66, %s67
    %p76 = scmp.eq.s32.totalorder %s14, 0
    %p77 = por %p75, %p76
    %p78 = scmp.ne.s32.totalorder %s66, %s67
    %p79 = scmp.eq.s32.totalorder %s15, 1
    %p80 = por %p78, %p79
    %p82 = scmp.ne.s32.totalorder %s67, %s81
    %p83 = scmp.eq.s32.totalorder %s15, 0
    %p84 = por %p82, %p83
    %s85 = ssub.s32 %s9, %s16
    %p86 = scmp.eq.s32.totalorder %s85, 0
    %s88 = sadd.s32 %s87, 1
    %s89 = scalar_select %p86, %s87, %s88
    %p92 = pneg %p86
    %p93 = scmp.eq.s32.totalorder %s9, 1
    %p94 = por %p92, %p93
    %p95 = scmp.ne.s32.totalorder %s87, %s90
    %p96 = scmp.eq.s32.totalorder %s9, 0
    %p97 = por %p95, %p96
    %p98 = scmp.ne.s32.totalorder %s87, %s90
    %p99 = scmp.eq.s32.totalorder %s14, 1
    %p100 = por %p98, %p99
    %p101 = scmp.ne.s32.totalorder %s90, %s91
    %p102 = scmp.eq.s32.totalorder %s14, 0
    %p103 = por %p101, %p102
    %p104 = scmp.ne.s32.totalorder %s90, %s91
    %p105 = scmp.eq.s32.totalorder %s15, 1
    %p106 = por %p104, %p105
    %p108 = scmp.ne.s32.totalorder %s91, %s107
    %p109 = scmp.eq.s32.totalorder %s15, 0
    %p110 = por %p108, %p109
    %p111 = scmp.le.s32.totalorder 1, %s9
    %p112 = scmp.lt.s32.totalorder %s9, 3
    %p113 = pnand %p111, %p112
    %p114 = pneg %p113
    // Predicated region
    $region9: #{tsm_resnet_encoder.10} parent=5 // pred_check
      _
    $region10: #{tsm_resnet_encoder.10} parent=5 // pred_check_branch
      %116 = sbr.rel (%p113) target = $region12
    $region11: #{tsm_resnet_encoder.10} parent=5 // pred_region
      %s117 = ssub.s32 %s9, 1
      // Predicated region
      $region13: #{tsm_resnet_encoder.10} parent=11 // pred_check
        %p118 = pneg %p56
      $region14: #{tsm_resnet_encoder.10} parent=11 // pred_check_branch
        %120 = sbr.rel (%p118) target = $region16
      $region15: #{tsm_resnet_encoder.10} parent=11 // pred_region
        _
      $region16: #{tsm_resnet_encoder.10} parent=11 // pred_fallthru
        _
      // Predicated region
      $region17: #{tsm_resnet_encoder.10} parent=11 // pred_check
        %p121 = pneg %p77
      $region18: #{tsm_resnet_encoder.10} parent=11 // pred_check_branch
        %123 = sbr.rel (%p121) target = $region20
      $region19: #{tsm_resnet_encoder.10} parent=11 // pred_region
        _
      $region20: #{tsm_resnet_encoder.10} parent=11 // pred_fallthru
        _
    $region12: #{tsm_resnet_encoder.10} parent=5 // pred_fallthru
      _
    %p124 = scmp.lt.s32.totalorder %s9, 2
    // Predicated region
    $region21: #{tsm_resnet_encoder.10} parent=5 // pred_check
      %p125 = pneg %p124
    $region22: #{tsm_resnet_encoder.10} parent=5 // pred_check_branch
      %127 = sbr.rel (%p125) target = $region24
    $region23: #{tsm_resnet_encoder.10} parent=5 // pred_region
      // Predicated region
      $region25: #{tsm_resnet_encoder.10} parent=23 // pred_check
        %p128 = pneg %p29
      $region26: #{tsm_resnet_encoder.10} parent=23 // pred_check_branch
        %130 = sbr.rel (%p128) target = $region28
      $region27: #{tsm_resnet_encoder.10} parent=23 // pred_region
        %s131 = smul.u32 8, %s9
        %p132 = scmp.lt.s32.totalorder %s131, 15
        %s133 = scalar_select %p132, %s131, 15
        %s134 = smul.addr %s133, 3
        %s135 = smul.addr %s134, 4
        %s136 = scalar_lea.vmem %s0, %s135
        %s137 = smul.u32 8, %s9
      $region28: #{tsm_resnet_encoder.10} parent=23 // pred_fallthru
        _
    $region24: #{tsm_resnet_encoder.10} parent=5 // pred_fallthru
      _
    %p138 = scmp.le.s32.totalorder 1, %s9
    %p139 = scmp.lt.s32.totalorder %s9, 3
    %p140 = pnand %p138, %p139
    %p141 = pneg %p140
    // Predicated region
    $region29: #{tsm_resnet_encoder.10} parent=5 // pred_check
      _
    $region30: #{tsm_resnet_encoder.10} parent=5 // pred_check_branch
      %143 = sbr.rel (%p140) target = $region32
    $region31: #{tsm_resnet_encoder.10} parent=5 // pred_region
      %s144 = ssub.s32 %s9, 1
      %s145 = smul.u32 8, %s14
      %p146 = scmp.lt.s32.totalorder %s145, 15
      %s147 = scalar_select %p146, %s145, 15
      %s148 = smul.addr %s147, 3
      %s149 = smul.addr %s148, 4
      %s150 = scalar_lea.vmem %s0, %s149
      %p151 = pneg %p35
      %p152 = pneg %p32
      %p153 = pneg %p56
      %p154 = pneg %p53
      %p155 = pneg %p77
      %p156 = pneg %p74
      %p157 = pneg %p103
      %p158 = pneg %p100
      %s159 = smul.u32 8, %s14
      %p160 = scmp.lt.s32.totalorder %s159, 15
      %s161 = scalar_select %p160, %s159, 15
      %s162 = smul.addr %s161, 8
      %s163 = scalar_lea.vmem %s3, %s162
      %s164 = smul.u32 8, %s14
      %p165 = scmp.lt.s32.totalorder %s164, 15
      %s166 = scalar_select %p165, %s164, 15
      %s167 = smul.addr %s166, 3
      %s168 = smul.addr %s167, 4
      %s169 = scalar_lea.vmem %s0, %s168
      %s170 = smul.u32 8, %s14
      %s171 = smul.u32 8, %s14
      %p172 = scmp.lt.s32.totalorder %s171, 15
      %s173 = scalar_select %p172, %s171, 15
      %s174 = smul.addr %s173, 8
      %s175 = scalar_lea.vmem %s3, %s174
      %s176 = smul.u32 8, %s14
      %v178 = vld [vmem:[%s169] sm:$0xff]
      %v179 = vld [vmem:[%s169 + $0x8] sm:$0xf]
      %v180 = vld [vmem:[%s169 + $0xc] sm:$0xff]
      %v181 = vld [vmem:[%s169 + $0x14] sm:$0xf]
      %v182 = vld [vmem:[%s169 + $0x18] sm:$0xff]
      %v183 = vld [vmem:[%s169 + $0x20] sm:$0xf]
      %v184 = vld [vmem:[%s169 + $0x24] sm:$0xff]
      %v185 = vld [vmem:[%s169 + $0x2c] sm:$0xf]
      %v186 = vld [vmem:[%s169 + $0x30] sm:$0xff]
      %v187 = vld [vmem:[%s169 + $0x38] sm:$0xf]
      %v188 = vld [vmem:[%s169 + $0x3c] sm:$0xff]
      %v189 = vld [vmem:[%s169 + $0x44] sm:$0xf]
      %v190 = vld [vmem:[%s169 + $0x48] sm:$0xff]
      %v191 = vld [vmem:[%s169 + $0x50] sm:$0xf]
      %v192 = vld [vmem:[%s169 + $0x54] sm:$0xff]
      %v193 = vld [vmem:[%s169 + $0x5c] sm:$0xf]
      %v194 = vld [vmem:[%s1] sm:$0xf]
      %v195 = vld [vmem:[%s1 + $0x4] sm:$0xf]
      %v196 = vld [vmem:[%s1 + $0x8] sm:$0xf]
      %v197 = vld [vmem:[%s1 + $0xc] sm:$0xf]
      %v198 = vld [vmem:[%s1 + $0x10] sm:$0xf]
      %v199 = vld [vmem:[%s1 + $0x14] sm:$0xf]
      %v200 = vld [vmem:[%s1 + $0x18] sm:$0xf]
      %v201 = vld [vmem:[%s1 + $0x1c] sm:$0xf]
      %v202 = vld [vmem:[%s1 + $0x20] sm:$0xf]
      %v203 = vld [vmem:[%s1 + $0x24] sm:$0xf]
      %v204 = vld [vmem:[%s1 + $0x28] sm:$0xf]
      %v205 = vld [vmem:[%s1 + $0x2c] sm:$0xf]
      %v206 = vld [vmem:[%s1 + $0x30] sm:$0xf]
      %v207 = vld [vmem:[%s1 + $0x34] sm:$0xf]
      %v208 = vld [vmem:[%s1 + $0x38] sm:$0xf]
      %v209 = vld [vmem:[%s1 + $0x3c] sm:$0xf]
      %v210 = vld [vmem:[%s1 + $0x40] sm:$0xf]
      %v211 = vld [vmem:[%s1 + $0x44] sm:$0xf]
      %v212 = vld [vmem:[%s1 + $0x48] sm:$0xf]
      %v213 = vld [vmem:[%s1 + $0x4c] sm:$0xf]
      %v214 = vld [vmem:[%s1 + $0x50] sm:$0xf]
      %v215 = vld [vmem:[%s1 + $0x54] sm:$0xf]
      %v216 = vld [vmem:[%s1 + $0x58] sm:$0xf]
      %v217 = vld [vmem:[%s1 + $0x5c] sm:$0xf]
      %v218 = vld [vmem:[%s1 + $0x60] sm:$0xf]
      %v219 = vld [vmem:[%s1 + $0x64] sm:$0xf]
      %v220 = vld [vmem:[%s1 + $0x68] sm:$0xf]
      %v221 = vld [vmem:[%s1 + $0x6c] sm:$0xf]
      %v222 = vld [vmem:[%s1 + $0x70] sm:$0xf]
      %v223 = vld [vmem:[%s1 + $0x74] sm:$0xf]
      %v224 = vld [vmem:[%s1 + $0x78] sm:$0xf]
      %v225 = vld [vmem:[%s1 + $0x7c] sm:$0xf]
      %v226 = vld [vmem:[%s1 + $0x80] sm:$0xf]
      %v227 = vld [vmem:[%s1 + $0x84] sm:$0xf]
      %v228 = vld [vmem:[%s1 + $0x88] sm:$0xf]
      %v229 = vld [vmem:[%s1 + $0x8c] sm:$0xf]
      %v230 = vld [vmem:[%s2] sm:$0x1]
      %v232 = vlaneseq
      %v233 = vshrl.u32 %v232, 7
      %v234 = vsub.s32 0, %v233
      %v235 = vrot.slane %v230, %v234
      %v253 = vunpack.c.l.b16 %v178
      %v254 = vunpack.c.h.b16 %v178
      %v255 = vunpack.c.l.b16 %v179
      %v256 = vunpack.c.l.b16 %v180
      %v257 = vunpack.c.h.b16 %v180
      %v258 = vunpack.c.l.b16 %v181
      %v259 = vunpack.c.l.b16 %v182
      %v260 = vunpack.c.h.b16 %v182
      %v261 = vunpack.c.l.b16 %v183
      %v262 = vunpack.c.l.b16 %v184
      %v263 = vunpack.c.h.b16 %v184
      %v264 = vunpack.c.l.b16 %v185
      %v265 = vunpack.c.l.b16 %v186
      %v266 = vunpack.c.h.b16 %v186
      %v267 = vunpack.c.l.b16 %v187
      %v268 = vunpack.c.l.b16 %v188
      %v269 = vunpack.c.h.b16 %v188
      %v270 = vunpack.c.l.b16 %v189
      %v271 = vunpack.c.l.b16 %v190
      %v272 = vunpack.c.h.b16 %v190
      %v273 = vunpack.c.l.b16 %v191
      %v274 = vunpack.c.l.b16 %v192
      %v275 = vunpack.c.h.b16 %v192
      %v276 = vunpack.c.l.b16 %v193
      %v277 = vpack.c.b16 %v256, %v253
      %v278 = vpack.c.b16 %v257, %v254
      %v279 = vpack.c.b16 %v258, %v255
      %v280 = vpack.c.b16 %v262, %v259
      %v281 = vpack.c.b16 %v263, %v260
      %v282 = vpack.c.b16 %v264, %v261
      %v283 = vpack.c.b16 %v268, %v265
      %v284 = vpack.c.b16 %v269, %v266
      %v285 = vpack.c.b16 %v270, %v267
      %v286 = vpack.c.b16 %v274, %v271
      %v287 = vpack.c.b16 %v275, %v272
      %v288 = vpack.c.b16 %v276, %v273
      %v333 = vunpack.c.l.b16 %v194
      %v334 = vunpack.c.l.b16 %v195
      %v335 = vunpack.c.l.b16 %v196
      %v336 = vunpack.c.l.b16 %v197
      %v337 = vunpack.c.l.b16 %v198
      %v338 = vunpack.c.l.b16 %v199
      %v339 = vunpack.c.l.b16 %v200
      %v340 = vunpack.c.l.b16 %v201
      %v341 = vunpack.c.l.b16 %v202
      %v342 = vunpack.c.l.b16 %v203
      %v343 = vunpack.c.l.b16 %v204
      %v344 = vunpack.c.l.b16 %v205
      %v345 = vunpack.c.l.b16 %v206
      %v346 = vunpack.c.l.b16 %v207
      %v347 = vunpack.c.l.b16 %v208
      %v348 = vunpack.c.l.b16 %v209
      %v349 = vunpack.c.l.b16 %v210
      %v350 = vunpack.c.l.b16 %v211
      %v351 = vunpack.c.l.b16 %v212
      %v352 = vunpack.c.l.b16 %v213
      %v353 = vunpack.c.l.b16 %v214
      %v354 = vunpack.c.l.b16 %v215
      %v355 = vunpack.c.l.b16 %v216
      %v356 = vunpack.c.l.b16 %v217
      %v357 = vunpack.c.l.b16 %v218
      %v358 = vunpack.c.l.b16 %v219
      %v359 = vunpack.c.l.b16 %v220
      %v360 = vunpack.c.l.b16 %v221
      %v361 = vunpack.c.l.b16 %v222
      %v362 = vunpack.c.l.b16 %v223
      %v363 = vunpack.c.l.b16 %v224
      %v364 = vunpack.c.l.b16 %v225
      %v365 = vunpack.c.l.b16 %v226
      %v366 = vunpack.c.l.b16 %v227
      %v367 = vunpack.c.l.b16 %v228
      %v368 = vunpack.c.l.b16 %v229
      %v369 = vpack.c.b16 %v334, %v333
      %v370 = vpack.c.b16 %v336, %v335
      %v371 = vpack.c.b16 %v338, %v337
      %v372 = vpack.c.b16 %v340, %v339
      %v373 = vpack.c.b16 %v342, %v341
      %v374 = vpack.c.b16 %v344, %v343
      %v375 = vpack.c.b16 %v346, %v345
      %v376 = vpack.c.b16 %v348, %v347
      %v377 = vpack.c.b16 %v350, %v349
      %v378 = vpack.c.b16 %v352, %v351
      %v379 = vpack.c.b16 %v354, %v353
      %v380 = vpack.c.b16 %v356, %v355
      %v381 = vpack.c.b16 %v358, %v357
      %v382 = vpack.c.b16 %v360, %v359
      %v383 = vpack.c.b16 %v362, %v361
      %v384 = vpack.c.b16 %v364, %v363
      %v385 = vpack.c.b16 %v366, %v365
      %v386 = vpack.c.b16 %v368, %v367
      %vm405 = vcmask 261120
      %v407 = vsel %vm405, %v279, 0
      %v410 = vsel %vm405, %v282, 0
      %v413 = vsel %vm405, %v285, 0
      %v416 = vsel %vm405, %v288, 0
      %418 = vmatprep.subr.bf16.mxu0 0
      %419 = vmatpush1.bf16.msra.mxu0 %v369
      %420 = vmatprep.subr.bf16.mxu0 0
      %421 = vmatpush1.bf16.msra.mxu0 %v370
      %422 = vmatprep.subr.bf16.mxu0 0
      %423 = vmatpush1.bf16.msra.mxu0 %v371
      %424 = vmatprep.subr.bf16.mxu0 0
      %425 = vmatpush1.bf16.msra.mxu0 %v372
      %426 = vmatprep.subr.bf16.mxu0 0
      %427 = vmatpush1.bf16.msra.mxu0 %v373
      %428 = vmatprep.subr.bf16.mxu0 0
      %429 = vmatpush1.bf16.msra.mxu0 %v374
      %430 = vmatprep.subr.bf16.mxu0 0
      %431 = vmatpush1.bf16.msra.mxu0 %v375
      %432 = vmatprep.subr.bf16.mxu0 0
      %433 = vmatpush1.bf16.msra.mxu0 %v376
      %434 = vmatprep.subr.bf16.mxu0 0
      %435 = vmatpush1.bf16.msra.mxu0 %v377
      %436 = vmatprep.subr.bf16.mxu0 0
      %437 = vmatpush1.bf16.msra.mxu0 %v378
      %438 = vmatprep.subr.bf16.mxu0 0
      %439 = vmatpush1.bf16.msra.mxu0 %v379
      %440 = vmatprep.subr.bf16.mxu0 0
      %441 = vmatpush1.bf16.msra.mxu0 %v380
      %442 = vmatprep.subr.bf16.mxu0 0
      %443 = vmatpush1.bf16.msra.mxu0 %v381
      %444 = vmatprep.subr.bf16.mxu0 0
      %445 = vmatpush1.bf16.msra.mxu0 %v382
      %446 = vmatprep.subr.bf16.mxu0 0
      %447 = vmatpush1.bf16.msra.mxu0 %v383
      %448 = vmatprep.subr.bf16.mxu0 0
      %449 = vmatpush1.bf16.msra.mxu0 %v384
      %450 = vmatprep.mubr.bf16.mxu0 %v278
      %451 = vmatmul.mubr.bf16.gmra.mrb[0].mxu0 %v277
      %v452 = vpop.f32.mrb[0].mxu0
      %v453 = vadd.f32 %v235, %v452
      %v454 = vpop.f32.mrb[0].mxu0
      %v455 = vpop.f32.mrb[0].mxu0
      %v456 = vadd.f32 %v235, %v455
      %v457 = vpop.f32.mrb[0].mxu0
      %458 = vmatprep.mubr.bf16.mxu0 %v281
      %459 = vmatmul.mubr.bf16.gmra.mrb[0].mxu0 %v280
      %v460 = vpop.f32.mrb[0].mxu0
      %v461 = vadd.f32 %v235, %v460
      %v462 = vpop.f32.mrb[0].mxu0
      %v463 = vpop.f32.mrb[0].mxu0
      %v464 = vadd.f32 %v235, %v463
      %v465 = vpop.f32.mrb[0].mxu0
      %466 = vmatprep.mubr.bf16.mxu0 %v284
      %467 = vmatmul.mubr.bf16.gmra.mrb[0].mxu0 %v283
      %v468 = vpop.f32.mrb[0].mxu0
      %v469 = vadd.f32 %v235, %v468
      %v470 = vpop.f32.mrb[0].mxu0
      %v471 = vpop.f32.mrb[0].mxu0
      %v472 = vadd.f32 %v235, %v471
      %v473 = vpop.f32.mrb[0].mxu0
      %474 = vmatprep.mubr.bf16.mxu0 %v287
      %475 = vmatmul.mubr.bf16.gmra.mrb[0].mxu0 %v286
      %v476 = vpop.f32.mrb[0].mxu0
      %v477 = vadd.f32 %v235, %v476
      %v478 = vpop.f32.mrb[0].mxu0
      %v479 = vpop.f32.mrb[0].mxu0
      %v480 = vadd.f32 %v235, %v479
      %v481 = vpop.f32.mrb[0].mxu0
      %482 = vdwg.mxu0
      %483 = vmatprep.subr.bf16.mxu0 0
      %484 = vmatpush1.bf16.msra.mxu0 %v385
      %485 = vmatprep.subr.bf16.mxu0 0
      %486 = vmatpush1.bf16.msra.mxu0 %v386
      %487 = vmatprep.subr.bf16.mxu0 0
      %488 = vmatpush1.bf16.msra.mxu0 0
      %489 = vmatprep.subr.bf16.mxu0 0
      %490 = vmatpush1.bf16.msra.mxu0 0
      %491 = vmatprep.subr.bf16.mxu0 0
      %492 = vmatpush1.bf16.msra.mxu0 0
      %493 = vmatprep.subr.bf16.mxu0 0
      %494 = vmatpush1.bf16.msra.mxu0 0
      %495 = vmatprep.subr.bf16.mxu0 0
      %496 = vmatpush1.bf16.msra.mxu0 0
      %497 = vmatprep.subr.bf16.mxu0 0
      %498 = vmatpush1.bf16.msra.mxu0 0
      %499 = vmatprep.subr.bf16.mxu0 0
      %500 = vmatpush1.bf16.msra.mxu0 0
      %501 = vmatprep.subr.bf16.mxu0 0
      %502 = vmatpush1.bf16.msra.mxu0 0
      %503 = vmatprep.subr.bf16.mxu0 0
      %504 = vmatpush1.bf16.msra.mxu0 0
      %505 = vmatprep.subr.bf16.mxu0 0
      %506 = vmatpush1.bf16.msra.mxu0 0
      %507 = vmatprep.subr.bf16.mxu0 0
      %508 = vmatpush1.bf16.msra.mxu0 0
      %509 = vmatprep.subr.bf16.mxu0 0
      %510 = vmatpush1.bf16.msra.mxu0 0
      %511 = vmatprep.subr.bf16.mxu0 0
      %512 = vmatpush1.bf16.msra.mxu0 0
      %513 = vmatprep.subr.bf16.mxu0 0
      %514 = vmatpush1.bf16.msra.mxu0 0
      %515 = vmatprep.mubr.bf16.mxu0 0
      %516 = vmatmul.mubr.bf16.gmra.mrb[0].mxu0 %v407
      %v517 = vpop.f32.mrb[0].mxu0
      %v518 = vadd.f32 %v453, %v517
      %v519 = vpop.f32.mrb[0].mxu0
      %v520 = vpop.f32.mrb[0].mxu0
      %v521 = vadd.f32 %v456, %v520
      %v522 = vpop.f32.mrb[0].mxu0
      %523 = vmatprep.mubr.bf16.mxu0 0
      %524 = vmatmul.mubr.bf16.gmra.mrb[0].mxu0 %v410
      %v525 = vpop.f32.mrb[0].mxu0
      %v526 = vadd.f32 %v461, %v525
      %v527 = vpop.f32.mrb[0].mxu0
      %v528 = vpop.f32.mrb[0].mxu0
      %v529 = vadd.f32 %v464, %v528
      %v530 = vpop.f32.mrb[0].mxu0
      %531 = vmatprep.mubr.bf16.mxu0 0
      %532 = vmatmul.mubr.bf16.gmra.mrb[0].mxu0 %v413
      %v533 = vpop.f32.mrb[0].mxu0
      %v534 = vadd.f32 %v469, %v533
      %v535 = vpop.f32.mrb[0].mxu0
      %v536 = vpop.f32.mrb[0].mxu0
      %v537 = vadd.f32 %v472, %v536
      %v538 = vpop.f32.mrb[0].mxu0
      %539 = vmatprep.mubr.bf16.mxu0 0
      %540 = vmatmul.mubr.bf16.gmra.mrb[0].mxu0 %v416
      %v541 = vpop.f32.mrb[0].mxu0
      %v542 = vadd.f32 %v477, %v541
      %v543 = vpop.f32.mrb[0].mxu0
      %v544 = vpop.f32.mrb[0].mxu0
      %v545 = vadd.f32 %v480, %v544
      %v546 = vpop.f32.mrb[0].mxu0
      %547 = vdwg.mxu0
      %v548 = vmax.f32 %v518, 0.0
      %v549 = vmax.f32 %v521, 0.0
      %v550 = vmax.f32 %v526, 0.0
      %v551 = vmax.f32 %v529, 0.0
      %v552 = vmax.f32 %v534, 0.0
      %v553 = vmax.f32 %v537, 0.0
      %v554 = vmax.f32 %v542, 0.0
      %v555 = vmax.f32 %v545, 0.0
      %vm556 = vcmask 523264
      %557 = vst.msk [vmem:[%s175] sm:$0xff] %vm556, %v548
      %558 = vst.msk [vmem:[%s175 + $0x8] sm:$0xff] %vm556, %v549
      %559 = vst.msk [vmem:[%s175 + $0x10] sm:$0xff] %vm556, %v550
      %560 = vst.msk [vmem:[%s175 + $0x18] sm:$0xff] %vm556, %v551
      %561 = vst.msk [vmem:[%s175 + $0x20] sm:$0xff] %vm556, %v552
      %562 = vst.msk [vmem:[%s175 + $0x28] sm:$0xff] %vm556, %v553
      %563 = vst.msk [vmem:[%s175 + $0x30] sm:$0xff] %vm556, %v554
      %564 = vst.msk [vmem:[%s175 + $0x38] sm:$0xff] %vm556, %v555
      %s565 = smul.u32 8, %s14
      %p566 = scmp.lt.s32.totalorder %s565, 15
      %s567 = scalar_select %p566, %s565, 15
      %s568 = smul.addr %s567, 8
      %s569 = scalar_lea.vmem %s3, %s568
      // Predicated region
      $region33: #{tsm_resnet_encoder.10} parent=31 // pred_check
        %p570 = pneg %p100
      $region34: #{tsm_resnet_encoder.10} parent=31 // pred_check_branch
        %572 = sbr.rel (%p570) target = $region36
      $region35: #{tsm_resnet_encoder.10} parent=31 // pred_region
        %s573 = smul.u32 8, %s14
      $region36: #{tsm_resnet_encoder.10} parent=31 // pred_fallthru
        _
    $region32: #{tsm_resnet_encoder.10} parent=5 // pred_fallthru
      _
    %p574 = scmp.le.s32.totalorder 2, %s9
    // Predicated region
    $region37: #{tsm_resnet_encoder.10} parent=5 // pred_check
      %p575 = pneg %p574
    $region38: #{tsm_resnet_encoder.10} parent=5 // pred_check_branch
      %577 = sbr.rel (%p575) target = $region40
    $region39: #{tsm_resnet_encoder.10} parent=5 // pred_region
      %s578 = ssub.s32 %s9, 2
      // Predicated region
      $region41: #{tsm_resnet_encoder.10} parent=39 // pred_check
        %p579 = pneg %p106
      $region42: #{tsm_resnet_encoder.10} parent=39 // pred_check_branch
        %581 = sbr.rel (%p579) target = $region44
      $region43: #{tsm_resnet_encoder.10} parent=39 // pred_region
        %s582 = smul.u32 8, %s15
        %p583 = scmp.lt.s32.totalorder %s582, 15
        %s584 = scalar_select %p583, %s582, 15
        %s585 = smul.addr %s584, 8
        %s586 = scalar_lea.vmem %s3, %s585
      $region44: #{tsm_resnet_encoder.10} parent=39 // pred_fallthru
        _
    $region40: #{tsm_resnet_encoder.10} parent=5 // pred_fallthru
      _
  $region6: #{tsm_resnet_encoder.10} parent=0 // loop_footer
    %s13 = sadd.s32 1, %s9
  $region7: #{tsm_resnet_encoder.10} parent=0 // loop_footer_branch
    %8 = sbr.rel target = $region3
  $region8: #{tsm_resnet_encoder.10} parent=0 // loop_exit
    _

// kernel: tsm_resnet_encoder.11
$region0: #{tsm_resnet_encoder.11}
  #allocation0 [shape = 'u32[]', space=smem, size = 0x4, offset = 0x4, fixed_abs, tag = 'smem constant byte address 0x4 - core index']
  #allocation1 [shape = 'u32[144,128]{1,0:T(1,128)}', space=vmem, size = 0x12000, scoped, tag = 'internal scratch']
  %s0 = inlined_call_operand.vmem [shape: bf16[128,32], index: 0, kind: input, shape index: {}]
  %s1 = inlined_call_operand.vmem [shape: bf16[32,64], index: 1, kind: input, shape index: {}]
  %s2 = inlined_call_operand.vmem [shape: f32[1,64], index: 2, kind: input, shape index: {}]
  %s3 = inlined_call_operand.vmem [shape: f32[128,64], index: 3, kind: output, shape index: {}]
  %s4 = sld [smem:[#allocation0]]
  $region45: #{tsm_resnet_encoder.11} parent=0
    _
  %s6 = ssub.s32 1, %s4
  %s7 = scalar_select 0, %s6, %s4
  loop: start=0, step=1, limit=4
  $region2: #{tsm_resnet_encoder.11} parent=0 // loop_pre_header
    _
  $region3: #{tsm_resnet_encoder.11} parent=0 // loop_header
    %s9 = sphi 0, %s13
    %p10 = scmp.ge.s32.totalorder %s9, 4
    %s19 = sphi 0, %s21
    %s22 = sphi 0, %s19
    %s23 = sphi 0, %s22
    %s39 = sphi 0, %s23
    %s43 = sphi 0, %s43
    %s45 = sphi 0, %s43
    %s46 = sphi 0, %s45
    %s60 = sphi 0, %s46
    %s64 = sphi 0, %s64
    %s66 = sphi 0, %s64
    %s67 = sphi 0, %s66
    %s81 = sphi 0, %s67
    %s87 = sphi 0, %s89
    %s90 = sphi 0, %s87
    %s91 = sphi 0, %s90
    %s107 = sphi 0, %s91
  $region4: #{tsm_resnet_encoder.11} parent=0 // loop_header_branch
    %12 = sbr.rel (%p10) target = $region8
  $region5: #{tsm_resnet_encoder.11} parent=0 // loop_body
    %s14 = ssub.s32 %s9, 1
    %s15 = ssub.s32 %s9, 2
    %s16 = sadd.s32 %s9, 1
    %s17 = ssub.s32 %s9, %s16
    %p18 = scmp.eq.s32.totalorder %s17, 0
    %s20 = sadd.s32 %s19, 1
    %s21 = scalar_select %p18, %s19, %s20
    %p24 = pneg %p18
    %p25 = scmp.eq.s32.totalorder %s9, 1
    %p26 = por %p24, %p25
    %p27 = scmp.ne.s32.totalorder %s19, %s22
    %p28 = scmp.eq.s32.totalorder %s9, 0
    %p29 = por %p27, %p28
    %p30 = scmp.ne.s32.totalorder %s19, %s22
    %p31 = scmp.eq.s32.totalorder %s14, 1
    %p32 = por %p30, %p31
    %p33 = scmp.ne.s32.totalorder %s22, %s23
    %p34 = scmp.eq.s32.totalorder %s14, 0
    %p35 = por %p33, %p34
    %p36 = scmp.ne.s32.totalorder %s22, %s23
    %p37 = scmp.eq.s32.totalorder %s15, 1
    %p38 = por %p36, %p37
    %p40 = scmp.ne.s32.totalorder %s23, %s39
    %p41 = scmp.eq.s32.totalorder %s15, 0
    %p42 = por %p40, %p41
    %s44 = sadd.s32 %s43, 1
    %p47 = scmp.eq.s32.totalorder %s9, 1
    %p48 = scmp.ne.s32.totalorder %s43, %s45
    %p49 = scmp.eq.s32.totalorder %s9, 0
    %p50 = por %p48, %p49
    %p51 = scmp.ne.s32.totalorder %s43, %s45
    %p52 = scmp.eq.s32.totalorder %s14, 1
    %p53 = por %p51, %p52
    %p54 = scmp.ne.s32.totalorder %s45, %s46
    %p55 = scmp.eq.s32.totalorder %s14, 0
    %p56 = por %p54, %p55
    %p57 = scmp.ne.s32.totalorder %s45, %s46
    %p58 = scmp.eq.s32.totalorder %s15, 1
    %p59 = por %p57, %p58
    %p61 = scmp.ne.s32.totalorder %s46, %s60
    %p62 = scmp.eq.s32.totalorder %s15, 0
    %p63 = por %p61, %p62
    %s65 = sadd.s32 %s64, 1
    %p68 = scmp.eq.s32.totalorder %s9, 1
    %p69 = scmp.ne.s32.totalorder %s64, %s66
    %p70 = scmp.eq.s32.totalorder %s9, 0
    %p71 = por %p69, %p70
    %p72 = scmp.ne.s32.totalorder %s64, %s66
    %p73 = scmp.eq.s32.totalorder %s14, 1
    %p74 = por %p72, %p73
    %p75 = scmp.ne.s32.totalorder %s66, %s67
    %p76 = scmp.eq.s32.totalorder %s14, 0
    %p77 = por %p75, %p76
    %p78 = scmp.ne.s32.totalorder %s66, %s67
    %p79 = scmp.eq.s32.totalorder %s15, 1
    %p80 = por %p78, %p79
    %p82 = scmp.ne.s32.totalorder %s67, %s81
    %p83 = scmp.eq.s32.totalorder %s15, 0
    %p84 = por %p82, %p83
    %s85 = ssub.s32 %s9, %s16
    %p86 = scmp.eq.s32.totalorder %s85, 0
    %s88 = sadd.s32 %s87, 1
    %s89 = scalar_select %p86, %s87, %s88
    %p92 = pneg %p86
    %p93 = scmp.eq.s32.totalorder %s9, 1
    %p94 = por %p92, %p93
    %p95 = scmp.ne.s32.totalorder %s87, %s90
    %p96 = scmp.eq.s32.totalorder %s9, 0
    %p97 = por %p95, %p96
    %p98 = scmp.ne.s32.totalorder %s87, %s90
    %p99 = scmp.eq.s32.totalorder %s14, 1
    %p100 = por %p98, %p99
    %p101 = scmp.ne.s32.totalorder %s90, %s91
    %p102 = scmp.eq.s32.totalorder %s14, 0
    %p103 = por %p101, %p102
    %p104 = scmp.ne.s32.totalorder %s90, %s91
    %p105 = scmp.eq.s32.totalorder %s15, 1
    %p106 = por %p104, %p105
    %p108 = scmp.ne.s32.totalorder %s91, %s107
    %p109 = scmp.eq.s32.totalorder %s15, 0
    %p110 = por %p108, %p109
    %p111 = scmp.le.s32.totalorder 1, %s9
    %p112 = scmp.lt.s32.totalorder %s9, 3
    %p113 = pnand %p111, %p112
    %p114 = pneg %p113
    // Predicated region
    $region9: #{tsm_resnet_encoder.11} parent=5 // pred_check
      _
    $region10: #{tsm_resnet_encoder.11} parent=5 // pred_check_branch
      %116 = sbr.rel (%p113) target = $region12
    $region11: #{tsm_resnet_encoder.11} parent=5 // pred_region
      %s117 = ssub.s32 %s9, 1
      // Predicated region
      $region13: #{tsm_resnet_encoder.11} parent=11 // pred_check
        %p118 = pneg %p56
      $region14: #{tsm_resnet_encoder.11} parent=11 // pred_check_branch
        %120 = sbr.rel (%p118) target = $region16
      $region15: #{tsm_resnet_encoder.11} parent=11 // pred_region
        _
      $region16: #{tsm_resnet_encoder.11} parent=11 // pred_fallthru
        _
      // Predicated region
      $region17: #{tsm_resnet_encoder.11} parent=11 // pred_check
        %p121 = pneg %p77
      $region18: #{tsm_resnet_encoder.11} parent=11 // pred_check_branch
        %123 = sbr.rel (%p121) target = $region20
      $region19: #{tsm_resnet_encoder.11} parent=11 // pred_region
        _
      $region20: #{tsm_resnet_encoder.11} parent=11 // pred_fallthru
        _
    $region12: #{tsm_resnet_encoder.11} parent=5 // pred_fallthru
      _
    %p124 = scmp.lt.s32.totalorder %s9, 2
    // Predicated region
    $region21: #{tsm_resnet_encoder.11} parent=5 // pred_check
      %p125 = pneg %p124
    $region22: #{tsm_resnet_encoder.11} parent=5 // pred_check_branch
      %127 = sbr.rel (%p125) target = $region24
    $region23: #{tsm_resnet_encoder.11} parent=5 // pred_region
      // Predicated region
      $region25: #{tsm_resnet_encoder.11} parent=23 // pred_check
        %p128 = pneg %p29
      $region26: #{tsm_resnet_encoder.11} parent=23 // pred_check_branch
        %130 = sbr.rel (%p128) target = $region28
      $region27: #{tsm_resnet_encoder.11} parent=23 // pred_region
        %s131 = smul.u32 8, %s9
        %p132 = scmp.lt.s32.totalorder %s131, 15
        %s133 = scalar_select %p132, %s131, 15
        %s134 = smul.addr %s133, 4
        %s135 = scalar_lea.vmem %s0, %s134
        %s136 = smul.u32 8, %s9
      $region28: #{tsm_resnet_encoder.11} parent=23 // pred_fallthru
        _
    $region24: #{tsm_resnet_encoder.11} parent=5 // pred_fallthru
      _
    %p137 = scmp.le.s32.totalorder 1, %s9
    %p138 = scmp.lt.s32.totalorder %s9, 3
    %p139 = pnand %p137, %p138
    %p140 = pneg %p139
    // Predicated region
    $region29: #{tsm_resnet_encoder.11} parent=5 // pred_check
      _
    $region30: #{tsm_resnet_encoder.11} parent=5 // pred_check_branch
      %142 = sbr.rel (%p139) target = $region32
    $region31: #{tsm_resnet_encoder.11} parent=5 // pred_region
      %s143 = ssub.s32 %s9, 1
      %s144 = smul.u32 8, %s14
      %p145 = scmp.lt.s32.totalorder %s144, 15
      %s146 = scalar_select %p145, %s144, 15
      %s147 = smul.addr %s146, 4
      %s148 = scalar_lea.vmem %s0, %s147
      %p149 = pneg %p35
      %p150 = pneg %p32
      %p151 = pneg %p56
      %p152 = pneg %p53
      %p153 = pneg %p77
      %p154 = pneg %p74
      %p155 = pneg %p103
      %p156 = pneg %p100
      %s157 = smul.u32 8, %s14
      %p158 = scmp.lt.s32.totalorder %s157, 15
      %s159 = scalar_select %p158, %s157, 15
      %s160 = smul.addr %s159, 8
      %s161 = scalar_lea.vmem %s3, %s160
      %s162 = smul.u32 8, %s14
      %p163 = scmp.lt.s32.totalorder %s162, 15
      %s164 = scalar_select %p163, %s162, 15
      %s165 = smul.addr %s164, 4
      %s166 = scalar_lea.vmem %s0, %s165
      %s167 = smul.u32 8, %s14
      %s168 = smul.u32 8, %s14
      %p169 = scmp.lt.s32.totalorder %s168, 15
      %s170 = scalar_select %p169, %s168, 15
      %s171 = smul.addr %s170, 8
      %s172 = scalar_lea.vmem %s3, %s171
      %s173 = smul.u32 8, %s14
      %v175 = vld [vmem:[%s166] sm:$0xf]
      %v176 = vld [vmem:[%s166 + $0x4] sm:$0xf]
      %v177 = vld [vmem:[%s166 + $0x8] sm:$0xf]
      %v178 = vld [vmem:[%s166 + $0xc] sm:$0xf]
      %v179 = vld [vmem:[%s166 + $0x10] sm:$0xf]
      %v180 = vld [vmem:[%s166 + $0x14] sm:$0xf]
      %v181 = vld [vmem:[%s166 + $0x18] sm:$0xf]
      %v182 = vld [vmem:[%s166 + $0x1c] sm:$0xf]
      %v183 = vld [vmem:[%s1] sm:$0xf]
      %v184 = vld [vmem:[%s1 + $0x4] sm:$0xf]
      %v185 = vld [vmem:[%s1 + $0x8] sm:$0xf]
      %v186 = vld [vmem:[%s1 + $0xc] sm:$0xf]
      %v187 = vld [vmem:[%s2] sm:$0x1]
      %v189 = vlaneseq
      %v190 = vshrl.u32 %v189, 7
      %v191 = vsub.s32 0, %v190
      %v192 = vrot.slane %v187, %v191
      %v202 = vunpack.c.l.b16 %v175
      %v203 = vunpack.c.l.b16 %v176
      %v204 = vunpack.c.l.b16 %v177
      %v205 = vunpack.c.l.b16 %v178
      %v206 = vunpack.c.l.b16 %v179
      %v207 = vunpack.c.l.b16 %v180
      %v208 = vunpack.c.l.b16 %v181
      %v209 = vunpack.c.l.b16 %v182
      %v210 = vpack.c.b16 %v203, %v202
      %v211 = vpack.c.b16 %v205, %v204
      %v212 = vpack.c.b16 %v207, %v206
      %v213 = vpack.c.b16 %v209, %v208
      %v218 = vunpack.c.l.b16 %v183
      %v219 = vunpack.c.l.b16 %v184
      %v220 = vunpack.c.l.b16 %v185
      %v221 = vunpack.c.l.b16 %v186
      %v222 = vpack.c.b16 %v219, %v218
      %v223 = vpack.c.b16 %v221, %v220
      %vm226 = vcmask 261120
      %v228 = vsel %vm226, %v210, 0
      %v231 = vsel %vm226, %v211, 0
      %v234 = vsel %vm226, %v212, 0
      %v237 = vsel %vm226, %v213, 0
      %239 = vmatprep.subr.bf16.mxu0 0
      %240 = vmatpush1.bf16.msra.mxu0 %v222
      %241 = vmatprep.subr.bf16.mxu0 0
      %242 = vmatpush1.bf16.msra.mxu0 %v223
      %243 = vmatprep.subr.bf16.mxu0 0
      %244 = vmatpush1.bf16.msra.mxu0 0
      %245 = vmatprep.subr.bf16.mxu0 0
      %246 = vmatpush1.bf16.msra.mxu0 0
      %247 = vmatprep.subr.bf16.mxu0 0
      %248 = vmatpush1.bf16.msra.mxu0 0
      %249 = vmatprep.subr.bf16.mxu0 0
      %250 = vmatpush1.bf16.msra.mxu0 0
      %251 = vmatprep.subr.bf16.mxu0 0
      %252 = vmatpush1.bf16.msra.mxu0 0
      %253 = vmatprep.subr.bf16.mxu0 0
      %254 = vmatpush1.bf16.msra.mxu0 0
      %255 = vmatprep.subr.bf16.mxu0 0
      %256 = vmatpush1.bf16.msra.mxu0 0
      %257 = vmatprep.subr.bf16.mxu0 0
      %258 = vmatpush1.bf16.msra.mxu0 0
      %259 = vmatprep.subr.bf16.mxu0 0
      %260 = vmatpush1.bf16.msra.mxu0 0
      %261 = vmatprep.subr.bf16.mxu0 0
      %262 = vmatpush1.bf16.msra.mxu0 0
      %263 = vmatprep.subr.bf16.mxu0 0
      %264 = vmatpush1.bf16.msra.mxu0 0
      %265 = vmatprep.subr.bf16.mxu0 0
      %266 = vmatpush1.bf16.msra.mxu0 0
      %267 = vmatprep.subr.bf16.mxu0 0
      %268 = vmatpush1.bf16.msra.mxu0 0
      %269 = vmatprep.subr.bf16.mxu0 0
      %270 = vmatpush1.bf16.msra.mxu0 0
      %271 = vmatprep.mubr.bf16.mxu0 0
      %272 = vmatmul.mubr.bf16.gmra.mrb[0].mxu0 %v228
      %v273 = vpop.f32.mrb[0].mxu0
      %v274 = vadd.f32 %v192, %v273
      %v275 = vpop.f32.mrb[0].mxu0
      %v276 = vpop.f32.mrb[0].mxu0
      %v277 = vadd.f32 %v192, %v276
      %v278 = vpop.f32.mrb[0].mxu0
      %279 = vmatprep.mubr.bf16.mxu0 0
      %280 = vmatmul.mubr.bf16.gmra.mrb[0].mxu0 %v231
      %v281 = vpop.f32.mrb[0].mxu0
      %v282 = vadd.f32 %v192, %v281
      %v283 = vpop.f32.mrb[0].mxu0
      %v284 = vpop.f32.mrb[0].mxu0
      %v285 = vadd.f32 %v192, %v284
      %v286 = vpop.f32.mrb[0].mxu0
      %287 = vmatprep.mubr.bf16.mxu0 0
      %288 = vmatmul.mubr.bf16.gmra.mrb[0].mxu0 %v234
      %v289 = vpop.f32.mrb[0].mxu0
      %v290 = vadd.f32 %v192, %v289
      %v291 = vpop.f32.mrb[0].mxu0
      %v292 = vpop.f32.mrb[0].mxu0
      %v293 = vadd.f32 %v192, %v292
      %v294 = vpop.f32.mrb[0].mxu0
      %295 = vmatprep.mubr.bf16.mxu0 0
      %296 = vmatmul.mubr.bf16.gmra.mrb[0].mxu0 %v237
      %v297 = vpop.f32.mrb[0].mxu0
      %v298 = vadd.f32 %v192, %v297
      %v299 = vpop.f32.mrb[0].mxu0
      %v300 = vpop.f32.mrb[0].mxu0
      %v301 = vadd.f32 %v192, %v300
      %v302 = vpop.f32.mrb[0].mxu0
      %303 = vdwg.mxu0
      %vm304 = vcmask 523264
      %305 = vst.msk [vmem:[%s172] sm:$0xff] %vm304, %v274
      %306 = vst.msk [vmem:[%s172 + $0x8] sm:$0xff] %vm304, %v277
      %307 = vst.msk [vmem:[%s172 + $0x10] sm:$0xff] %vm304, %v282
      %308 = vst.msk [vmem:[%s172 + $0x18] sm:$0xff] %vm304, %v285
      %309 = vst.msk [vmem:[%s172 + $0x20] sm:$0xff] %vm304, %v290
      %310 = vst.msk [vmem:[%s172 + $0x28] sm:$0xff] %vm304, %v293
      %311 = vst.msk [vmem:[%s172 + $0x30] sm:$0xff] %vm304, %v298
      %312 = vst.msk [vmem:[%s172 + $0x38] sm:$0xff] %vm304, %v301
      %s313 = smul.u32 8, %s14
      %p314 = scmp.lt.s32.totalorder %s313, 15
      %s315 = scalar_select %p314, %s313, 15
      %s316 = smul.addr %s315, 8
      %s317 = scalar_lea.vmem %s3, %s316
      // Predicated region
      $region33: #{tsm_resnet_encoder.11} parent=31 // pred_check
        %p318 = pneg %p100
      $region34: #{tsm_resnet_encoder.11} parent=31 // pred_check_branch
        %320 = sbr.rel (%p318) target = $region36
      $region35: #{tsm_resnet_encoder.11} parent=31 // pred_region
        %s321 = smul.u32 8, %s14
      $region36: #{tsm_resnet_encoder.11} parent=31 // pred_fallthru
        _
    $region32: #{tsm_resnet_encoder.11} parent=5 // pred_fallthru
      _
    %p322 = scmp.le.s32.totalorder 2, %s9
    // Predicated region
    $region37: #{tsm_resnet_encoder.11} parent=5 // pred_check
      %p323 = pneg %p322
    $region38: #{tsm_resnet_encoder.11} parent=5 // pred_check_branch
      %325 = sbr.rel (%p323) target = $region40
    $region39: #{tsm_resnet_encoder.11} parent=5 // pred_region
      %s326 = ssub.s32 %s9, 2
      // Predicated region
      $region41: #{tsm_resnet_encoder.11} parent=39 // pred_check
        %p327 = pneg %p106
      $region42: #{tsm_resnet_encoder.11} parent=39 // pred_check_branch
        %329 = sbr.rel (%p327) target = $region44
      $region43: #{tsm_resnet_encoder.11} parent=39 // pred_region
        %s330 = smul.u32 8, %s15
        %p331 = scmp.lt.s32.totalorder %s330, 15
        %s332 = scalar_select %p331, %s330, 15
        %s333 = smul.addr %s332, 8
        %s334 = scalar_lea.vmem %s3, %s333
      $region44: #{tsm_resnet_encoder.11} parent=39 // pred_fallthru
        _
    $region40: #{tsm_resnet_encoder.11} parent=5 // pred_fallthru
      _
  $region6: #{tsm_resnet_encoder.11} parent=0 // loop_footer
    %s13 = sadd.s32 1, %s9
  $region7: #{tsm_resnet_encoder.11} parent=0 // loop_footer_branch
    %8 = sbr.rel target = $region3
  $region8: #{tsm_resnet_encoder.11} parent=0 // loop_exit
    _

// kernel: tsm_resnet_encoder.13
$region0: #{tsm_resnet_encoder.13}
  #allocation0 [shape = 'u32[]', space=smem, size = 0x4, offset = 0x4, fixed_abs, tag = 'smem constant byte address 0x4 - core index']
  #allocation1 [shape = 'u32[144,128]{1,0:T(1,128)}', space=vmem, size = 0x12000, scoped, tag = 'internal scratch']
  %s0 = inlined_call_operand.vmem [shape: f32[8,16,64], index: 0, kind: input, shape index: {}]
  %s1 = inlined_call_operand.vmem [shape: f32[8,1], index: 1, kind: input, shape index: {}]
  %s2 = inlined_call_operand.hbm [shape: f32[8,64], index: 2, kind: output, shape index: {}]
  %s3 = sld [smem:[#allocation0]]
  $region18: #{tsm_resnet_encoder.13} parent=0
    _
  %s5 = ssub.s32 1, %s3
  %s6 = scalar_select 0, %s5, %s3
  $region1: #{tsm_resnet_encoder.13} parent=0
    #allocation2 [shape = 'u8[4096]{0}', space=vmem, size = 0x1000, scoped, tag = 'output window, operand 0, single buffered']
    #allocation3 [shape = 's32[1]{0}', space=sflag, size = 0x4, scoped, tag = 'scoped memory for tsm_resnet_encoder.13']
    %7 = vsyncpa [#allocation3], 0
    // Predicated region
    $region2: #{tsm_resnet_encoder.13} parent=1 // pred_check
      _
    $region3: #{tsm_resnet_encoder.13} parent=1 // pred_check_branch
      %9 = sbr.rel (0) target = $region5
    $region4: #{tsm_resnet_encoder.13} parent=1 // pred_region
      _
    $region5: #{tsm_resnet_encoder.13} parent=1 // pred_fallthru
      _
    // Predicated region
    $region6: #{tsm_resnet_encoder.13} parent=1 // pred_check
      _
    $region7: #{tsm_resnet_encoder.13} parent=1 // pred_check_branch
      %11 = sbr.rel (0) target = $region9
    $region8: #{tsm_resnet_encoder.13} parent=1 // pred_region
      _
    $region9: #{tsm_resnet_encoder.13} parent=1 // pred_fallthru
      _
    %v12 = vld [vmem:[%s0] sm:$0xff]
    %v13 = vld [vmem:[%s0 + $0x8] sm:$0xff]
    %v14 = vld [vmem:[%s0 + $0x10] sm:$0xff]
    %v15 = vld [vmem:[%s0 + $0x18] sm:$0xff]
    %v16 = vld [vmem:[%s0 + $0x20] sm:$0xff]
    %v17 = vld [vmem:[%s0 + $0x28] sm:$0xff]
    %v18 = vld [vmem:[%s0 + $0x30] sm:$0xff]
    %v19 = vld [vmem:[%s0 + $0x38] sm:$0xff]
    %v20 = vld [vmem:[%s0 + $0x40] sm:$0xff]
    %v21 = vld [vmem:[%s0 + $0x48] sm:$0xff]
    %v22 = vld [vmem:[%s0 + $0x50] sm:$0xff]
    %v23 = vld [vmem:[%s0 + $0x58] sm:$0xff]
    %v24 = vld [vmem:[%s0 + $0x60] sm:$0xff]
    %v25 = vld [vmem:[%s0 + $0x68] sm:$0xff]
    %v26 = vld [vmem:[%s0 + $0x70] sm:$0xff]
    %v27 = vld [vmem:[%s0 + $0x78] sm:$0xff]
    %vm28 = vcmask 523264
    %v29 = vsel %vm28, %v12, 0.0
    %v30 = vsel %vm28, %v13, 0.0
    %v31 = vadd.f32 %v29, %v30
    %v32 = vrot.slane %v31, 4
    %v33 = vadd.f32 %v31, %v32
    %v34 = vrot.slane %v33, 2
    %v35 = vadd.f32 %v33, %v34
    %v36 = vrot.slane %v35, 1
    %v37 = vadd.f32 %v35, %v36
    %v38 = vsel %vm28, %v14, 0.0
    %v39 = vsel %vm28, %v15, 0.0
    %v40 = vadd.f32 %v38, %v39
    %v41 = vrot.slane %v40, 4
    %v42 = vadd.f32 %v40, %v41
    %v43 = vrot.slane %v42, 2
    %v44 = vadd.f32 %v42, %v43
    %v45 = vrot.slane %v44, 1
    %v46 = vadd.f32 %v44, %v45
    %v47 = vsel %vm28, %v16, 0.0
    %v48 = vsel %vm28, %v17, 0.0
    %v49 = vadd.f32 %v47, %v48
    %v50 = vrot.slane %v49, 4
    %v51 = vadd.f32 %v49, %v50
    %v52 = vrot.slane %v51, 2
    %v53 = vadd.f32 %v51, %v52
    %v54 = vrot.slane %v53, 1
    %v55 = vadd.f32 %v53, %v54
    %v56 = vsel %vm28, %v18, 0.0
    %v57 = vsel %vm28, %v19, 0.0
    %v58 = vadd.f32 %v56, %v57
    %v59 = vrot.slane %v58, 4
    %v60 = vadd.f32 %v58, %v59
    %v61 = vrot.slane %v60, 2
    %v62 = vadd.f32 %v60, %v61
    %v63 = vrot.slane %v62, 1
    %v64 = vadd.f32 %v62, %v63
    %v65 = vsel %vm28, %v20, 0.0
    %v66 = vsel %vm28, %v21, 0.0
    %v67 = vadd.f32 %v65, %v66
    %v68 = vrot.slane %v67, 4
    %v69 = vadd.f32 %v67, %v68
    %v70 = vrot.slane %v69, 2
    %v71 = vadd.f32 %v69, %v70
    %v72 = vrot.slane %v71, 1
    %v73 = vadd.f32 %v71, %v72
    %v74 = vsel %vm28, %v22, 0.0
    %v75 = vsel %vm28, %v23, 0.0
    %v76 = vadd.f32 %v74, %v75
    %v77 = vrot.slane %v76, 4
    %v78 = vadd.f32 %v76, %v77
    %v79 = vrot.slane %v78, 2
    %v80 = vadd.f32 %v78, %v79
    %v81 = vrot.slane %v80, 1
    %v82 = vadd.f32 %v80, %v81
    %v83 = vsel %vm28, %v24, 0.0
    %v84 = vsel %vm28, %v25, 0.0
    %v85 = vadd.f32 %v83, %v84
    %v86 = vrot.slane %v85, 4
    %v87 = vadd.f32 %v85, %v86
    %v88 = vrot.slane %v87, 2
    %v89 = vadd.f32 %v87, %v88
    %v90 = vrot.slane %v89, 1
    %v91 = vadd.f32 %v89, %v90
    %v92 = vsel %vm28, %v26, 0.0
    %v93 = vsel %vm28, %v27, 0.0
    %v94 = vadd.f32 %v92, %v93
    %v95 = vrot.slane %v94, 4
    %v96 = vadd.f32 %v94, %v95
    %v97 = vrot.slane %v96, 2
    %v98 = vadd.f32 %v96, %v97
    %v99 = vrot.slane %v98, 1
    %v100 = vadd.f32 %v98, %v99
    %v101 = vrcp.pop 16.0
    %v102 = vmul.f32 %v37, %v101
    %v103 = vmul.f32 %v46, %v101
    %v104 = vmul.f32 %v55, %v101
    %v105 = vmul.f32 %v64, %v101
    %v106 = vmul.f32 %v73, %v101
    %v107 = vmul.f32 %v82, %v101
    %v108 = vmul.f32 %v91, %v101
    %v109 = vmul.f32 %v100, %v101
    %v110 = vld [vmem:[%s1] sm:$0xff]
    %112 = vset.pattern.permute.xlu0 0
    %113 = vperm.xlu0 %112, %v110
    %v114 = vpop.permute.xlu0 %113
    %v115 = vrot.slane %v114, 1
    %v116 = vrot.slane %v114, 2
    %v117 = vrot.slane %v114, 3
    %v118 = vrot.slane %v114, 4
    %v119 = vrot.slane %v114, 5
    %v120 = vrot.slane %v114, 6
    %v121 = vrot.slane %v114, 7
    %v130 = vmul.f32 %v102, %v114
    %v131 = vmul.f32 %v103, %v115
    %v132 = vmul.f32 %v104, %v116
    %v133 = vmul.f32 %v105, %v117
    %v134 = vmul.f32 %v106, %v118
    %v135 = vmul.f32 %v107, %v119
    %v136 = vmul.f32 %v108, %v120
    %v137 = vmul.f32 %v109, %v121
    %v146 = vrot.slane %v131, 7
    %vm147 = vcmask 1041409
    %v148 = vsel %vm147, %v146, %v130
    %v149 = vrot.slane %v132, 6
    %vm150 = vcmask 1042434
    %v151 = vsel %vm150, %v149, %v148
    %v152 = vrot.slane %v133, 5
    %vm153 = vcmask 1043459
    %v154 = vsel %vm153, %v152, %v151
    %v155 = vrot.slane %v134, 4
    %vm156 = vcmask 1044484
    %v157 = vsel %vm156, %v155, %v154
    %v158 = vrot.slane %v135, 3
    %vm159 = vcmask 1045509
    %v160 = vsel %vm159, %v158, %v157
    %v161 = vrot.slane %v136, 2
    %vm162 = vcmask 1046534
    %v163 = vsel %vm162, %v161, %v160
    %v164 = vrot.slane %v137, 1
    %vm165 = vcmask 1047559
    %v166 = vsel %vm165, %v164, %v163
    %168 = vst.msk [vmem:[#allocation2] sm:$0xff] %vm28, %v166
    // Predicated region
    $region10: #{tsm_resnet_encoder.13} parent=1 // pred_check
      _
    $region11: #{tsm_resnet_encoder.13} parent=1 // pred_check_branch
      %170 = sbr.rel (0) target = $region13
    $region12: #{tsm_resnet_encoder.13} parent=1 // pred_region
      %s172 = ssub.s32 128, 128
      %173 = vsyncadd [#allocation3], %s172
      %s175 = sshll.u32 [#allocation2], 4
      %s176 = int_to_ptr.vmem [resolvable:$true] %s175
      %178 = dma.vmem_to_hbm [thread:$0]  %s176, 128, %s2, [#allocation3]
    $region13: #{tsm_resnet_encoder.13} parent=1 // pred_fallthru
      _
    // Predicated region
    $region14: #{tsm_resnet_encoder.13} parent=1 // pred_check
      _
    $region15: #{tsm_resnet_encoder.13} parent=1 // pred_check_branch
      %180 = sbr.rel (0) target = $region17
    $region16: #{tsm_resnet_encoder.13} parent=1 // pred_region
      %181 = dma.done [#allocation3], 128
    $region17: #{tsm_resnet_encoder.13} parent=1 // pred_fallthru
      _
    %182 = vsyncpa [#allocation3], 1

// kernel: tsm_resnet_encoder.12
$region0: #{tsm_resnet_encoder.12}
  #allocation0 [shape = 'u32[]', space=smem, size = 0x4, offset = 0x4, fixed_abs, tag = 'smem constant byte address 0x4 - core index']
  #allocation1 [shape = 'u32[144,128]{1,0:T(1,128)}', space=vmem, size = 0x12000, scoped, tag = 'internal scratch']
  %s0 = inlined_call_operand.vmem [shape: bf16[128,576], index: 0, kind: input, shape index: {}]
  %s1 = inlined_call_operand.vmem [shape: bf16[576,64], index: 1, kind: input, shape index: {}]
  %s2 = inlined_call_operand.vmem [shape: f32[1,64], index: 2, kind: input, shape index: {}]
  %s3 = inlined_call_operand.vmem [shape: f32[128,64], index: 3, kind: input, shape index: {}]
  %s4 = inlined_call_operand.vmem [shape: f32[128,64], index: 4, kind: output, shape index: {}]
  %s5 = sld [smem:[#allocation0]]
  $region49: #{tsm_resnet_encoder.12} parent=0
    _
  %s7 = ssub.s32 1, %s5
  %s8 = scalar_select 0, %s7, %s5
  loop: start=0, step=1, limit=4
  $region2: #{tsm_resnet_encoder.12} parent=0 // loop_pre_header
    _
  $region3: #{tsm_resnet_encoder.12} parent=0 // loop_header
    %s10 = sphi 0, %s14
    %p11 = scmp.ge.s32.totalorder %s10, 4
    %s20 = sphi 0, %s22
    %s23 = sphi 0, %s20
    %s24 = sphi 0, %s23
    %s40 = sphi 0, %s24
    %s44 = sphi 0, %s44
    %s46 = sphi 0, %s44
    %s47 = sphi 0, %s46
    %s61 = sphi 0, %s47
    %s65 = sphi 0, %s65
    %s67 = sphi 0, %s65
    %s68 = sphi 0, %s67
    %s82 = sphi 0, %s68
    %s88 = sphi 0, %s90
    %s91 = sphi 0, %s88
    %s92 = sphi 0, %s91
    %s108 = sphi 0, %s92
    %s114 = sphi 0, %s116
    %s117 = sphi 0, %s114
    %s118 = sphi 0, %s117
    %s134 = sphi 0, %s118
  $region4: #{tsm_resnet_encoder.12} parent=0 // loop_header_branch
    %13 = sbr.rel (%p11) target = $region8
  $region5: #{tsm_resnet_encoder.12} parent=0 // loop_body
    %s15 = ssub.s32 %s10, 1
    %s16 = ssub.s32 %s10, 2
    %s17 = sadd.s32 %s10, 1
    %s18 = ssub.s32 %s10, %s17
    %p19 = scmp.eq.s32.totalorder %s18, 0
    %s21 = sadd.s32 %s20, 1
    %s22 = scalar_select %p19, %s20, %s21
    %p25 = pneg %p19
    %p26 = scmp.eq.s32.totalorder %s10, 1
    %p27 = por %p25, %p26
    %p28 = scmp.ne.s32.totalorder %s20, %s23
    %p29 = scmp.eq.s32.totalorder %s10, 0
    %p30 = por %p28, %p29
    %p31 = scmp.ne.s32.totalorder %s20, %s23
    %p32 = scmp.eq.s32.totalorder %s15, 1
    %p33 = por %p31, %p32
    %p34 = scmp.ne.s32.totalorder %s23, %s24
    %p35 = scmp.eq.s32.totalorder %s15, 0
    %p36 = por %p34, %p35
    %p37 = scmp.ne.s32.totalorder %s23, %s24
    %p38 = scmp.eq.s32.totalorder %s16, 1
    %p39 = por %p37, %p38
    %p41 = scmp.ne.s32.totalorder %s24, %s40
    %p42 = scmp.eq.s32.totalorder %s16, 0
    %p43 = por %p41, %p42
    %s45 = sadd.s32 %s44, 1
    %p48 = scmp.eq.s32.totalorder %s10, 1
    %p49 = scmp.ne.s32.totalorder %s44, %s46
    %p50 = scmp.eq.s32.totalorder %s10, 0
    %p51 = por %p49, %p50
    %p52 = scmp.ne.s32.totalorder %s44, %s46
    %p53 = scmp.eq.s32.totalorder %s15, 1
    %p54 = por %p52, %p53
    %p55 = scmp.ne.s32.totalorder %s46, %s47
    %p56 = scmp.eq.s32.totalorder %s15, 0
    %p57 = por %p55, %p56
    %p58 = scmp.ne.s32.totalorder %s46, %s47
    %p59 = scmp.eq.s32.totalorder %s16, 1
    %p60 = por %p58, %p59
    %p62 = scmp.ne.s32.totalorder %s47, %s61
    %p63 = scmp.eq.s32.totalorder %s16, 0
    %p64 = por %p62, %p63
    %s66 = sadd.s32 %s65, 1
    %p69 = scmp.eq.s32.totalorder %s10, 1
    %p70 = scmp.ne.s32.totalorder %s65, %s67
    %p71 = scmp.eq.s32.totalorder %s10, 0
    %p72 = por %p70, %p71
    %p73 = scmp.ne.s32.totalorder %s65, %s67
    %p74 = scmp.eq.s32.totalorder %s15, 1
    %p75 = por %p73, %p74
    %p76 = scmp.ne.s32.totalorder %s67, %s68
    %p77 = scmp.eq.s32.totalorder %s15, 0
    %p78 = por %p76, %p77
    %p79 = scmp.ne.s32.totalorder %s67, %s68
    %p80 = scmp.eq.s32.totalorder %s16, 1
    %p81 = por %p79, %p80
    %p83 = scmp.ne.s32.totalorder %s68, %s82
    %p84 = scmp.eq.s32.totalorder %s16, 0
    %p85 = por %p83, %p84
    %s86 = ssub.s32 %s10, %s17
    %p87 = scmp.eq.s32.totalorder %s86, 0
    %s89 = sadd.s32 %s88, 1
    %s90 = scalar_select %p87, %s88, %s89
    %p93 = pneg %p87
    %p94 = scmp.eq.s32.totalorder %s10, 1
    %p95 = por %p93, %p94
    %p96 = scmp.ne.s32.totalorder %s88, %s91
    %p97 = scmp.eq.s32.totalorder %s10, 0
    %p98 = por %p96, %p97
    %p99 = scmp.ne.s32.totalorder %s88, %s91
    %p100 = scmp.eq.s32.totalorder %s15, 1
    %p101 = por %p99, %p100
    %p102 = scmp.ne.s32.totalorder %s91, %s92
    %p103 = scmp.eq.s32.totalorder %s15, 0
    %p104 = por %p102, %p103
    %p105 = scmp.ne.s32.totalorder %s91, %s92
    %p106 = scmp.eq.s32.totalorder %s16, 1
    %p107 = por %p105, %p106
    %p109 = scmp.ne.s32.totalorder %s92, %s108
    %p110 = scmp.eq.s32.totalorder %s16, 0
    %p111 = por %p109, %p110
    %s112 = ssub.s32 %s10, %s17
    %p113 = scmp.eq.s32.totalorder %s112, 0
    %s115 = sadd.s32 %s114, 1
    %s116 = scalar_select %p113, %s114, %s115
    %p119 = pneg %p113
    %p120 = scmp.eq.s32.totalorder %s10, 1
    %p121 = por %p119, %p120
    %p122 = scmp.ne.s32.totalorder %s114, %s117
    %p123 = scmp.eq.s32.totalorder %s10, 0
    %p124 = por %p122, %p123
    %p125 = scmp.ne.s32.totalorder %s114, %s117
    %p126 = scmp.eq.s32.totalorder %s15, 1
    %p127 = por %p125, %p126
    %p128 = scmp.ne.s32.totalorder %s117, %s118
    %p129 = scmp.eq.s32.totalorder %s15, 0
    %p130 = por %p128, %p129
    %p131 = scmp.ne.s32.totalorder %s117, %s118
    %p132 = scmp.eq.s32.totalorder %s16, 1
    %p133 = por %p131, %p132
    %p135 = scmp.ne.s32.totalorder %s118, %s134
    %p136 = scmp.eq.s32.totalorder %s16, 0
    %p137 = por %p135, %p136
    %p138 = scmp.le.s32.totalorder 1, %s10
    %p139 = scmp.lt.s32.totalorder %s10, 3
    %p140 = pnand %p138, %p139
    %p141 = pneg %p140
    // Predicated region
    $region9: #{tsm_resnet_encoder.12} parent=5 // pred_check
      _
    $region10: #{tsm_resnet_encoder.12} parent=5 // pred_check_branch
      %143 = sbr.rel (%p140) target = $region12
    $region11: #{tsm_resnet_encoder.12} parent=5 // pred_region
      %s144 = ssub.s32 %s10, 1
      // Predicated region
      $region13: #{tsm_resnet_encoder.12} parent=11 // pred_check
        %p145 = pneg %p57
      $region14: #{tsm_resnet_encoder.12} parent=11 // pred_check_branch
        %147 = sbr.rel (%p145) target = $region16
      $region15: #{tsm_resnet_encoder.12} parent=11 // pred_region
        _
      $region16: #{tsm_resnet_encoder.12} parent=11 // pred_fallthru
        _
      // Predicated region
      $region17: #{tsm_resnet_encoder.12} parent=11 // pred_check
        %p148 = pneg %p78
      $region18: #{tsm_resnet_encoder.12} parent=11 // pred_check_branch
        %150 = sbr.rel (%p148) target = $region20
      $region19: #{tsm_resnet_encoder.12} parent=11 // pred_region
        _
      $region20: #{tsm_resnet_encoder.12} parent=11 // pred_fallthru
        _
    $region12: #{tsm_resnet_encoder.12} parent=5 // pred_fallthru
      _
    %p151 = scmp.lt.s32.totalorder %s10, 2
    // Predicated region
    $region21: #{tsm_resnet_encoder.12} parent=5 // pred_check
      %p152 = pneg %p151
    $region22: #{tsm_resnet_encoder.12} parent=5 // pred_check_branch
      %154 = sbr.rel (%p152) target = $region24
    $region23: #{tsm_resnet_encoder.12} parent=5 // pred_region
      // Predicated region
      $region25: #{tsm_resnet_encoder.12} parent=23 // pred_check
        %p155 = pneg %p30
      $region26: #{tsm_resnet_encoder.12} parent=23 // pred_check_branch
        %157 = sbr.rel (%p155) target = $region28
      $region27: #{tsm_resnet_encoder.12} parent=23 // pred_region
        %s158 = smul.u32 8, %s10
        %p159 = scmp.lt.s32.totalorder %s158, 15
        %s160 = scalar_select %p159, %s158, 15
        %s161 = smul.addr %s160, 5
        %s162 = smul.addr %s161, 4
        %s163 = scalar_lea.vmem %s0, %s162
        %s164 = smul.u32 8, %s10
      $region28: #{tsm_resnet_encoder.12} parent=23 // pred_fallthru
        _
      // Predicated region
      $region29: #{tsm_resnet_encoder.12} parent=23 // pred_check
        %p165 = pneg %p98
      $region30: #{tsm_resnet_encoder.12} parent=23 // pred_check_branch
        %167 = sbr.rel (%p165) target = $region32
      $region31: #{tsm_resnet_encoder.12} parent=23 // pred_region
        %s168 = smul.u32 8, %s10
        %p169 = scmp.lt.s32.totalorder %s168, 15
        %s170 = scalar_select %p169, %s168, 15
        %s171 = smul.addr %s170, 8
        %s172 = scalar_lea.vmem %s3, %s171
        %s173 = smul.u32 8, %s10
      $region32: #{tsm_resnet_encoder.12} parent=23 // pred_fallthru
        _
    $region24: #{tsm_resnet_encoder.12} parent=5 // pred_fallthru
      _
    %p174 = scmp.le.s32.totalorder 1, %s10
    %p175 = scmp.lt.s32.totalorder %s10, 3
    %p176 = pnand %p174, %p175
    %p177 = pneg %p176
    // Predicated region
    $region33: #{tsm_resnet_encoder.12} parent=5 // pred_check
      _
    $region34: #{tsm_resnet_encoder.12} parent=5 // pred_check_branch
      %179 = sbr.rel (%p176) target = $region36
    $region35: #{tsm_resnet_encoder.12} parent=5 // pred_region
      %s180 = ssub.s32 %s10, 1
      %s181 = smul.u32 8, %s15
      %p182 = scmp.lt.s32.totalorder %s181, 15
      %s183 = scalar_select %p182, %s181, 15
      %s184 = smul.addr %s183, 5
      %s185 = smul.addr %s184, 4
      %s186 = scalar_lea.vmem %s0, %s185
      %p187 = pneg %p36
      %p188 = pneg %p33
      %p189 = pneg %p57
      %p190 = pneg %p54
      %p191 = pneg %p78
      %p192 = pneg %p75
      %s193 = smul.u32 8, %s15
      %p194 = scmp.lt.s32.totalorder %s193, 15
      %s195 = scalar_select %p194, %s193, 15
      %s196 = smul.addr %s195, 8
      %s197 = scalar_lea.vmem %s3, %s196
      %p198 = pneg %p104
      %p199 = pneg %p101
      %p200 = pneg %p130
      %p201 = pneg %p127
      %s202 = smul.u32 8, %s15
      %p203 = scmp.lt.s32.totalorder %s202, 15
      %s204 = scalar_select %p203, %s202, 15
      %s205 = smul.addr %s204, 8
      %s206 = scalar_lea.vmem %s4, %s205
      %s207 = smul.u32 8, %s15
      %p208 = scmp.lt.s32.totalorder %s207, 15
      %s209 = scalar_select %p208, %s207, 15
      %s210 = smul.addr %s209, 5
      %s211 = smul.addr %s210, 4
      %s212 = scalar_lea.vmem %s0, %s211
      %s213 = smul.u32 8, %s15
      %s214 = smul.u32 8, %s15
      %p215 = scmp.lt.s32.totalorder %s214, 15
      %s216 = scalar_select %p215, %s214, 15
      %s217 = smul.addr %s216, 8
      %s218 = scalar_lea.vmem %s3, %s217
      %s219 = smul.u32 8, %s15
      %s220 = smul.u32 8, %s15
      %p221 = scmp.lt.s32.totalorder %s220, 15
      %s222 = scalar_select %p221, %s220, 15
      %s223 = smul.addr %s222, 8
      %s224 = scalar_lea.vmem %s4, %s223
      %s225 = smul.u32 8, %s15
      %v227 = vld [vmem:[%s212] sm:$0xff]
      %v228 = vld [vmem:[%s212 + $0x8] sm:$0xff]
      %v229 = vld [vmem:[%s212 + $0x10] sm:$0xf]
      %v230 = vld [vmem:[%s212 + $0x14] sm:$0xff]
      %v231 = vld [vmem:[%s212 + $0x1c] sm:$0xff]
      %v232 = vld [vmem:[%s212 + $0x24] sm:$0xf]
      %v233 = vld [vmem:[%s212 + $0x28] sm:$0xff]
      %v234 = vld [vmem:[%s212 + $0x30] sm:$0xff]
      %v235 = vld [vmem:[%s212 + $0x38] sm:$0xf]
      %v236 = vld [vmem:[%s212 + $0x3c] sm:$0xff]
      %v237 = vld [vmem:[%s212 + $0x44] sm:$0xff]
      %v238 = vld [vmem:[%s212 + $0x4c] sm:$0xf]
      %v239 = vld [vmem:[%s212 + $0x50] sm:$0xff]
      %v240 = vld [vmem:[%s212 + $0x58] sm:$0xff]
      %v241 = vld [vmem:[%s212 + $0x60] sm:$0xf]
      %v242 = vld [vmem:[%s212 + $0x64] sm:$0xff]
      %v243 = vld [vmem:[%s212 + $0x6c] sm:$0xff]
      %v244 = vld [vmem:[%s212 + $0x74] sm:$0xf]
      %v245 = vld [vmem:[%s212 + $0x78] sm:$0xff]
      %v246 = vld [vmem:[%s212 + $0x80] sm:$0xff]
      %v247 = vld [vmem:[%s212 + $0x88] sm:$0xf]
      %v248 = vld [vmem:[%s212 + $0x8c] sm:$0xff]
      %v249 = vld [vmem:[%s212 + $0x94] sm:$0xff]
      %v250 = vld [vmem:[%s212 + $0x9c] sm:$0xf]
      %v251 = vld [vmem:[%s1] sm:$0xf]
      %v252 = vld [vmem:[%s1 + $0x4] sm:$0xf]
      %v253 = vld [vmem:[%s1 + $0x8] sm:$0xf]
      %v254 = vld [vmem:[%s1 + $0xc] sm:$0xf]
      %v255 = vld [vmem:[%s1 + $0x10] sm:$0xf]
      %v256 = vld [vmem:[%s1 + $0x14] sm:$0xf]
      %v257 = vld [vmem:[%s1 + $0x18] sm:$0xf]
      %v258 = vld [vmem:[%s1 + $0x1c] sm:$0xf]
      %v259 = vld [vmem:[%s1 + $0x20] sm:$0xf]
      %v260 = vld [vmem:[%s1 + $0x24] sm:$0xf]
      %v261 = vld [vmem:[%s1 + $0x28] sm:$0xf]
      %v262 = vld [vmem:[%s1 + $0x2c] sm:$0xf]
      %v263 = vld [vmem:[%s1 + $0x30] sm:$0xf]
      %v264 = vld [vmem:[%s1 + $0x34] sm:$0xf]
      %v265 = vld [vmem:[%s1 + $0x38] sm:$0xf]
      %v266 = vld [vmem:[%s1 + $0x3c] sm:$0xf]
      %v267 = vld [vmem:[%s1 + $0x40] sm:$0xf]
      %v268 = vld [vmem:[%s1 + $0x44] sm:$0xf]
      %v269 = vld [vmem:[%s1 + $0x48] sm:$0xf]
      %v270 = vld [vmem:[%s1 + $0x4c] sm:$0xf]
      %v271 = vld [vmem:[%s1 + $0x50] sm:$0xf]
      %v272 = vld [vmem:[%s1 + $0x54] sm:$0xf]
      %v273 = vld [vmem:[%s1 + $0x58] sm:$0xf]
      %v274 = vld [vmem:[%s1 + $0x5c] sm:$0xf]
      %v275 = vld [vmem:[%s1 + $0x60] sm:$0xf]
      %v276 = vld [vmem:[%s1 + $0x64] sm:$0xf]
      %v277 = vld [vmem:[%s1 + $0x68] sm:$0xf]
      %v278 = vld [vmem:[%s1 + $0x6c] sm:$0xf]
      %v279 = vld [vmem:[%s1 + $0x70] sm:$0xf]
      %v280 = vld [vmem:[%s1 + $0x74] sm:$0xf]
      %v281 = vld [vmem:[%s1 + $0x78] sm:$0xf]
      %v282 = vld [vmem:[%s1 + $0x7c] sm:$0xf]
      %v283 = vld [vmem:[%s1 + $0x80] sm:$0xf]
      %v284 = vld [vmem:[%s1 + $0x84] sm:$0xf]
      %v285 = vld [vmem:[%s1 + $0x88] sm:$0xf]
      %v286 = vld [vmem:[%s1 + $0x8c] sm:$0xf]
      %v287 = vld [vmem:[%s1 + $0x90] sm:$0xf]
      %v288 = vld [vmem:[%s1 + $0x94] sm:$0xf]
      %v289 = vld [vmem:[%s1 + $0x98] sm:$0xf]
      %v290 = vld [vmem:[%s1 + $0x9c] sm:$0xf]
      %v291 = vld [vmem:[%s1 + $0xa0] sm:$0xf]
      %v292 = vld [vmem:[%s1 + $0xa4] sm:$0xf]
      %v293 = vld [vmem:[%s1 + $0xa8] sm:$0xf]
      %v294 = vld [vmem:[%s1 + $0xac] sm:$0xf]
      %v295 = vld [vmem:[%s1 + $0xb0] sm:$0xf]
      %v296 = vld [vmem:[%s1 + $0xb4] sm:$0xf]
      %v297 = vld [vmem:[%s1 + $0xb8] sm:$0xf]
      %v298 = vld [vmem:[%s1 + $0xbc] sm:$0xf]
      %v299 = vld [vmem:[%s1 + $0xc0] sm:$0xf]
      %v300 = vld [vmem:[%s1 + $0xc4] sm:$0xf]
      %v301 = vld [vmem:[%s1 + $0xc8] sm:$0xf]
      %v302 = vld [vmem:[%s1 + $0xcc] sm:$0xf]
      %v303 = vld [vmem:[%s1 + $0xd0] sm:$0xf]
      %v304 = vld [vmem:[%s1 + $0xd4] sm:$0xf]
      %v305 = vld [vmem:[%s1 + $0xd8] sm:$0xf]
      %v306 = vld [vmem:[%s1 + $0xdc] sm:$0xf]
      %v307 = vld [vmem:[%s1 + $0xe0] sm:$0xf]
      %v308 = vld [vmem:[%s1 + $0xe4] sm:$0xf]
      %v309 = vld [vmem:[%s1 + $0xe8] sm:$0xf]
      %v310 = vld [vmem:[%s1 + $0xec] sm:$0xf]
      %v311 = vld [vmem:[%s1 + $0xf0] sm:$0xf]
      %v312 = vld [vmem:[%s1 + $0xf4] sm:$0xf]
      %v313 = vld [vmem:[%s1 + $0xf8] sm:$0xf]
      %v314 = vld [vmem:[%s1 + $0xfc] sm:$0xf]
      %v315 = vld [vmem:[%s1 + $0x100] sm:$0xf]
      %v316 = vld [vmem:[%s1 + $0x104] sm:$0xf]
      %v317 = vld [vmem:[%s1 + $0x108] sm:$0xf]
      %v318 = vld [vmem:[%s1 + $0x10c] sm:$0xf]
      %v319 = vld [vmem:[%s1 + $0x110] sm:$0xf]
      %v320 = vld [vmem:[%s1 + $0x114] sm:$0xf]
      %v321 = vld [vmem:[%s1 + $0x118] sm:$0xf]
      %v322 = vld [vmem:[%s1 + $0x11c] sm:$0xf]
      %v323 = vld [vmem:[%s2] sm:$0x1]
      %v325 = vlaneseq
      %v326 = vshrl.u32 %v325, 7
      %v327 = vsub.s32 0, %v326
      %v328 = vrot.slane %v323, %v327
      %v354 = vunpack.c.l.b16 %v227
      %v355 = vunpack.c.h.b16 %v227
      %v356 = vunpack.c.l.b16 %v228
      %v357 = vunpack.c.h.b16 %v228
      %v358 = vunpack.c.l.b16 %v229
      %v359 = vunpack.c.l.b16 %v230
      %v360 = vunpack.c.h.b16 %v230
      %v361 = vunpack.c.l.b16 %v231
      %v362 = vunpack.c.h.b16 %v231
      %v363 = vunpack.c.l.b16 %v232
      %v364 = vunpack.c.l.b16 %v233
      %v365 = vunpack.c.h.b16 %v233
      %v366 = vunpack.c.l.b16 %v234
      %v367 = vunpack.c.h.b16 %v234
      %v368 = vunpack.c.l.b16 %v235
      %v369 = vunpack.c.l.b16 %v236
      %v370 = vunpack.c.h.b16 %v236
      %v371 = vunpack.c.l.b16 %v237
      %v372 = vunpack.c.h.b16 %v237
      %v373 = vunpack.c.l.b16 %v238
      %v374 = vunpack.c.l.b16 %v239
      %v375 = vunpack.c.h.b16 %v239
      %v376 = vunpack.c.l.b16 %v240
      %v377 = vunpack.c.h.b16 %v240
      %v378 = vunpack.c.l.b16 %v241
      %v379 = vunpack.c.l.b16 %v242
      %v380 = vunpack.c.h.b16 %v242
      %v381 = vunpack.c.l.b16 %v243
      %v382 = vunpack.c.h.b16 %v243
      %v383 = vunpack.c.l.b16 %v244
      %v384 = vunpack.c.l.b16 %v245
      %v385 = vunpack.c.h.b16 %v245
      %v386 = vunpack.c.l.b16 %v246
      %v387 = vunpack.c.h.b16 %v246
      %v388 = vunpack.c.l.b16 %v247
      %v389 = vunpack.c.l.b16 %v248
      %v390 = vunpack.c.h.b16 %v248
      %v391 = vunpack.c.l.b16 %v249
      %v392 = vunpack.c.h.b16 %v249
      %v393 = vunpack.c.l.b16 %v250
      %v394 = vpack.c.b16 %v359, %v354
      %v395 = vpack.c.b16 %v360, %v355
      %v396 = vpack.c.b16 %v361, %v356
      %v397 = vpack.c.b16 %v362, %v357
      %v398 = vpack.c.b16 %v363, %v358
      %v399 = vpack.c.b16 %v369, %v364
      %v400 = vpack.c.b16 %v370, %v365
      %v401 = vpack.c.b16 %v371, %v366
      %v402 = vpack.c.b16 %v372, %v367
      %v403 = vpack.c.b16 %v373, %v368
      %v404 = vpack.c.b16 %v379, %v374
      %v405 = vpack.c.b16 %v380, %v375
      %v406 = vpack.c.b16 %v381, %v376
      %v407 = vpack.c.b16 %v382, %v377
      %v408 = vpack.c.b16 %v383, %v378
      %v409 = vpack.c.b16 %v389, %v384
      %v410 = vpack.c.b16 %v390, %v385
      %v411 = vpack.c.b16 %v391, %v386
      %v412 = vpack.c.b16 %v392, %v387
      %v413 = vpack.c.b16 %v393, %v388
      %v502 = vunpack.c.l.b16 %v251
      %v503 = vunpack.c.l.b16 %v252
      %v504 = vunpack.c.l.b16 %v253
      %v505 = vunpack.c.l.b16 %v254
      %v506 = vunpack.c.l.b16 %v255
      %v507 = vunpack.c.l.b16 %v256
      %v508 = vunpack.c.l.b16 %v257
      %v509 = vunpack.c.l.b16 %v258
      %v510 = vunpack.c.l.b16 %v259
      %v511 = vunpack.c.l.b16 %v260
      %v512 = vunpack.c.l.b16 %v261
      %v513 = vunpack.c.l.b16 %v262
      %v514 = vunpack.c.l.b16 %v263
      %v515 = vunpack.c.l.b16 %v264
      %v516 = vunpack.c.l.b16 %v265
      %v517 = vunpack.c.l.b16 %v266
      %v518 = vunpack.c.l.b16 %v267
      %v519 = vunpack.c.l.b16 %v268
      %v520 = vunpack.c.l.b16 %v269
      %v521 = vunpack.c.l.b16 %v270
      %v522 = vunpack.c.l.b16 %v271
      %v523 = vunpack.c.l.b16 %v272
      %v524 = vunpack.c.l.b16 %v273
      %v525 = vunpack.c.l.b16 %v274
      %v526 = vunpack.c.l.b16 %v275
      %v527 = vunpack.c.l.b16 %v276
      %v528 = vunpack.c.l.b16 %v277
      %v529 = vunpack.c.l.b16 %v278
      %v530 = vunpack.c.l.b16 %v279
      %v531 = vunpack.c.l.b16 %v280
      %v532 = vunpack.c.l.b16 %v281
      %v533 = vunpack.c.l.b16 %v282
      %v534 = vunpack.c.l.b16 %v283
      %v535 = vunpack.c.l.b16 %v284
      %v536 = vunpack.c.l.b16 %v285
      %v537 = vunpack.c.l.b16 %v286
      %v538 = vunpack.c.l.b16 %v287
      %v539 = vunpack.c.l.b16 %v288
      %v540 = vunpack.c.l.b16 %v289
      %v541 = vunpack.c.l.b16 %v290
      %v542 = vunpack.c.l.b16 %v291
      %v543 = vunpack.c.l.b16 %v292
      %v544 = vunpack.c.l.b16 %v293
      %v545 = vunpack.c.l.b16 %v294
      %v546 = vunpack.c.l.b16 %v295
      %v547 = vunpack.c.l.b16 %v296
      %v548 = vunpack.c.l.b16 %v297
      %v549 = vunpack.c.l.b16 %v298
      %v550 = vunpack.c.l.b16 %v299
      %v551 = vunpack.c.l.b16 %v300
      %v552 = vunpack.c.l.b16 %v301
      %v553 = vunpack.c.l.b16 %v302
      %v554 = vunpack.c.l.b16 %v303
      %v555 = vunpack.c.l.b16 %v304
      %v556 = vunpack.c.l.b16 %v305
      %v557 = vunpack.c.l.b16 %v306
      %v558 = vunpack.c.l.b16 %v307
      %v559 = vunpack.c.l.b16 %v308
      %v560 = vunpack.c.l.b16 %v309
      %v561 = vunpack.c.l.b16 %v310
      %v562 = vunpack.c.l.b16 %v311
      %v563 = vunpack.c.l.b16 %v312
      %v564 = vunpack.c.l.b16 %v313
      %v565 = vunpack.c.l.b16 %v314
      %v566 = vunpack.c.l.b16 %v315
      %v567 = vunpack.c.l.b16 %v316
      %v568 = vunpack.c.l.b16 %v317
      %v569 = vunpack.c.l.b16 %v318
      %v570 = vunpack.c.l.b16 %v319
      %v571 = vunpack.c.l.b16 %v320
      %v572 = vunpack.c.l.b16 %v321
      %v573 = vunpack.c.l.b16 %v322
      %v574 = vpack.c.b16 %v503, %v502
      %v575 = vpack.c.b16 %v505, %v504
      %v576 = vpack.c.b16 %v507, %v506
      %v577 = vpack.c.b16 %v509, %v508
      %v578 = vpack.c.b16 %v511, %v510
      %v579 = vpack.c.b16 %v513, %v512
      %v580 = vpack.c.b16 %v515, %v514
      %v581 = vpack.c.b16 %v517, %v516
      %v582 = vpack.c.b16 %v519, %v518
      %v583 = vpack.c.b16 %v521, %v520
      %v584 = vpack.c.b16 %v523, %v522
      %v585 = vpack.c.b16 %v525, %v524
      %v586 = vpack.c.b16 %v527, %v526
      %v587 = vpack.c.b16 %v529, %v528
      %v588 = vpack.c.b16 %v531, %v530
      %v589 = vpack.c.b16 %v533, %v532
      %v590 = vpack.c.b16 %v535, %v534
      %v591 = vpack.c.b16 %v537, %v536
      %v592 = vpack.c.b16 %v539, %v538
      %v593 = vpack.c.b16 %v541, %v540
      %v594 = vpack.c.b16 %v543, %v542
      %v595 = vpack.c.b16 %v545, %v544
      %v596 = vpack.c.b16 %v547, %v546
      %v597 = vpack.c.b16 %v549, %v548
      %v598 = vpack.c.b16 %v551, %v550
      %v599 = vpack.c.b16 %v553, %v552
      %v600 = vpack.c.b16 %v555, %v554
      %v601 = vpack.c.b16 %v557, %v556
      %v602 = vpack.c.b16 %v559, %v558
      %v603 = vpack.c.b16 %v561, %v560
      %v604 = vpack.c.b16 %v563, %v562
      %v605 = vpack.c.b16 %v565, %v564
      %v606 = vpack.c.b16 %v567, %v566
      %v607 = vpack.c.b16 %v569, %v568
      %v608 = vpack.c.b16 %v571, %v570
      %v609 = vpack.c.b16 %v573, %v572
      %vm646 = vcmask 523264
      %v648 = vsel %vm646, %v398, 0
      %v651 = vsel %vm646, %v403, 0
      %v654 = vsel %vm646, %v408, 0
      %v657 = vsel %vm646, %v413, 0
      %659 = vmatprep.subr.bf16.mxu0 0
      %660 = vmatpush1.bf16.msra.mxu0 %v574
      %661 = vmatprep.subr.bf16.mxu0 0
      %662 = vmatpush1.bf16.msra.mxu0 %v575
      %663 = vmatprep.subr.bf16.mxu0 0
      %664 = vmatpush1.bf16.msra.mxu0 %v576
      %665 = vmatprep.subr.bf16.mxu0 0
      %666 = vmatpush1.bf16.msra.mxu0 %v577
      %667 = vmatprep.subr.bf16.mxu0 0
      %668 = vmatpush1.bf16.msra.mxu0 %v578
      %669 = vmatprep.subr.bf16.mxu0 0
      %670 = vmatpush1.bf16.msra.mxu0 %v579
      %671 = vmatprep.subr.bf16.mxu0 0
      %672 = vmatpush1.bf16.msra.mxu0 %v580
      %673 = vmatprep.subr.bf16.mxu0 0
      %674 = vmatpush1.bf16.msra.mxu0 %v581
      %675 = vmatprep.subr.bf16.mxu0 0
      %676 = vmatpush1.bf16.msra.mxu0 %v582
      %677 = vmatprep.subr.bf16.mxu0 0
      %678 = vmatpush1.bf16.msra.mxu0 %v583
      %679 = vmatprep.subr.bf16.mxu0 0
      %680 = vmatpush1.bf16.msra.mxu0 %v584
      %681 = vmatprep.subr.bf16.mxu0 0
      %682 = vmatpush1.bf16.msra.mxu0 %v585
      %683 = vmatprep.subr.bf16.mxu0 0
      %684 = vmatpush1.bf16.msra.mxu0 %v586
      %685 = vmatprep.subr.bf16.mxu0 0
      %686 = vmatpush1.bf16.msra.mxu0 %v587
      %687 = vmatprep.subr.bf16.mxu0 0
      %688 = vmatpush1.bf16.msra.mxu0 %v588
      %689 = vmatprep.subr.bf16.mxu0 0
      %690 = vmatpush1.bf16.msra.mxu0 %v589
      %691 = vmatprep.mubr.bf16.mxu0 %v395
      %692 = vmatmul.mubr.bf16.gmra.mrb[0].mxu0 %v394
      %v693 = vpop.f32.mrb[0].mxu0
      %v694 = vadd.f32 %v328, %v693
      %v695 = vpop.f32.mrb[0].mxu0
      %v696 = vpop.f32.mrb[0].mxu0
      %v697 = vadd.f32 %v328, %v696
      %v698 = vpop.f32.mrb[0].mxu0
      %699 = vmatprep.mubr.bf16.mxu0 %v400
      %700 = vmatmul.mubr.bf16.gmra.mrb[0].mxu0 %v399
      %v701 = vpop.f32.mrb[0].mxu0
      %v702 = vadd.f32 %v328, %v701
      %v703 = vpop.f32.mrb[0].mxu0
      %v704 = vpop.f32.mrb[0].mxu0
      %v705 = vadd.f32 %v328, %v704
      %v706 = vpop.f32.mrb[0].mxu0
      %707 = vmatprep.mubr.bf16.mxu0 %v405
      %708 = vmatmul.mubr.bf16.gmra.mrb[0].mxu0 %v404
      %v709 = vpop.f32.mrb[0].mxu0
      %v710 = vadd.f32 %v328, %v709
      %v711 = vpop.f32.mrb[0].mxu0
      %v712 = vpop.f32.mrb[0].mxu0
      %v713 = vadd.f32 %v328, %v712
      %v714 = vpop.f32.mrb[0].mxu0
      %715 = vmatprep.mubr.bf16.mxu0 %v410
      %716 = vmatmul.mubr.bf16.gmra.mrb[0].mxu0 %v409
      %v717 = vpop.f32.mrb[0].mxu0
      %v718 = vadd.f32 %v328, %v717
      %v719 = vpop.f32.mrb[0].mxu0
      %v720 = vpop.f32.mrb[0].mxu0
      %v721 = vadd.f32 %v328, %v720
      %v722 = vpop.f32.mrb[0].mxu0
      %723 = vdwg.mxu0
      %724 = vmatprep.subr.bf16.mxu0 0
      %725 = vmatpush1.bf16.msra.mxu0 %v590
      %726 = vmatprep.subr.bf16.mxu0 0
      %727 = vmatpush1.bf16.msra.mxu0 %v591
      %728 = vmatprep.subr.bf16.mxu0 0
      %729 = vmatpush1.bf16.msra.mxu0 %v592
      %730 = vmatprep.subr.bf16.mxu0 0
      %731 = vmatpush1.bf16.msra.mxu0 %v593
      %732 = vmatprep.subr.bf16.mxu0 0
      %733 = vmatpush1.bf16.msra.mxu0 %v594
      %734 = vmatprep.subr.bf16.mxu0 0
      %735 = vmatpush1.bf16.msra.mxu0 %v595
      %736 = vmatprep.subr.bf16.mxu0 0
      %737 = vmatpush1.bf16.msra.mxu0 %v596
      %738 = vmatprep.subr.bf16.mxu0 0
      %739 = vmatpush1.bf16.msra.mxu0 %v597
      %740 = vmatprep.subr.bf16.mxu0 0
      %741 = vmatpush1.bf16.msra.mxu0 %v598
      %742 = vmatprep.subr.bf16.mxu0 0
      %743 = vmatpush1.bf16.msra.mxu0 %v599
      %744 = vmatprep.subr.bf16.mxu0 0
      %745 = vmatpush1.bf16.msra.mxu0 %v600
      %746 = vmatprep.subr.bf16.mxu0 0
      %747 = vmatpush1.bf16.msra.mxu0 %v601
      %748 = vmatprep.subr.bf16.mxu0 0
      %749 = vmatpush1.bf16.msra.mxu0 %v602
      %750 = vmatprep.subr.bf16.mxu0 0
      %751 = vmatpush1.bf16.msra.mxu0 %v603
      %752 = vmatprep.subr.bf16.mxu0 0
      %753 = vmatpush1.bf16.msra.mxu0 %v604
      %754 = vmatprep.subr.bf16.mxu0 0
      %755 = vmatpush1.bf16.msra.mxu0 %v605
      %756 = vmatprep.mubr.bf16.mxu0 %v397
      %757 = vmatmul.mubr.bf16.gmra.mrb[0].mxu0 %v396
      %v758 = vpop.f32.mrb[0].mxu0
      %v759 = vadd.f32 %v694, %v758
      %v760 = vpop.f32.mrb[0].mxu0
      %v761 = vpop.f32.mrb[0].mxu0
      %v762 = vadd.f32 %v697, %v761
      %v763 = vpop.f32.mrb[0].mxu0
      %764 = vmatprep.mubr.bf16.mxu0 %v402
      %765 = vmatmul.mubr.bf16.gmra.mrb[0].mxu0 %v401
      %v766 = vpop.f32.mrb[0].mxu0
      %v767 = vadd.f32 %v702, %v766
      %v768 = vpop.f32.mrb[0].mxu0
      %v769 = vpop.f32.mrb[0].mxu0
      %v770 = vadd.f32 %v705, %v769
      %v771 = vpop.f32.mrb[0].mxu0
      %772 = vmatprep.mubr.bf16.mxu0 %v407
      %773 = vmatmul.mubr.bf16.gmra.mrb[0].mxu0 %v406
      %v774 = vpop.f32.mrb[0].mxu0
      %v775 = vadd.f32 %v710, %v774
      %v776 = vpop.f32.mrb[0].mxu0
      %v777 = vpop.f32.mrb[0].mxu0
      %v778 = vadd.f32 %v713, %v777
      %v779 = vpop.f32.mrb[0].mxu0
      %780 = vmatprep.mubr.bf16.mxu0 %v412
      %781 = vmatmul.mubr.bf16.gmra.mrb[0].mxu0 %v411
      %v782 = vpop.f32.mrb[0].mxu0
      %v783 = vadd.f32 %v718, %v782
      %v784 = vpop.f32.mrb[0].mxu0
      %v785 = vpop.f32.mrb[0].mxu0
      %v786 = vadd.f32 %v721, %v785
      %v787 = vpop.f32.mrb[0].mxu0
      %788 = vdwg.mxu0
      %789 = vmatprep.subr.bf16.mxu0 0
      %790 = vmatpush1.bf16.msra.mxu0 %v606
      %791 = vmatprep.subr.bf16.mxu0 0
      %792 = vmatpush1.bf16.msra.mxu0 %v607
      %793 = vmatprep.subr.bf16.mxu0 0
      %794 = vmatpush1.bf16.msra.mxu0 %v608
      %795 = vmatprep.subr.bf16.mxu0 0
      %796 = vmatpush1.bf16.msra.mxu0 %v609
      %797 = vmatprep.subr.bf16.mxu0 0
      %798 = vmatpush1.bf16.msra.mxu0 0
      %799 = vmatprep.subr.bf16.mxu0 0
      %800 = vmatpush1.bf16.msra.mxu0 0
      %801 = vmatprep.subr.bf16.mxu0 0
      %802 = vmatpush1.bf16.msra.mxu0 0
      %803 = vmatprep.subr.bf16.mxu0 0
      %804 = vmatpush1.bf16.msra.mxu0 0
      %805 = vmatprep.subr.bf16.mxu0 0
      %806 = vmatpush1.bf16.msra.mxu0 0
      %807 = vmatprep.subr.bf16.mxu0 0
      %808 = vmatpush1.bf16.msra.mxu0 0
      %809 = vmatprep.subr.bf16.mxu0 0
      %810 = vmatpush1.bf16.msra.mxu0 0
      %811 = vmatprep.subr.bf16.mxu0 0
      %812 = vmatpush1.bf16.msra.mxu0 0
      %813 = vmatprep.subr.bf16.mxu0 0
      %814 = vmatpush1.bf16.msra.mxu0 0
      %815 = vmatprep.subr.bf16.mxu0 0
      %816 = vmatpush1.bf16.msra.mxu0 0
      %817 = vmatprep.subr.bf16.mxu0 0
      %818 = vmatpush1.bf16.msra.mxu0 0
      %819 = vmatprep.subr.bf16.mxu0 0
      %820 = vmatpush1.bf16.msra.mxu0 0
      %821 = vmatprep.mubr.bf16.mxu0 0
      %822 = vmatmul.mubr.bf16.gmra.mrb[0].mxu0 %v648
      %v823 = vpop.f32.mrb[0].mxu0
      %v824 = vadd.f32 %v759, %v823
      %v825 = vpop.f32.mrb[0].mxu0
      %v826 = vpop.f32.mrb[0].mxu0
      %v827 = vadd.f32 %v762, %v826
      %v828 = vpop.f32.mrb[0].mxu0
      %829 = vmatprep.mubr.bf16.mxu0 0
      %830 = vmatmul.mubr.bf16.gmra.mrb[0].mxu0 %v651
      %v831 = vpop.f32.mrb[0].mxu0
      %v832 = vadd.f32 %v767, %v831
      %v833 = vpop.f32.mrb[0].mxu0
      %v834 = vpop.f32.mrb[0].mxu0
      %v835 = vadd.f32 %v770, %v834
      %v836 = vpop.f32.mrb[0].mxu0
      %837 = vmatprep.mubr.bf16.mxu0 0
      %838 = vmatmul.mubr.bf16.gmra.mrb[0].mxu0 %v654
      %v839 = vpop.f32.mrb[0].mxu0
      %v840 = vadd.f32 %v775, %v839
      %v841 = vpop.f32.mrb[0].mxu0
      %v842 = vpop.f32.mrb[0].mxu0
      %v843 = vadd.f32 %v778, %v842
      %v844 = vpop.f32.mrb[0].mxu0
      %845 = vmatprep.mubr.bf16.mxu0 0
      %846 = vmatmul.mubr.bf16.gmra.mrb[0].mxu0 %v657
      %v847 = vpop.f32.mrb[0].mxu0
      %v848 = vadd.f32 %v783, %v847
      %v849 = vpop.f32.mrb[0].mxu0
      %v850 = vpop.f32.mrb[0].mxu0
      %v851 = vadd.f32 %v786, %v850
      %v852 = vpop.f32.mrb[0].mxu0
      %853 = vdwg.mxu0
      %v854 = vld [vmem:[%s218] sm:$0xff]
      %v855 = vld [vmem:[%s218 + $0x8] sm:$0xff]
      %v856 = vld [vmem:[%s218 + $0x10] sm:$0xff]
      %v857 = vld [vmem:[%s218 + $0x18] sm:$0xff]
      %v858 = vld [vmem:[%s218 + $0x20] sm:$0xff]
      %v859 = vld [vmem:[%s218 + $0x28] sm:$0xff]
      %v860 = vld [vmem:[%s218 + $0x30] sm:$0xff]
      %v861 = vld [vmem:[%s218 + $0x38] sm:$0xff]
      %v862 = vadd.f32 %v824, %v854
      %v863 = vadd.f32 %v827, %v855
      %v864 = vadd.f32 %v832, %v856
      %v865 = vadd.f32 %v835, %v857
      %v866 = vadd.f32 %v840, %v858
      %v867 = vadd.f32 %v843, %v859
      %v868 = vadd.f32 %v848, %v860
      %v869 = vadd.f32 %v851, %v861
      %v870 = vmax.f32 %v862, 0.0
      %v871 = vmax.f32 %v863, 0.0
      %v872 = vmax.f32 %v864, 0.0
      %v873 = vmax.f32 %v865, 0.0
      %v874 = vmax.f32 %v866, 0.0
      %v875 = vmax.f32 %v867, 0.0
      %v876 = vmax.f32 %v868, 0.0
      %v877 = vmax.f32 %v869, 0.0
      %878 = vst.msk [vmem:[%s224] sm:$0xff] %vm646, %v870
      %879 = vst.msk [vmem:[%s224 + $0x8] sm:$0xff] %vm646, %v871
      %880 = vst.msk [vmem:[%s224 + $0x10] sm:$0xff] %vm646, %v872
      %881 = vst.msk [vmem:[%s224 + $0x18] sm:$0xff] %vm646, %v873
      %882 = vst.msk [vmem:[%s224 + $0x20] sm:$0xff] %vm646, %v874
      %883 = vst.msk [vmem:[%s224 + $0x28] sm:$0xff] %vm646, %v875
      %884 = vst.msk [vmem:[%s224 + $0x30] sm:$0xff] %vm646, %v876
      %885 = vst.msk [vmem:[%s224 + $0x38] sm:$0xff] %vm646, %v877
      %s886 = smul.u32 8, %s15
      %p887 = scmp.lt.s32.totalorder %s886, 15
      %s888 = scalar_select %p887, %s886, 15
      %s889 = smul.addr %s888, 8
      %s890 = scalar_lea.vmem %s4, %s889
      // Predicated region
      $region37: #{tsm_resnet_encoder.12} parent=35 // pred_check
        %p891 = pneg %p127
      $region38: #{tsm_resnet_encoder.12} parent=35 // pred_check_branch
        %893 = sbr.rel (%p891) target = $region40
      $region39: #{tsm_resnet_encoder.12} parent=35 // pred_region
        %s894 = smul.u32 8, %s15
      $region40: #{tsm_resnet_encoder.12} parent=35 // pred_fallthru
        _
    $region36: #{tsm_resnet_encoder.12} parent=5 // pred_fallthru
      _
    %p895 = scmp.le.s32.totalorder 2, %s10
    // Predicated region
    $region41: #{tsm_resnet_encoder.12} parent=5 // pred_check
      %p896 = pneg %p895
    $region42: #{tsm_resnet_encoder.12} parent=5 // pred_check_branch
      %898 = sbr.rel (%p896) target = $region44
    $region43: #{tsm_resnet_encoder.12} parent=5 // pred_region
      %s899 = ssub.s32 %s10, 2
      // Predicated region
      $region45: #{tsm_resnet_encoder.12} parent=43 // pred_check
        %p900 = pneg %p133
      $region46: #{tsm_resnet_encoder.12} parent=43 // pred_check_branch
        %902 = sbr.rel (%p900) target = $region48
      $region47: #{tsm_resnet_encoder.12} parent=43 // pred_region
        %s903 = smul.u32 8, %s16
        %p904 = scmp.lt.s32.totalorder %s903, 15
        %s905 = scalar_select %p904, %s903, 15
        %s906 = smul.addr %s905, 8
        %s907 = scalar_lea.vmem %s4, %s906
      $region48: #{tsm_resnet_encoder.12} parent=43 // pred_fallthru
        _
    $region44: #{tsm_resnet_encoder.12} parent=5 // pred_fallthru
      _
  $region6: #{tsm_resnet_encoder.12} parent=0 // loop_footer
    %s14 = sadd.s32 1, %s10
  $region7: #{tsm_resnet_encoder.12} parent=0 // loop_footer_branch
    %9 = sbr.rel target = $region3
  $region8: #{tsm_resnet_encoder.12} parent=0 // loop_exit
    _

</llo_original>
